<compile_context>
chip_gen: v6e
topology: v6e:2x2x1
jax: 0.10.0
libtpu: 0.0.40
codegen_flags: <defaults>
</compile_context>

<pallas_src>
import functools

import jax
import jax.numpy as jnp
from jax.experimental import pallas as pl
from jax.experimental.pallas import tpu as pltpu


def _round_up(x, m):
    return ((x + m - 1) // m) * m


def _vmem_capacity_bytes():
    """Physical per-core VMEM; fall back to the v7x minimum (64 MiB) if unknown."""
    try:
        cap = int(pltpu.get_tpu_info().vmem_capacity_bytes)
        if cap > 0:
            return cap
    except Exception:
        pass
    return 64 * 1024 * 1024


# ----------------------------- kernels -----------------------------

def _ffn_resident_kernel(x_ref, w1_ref, b1_ref, w2_ref, b2_ref, o_ref):
    # Weights fully resident in VMEM (constant block index): one fused pass per M tile.
    h = jnp.dot(x_ref[...], w1_ref[...], preferred_element_type=jnp.float32)
    h = jnp.maximum(h + b1_ref[...], 0.0)                       # bias + ReLU in f32
    out = jnp.dot(h.astype(w2_ref.dtype), w2_ref[...],
                  preferred_element_type=jnp.float32) + b2_ref[...]
    o_ref[...] = out.astype(o_ref.dtype)


def _ffn_streamed_kernel(x_ref, w1_ref, b1_ref, w2_ref, b2_ref, o_ref, acc_ref):
    # d_inner streamed in tk slabs; f32 accumulator persists across the k axis.
    k = pl.program_id(1)

    @pl.when(k == 0)
    def _():
        # Fold the output bias into the accumulator init (saves an epilogue pass).
        acc_ref[...] = jnp.broadcast_to(b2_ref[...], acc_ref.shape)

    h = jnp.dot(x_ref[...], w1_ref[...], preferred_element_type=jnp.float32)
    h = jnp.maximum(h + b1_ref[...], 0.0)
    acc_ref[...] += jnp.dot(h.astype(w2_ref.dtype), w2_ref[...],
                            preferred_element_type=jnp.float32)

    @pl.when(k == pl.num_programs(1) - 1)
    def _():
        o_ref[...] = acc_ref[...].astype(o_ref.dtype)


# ----------------------------- wrapper -----------------------------

@functools.partial(jax.jit, static_argnames=("compute_dtype", "force_streamed"))
def feed_forward(x, w1, b1, w2, b2, *, compute_dtype=jnp.bfloat16,
                 force_streamed=False):
    """y = relu(x @ W1 + b1) @ W2 + b2, x: (batch, seq, d_model).

    Matches PyTorch nn.Linear(d_model, d_inner) -> ReLU -> nn.Linear(d_inner, d_model)
    with weights stored as (in_features, out_features).
    """
    batch, seq, d_model = x.shape
    d_inner = w1.shape[1]
    assert w1.shape == (d_model, d_inner)
    assert b1.shape[-1] == d_inner
    assert w2.shape == (d_inner, d_model)
    assert b2.shape[-1] == d_model

    m = batch * seq
    out_dtype = x.dtype
    cbytes = jnp.dtype(compute_dtype).itemsize
    obytes = jnp.dtype(out_dtype).itemsize

    # Sub-32-bit compute dtypes pack rows along sublanes: 16-row tiles for bf16,
    # 32 for 8-bit, 8 for f32.
    row_align = max(8, 32 // cbytes)

    d_inner_pad = _round_up(d_inner, 128)
    m_pad0 = _round_up(m, row_align)

    vmem_cap = _vmem_capacity_bytes()
    vmem_budget = (vmem_cap * 3) // 4          # headroom for compiler scratch/spills

    # ---- VMEM footprint models (pipelined I/O double-buffered) ----
    def resident_bytes(tm_):
        return (2 * tm_ * d_model * cbytes                  # x tiles
                + 2 * tm_ * d_model * obytes                # out tiles
                + 2 * 2 * d_model * d_inner_pad * cbytes    # W1 + W2 resident
                + 2 * d_inner_pad * 4 + 2 * d_model * 4     # biases (f32)
                + tm_ * d_inner_pad * (4 + cbytes))         # hidden intermediate

    def streamed_bytes(tm_, tk_):
        return (2 * tm_ * d_model * cbytes
                + 2 * tm_ * d_model * obytes
                + 2 * d_model * tk_ * cbytes                # W1 slabs
                + 2 * tk_ * d_model * cbytes                # W2 slabs
                + 2 * tk_ * 4 + 2 * d_model * 4
                + tm_ * d_model * 4                         # f32 accumulator
                + tm_ * tk_ * (4 + cbytes))                 # hidden intermediate

    tm_cands = [c for c in (1024, 512, 256, 128, 64, 32, 16, 8) if c >= row_align]

    # ---- pick path and tiles (all trace-time Python ints) ----
    tm = tk = None
    use_resident = False
    if not force_streamed:
        for c in tm_cands:
            t = _round_up(min(c, m_pad0), row_align)
            if resident_bytes(t) <= vmem_budget:
                tm, use_resident = t, True
                break

    if use_resident:
        # Give the parallel M axis >= 2 tiles when possible so both v7x TensorCores
        # get work; costs nothing here since the resident weights are loaded once.
        n_tiles = _round_up(m_pad0, tm) // tm
        if n_tiles < 2 and m_pad0 >= 2 * row_align:
            tm = _round_up((m_pad0 + 1) // 2, row_align)
    else:
        # Streamed fallback: tk divides round_up(d_inner,128) -> no extra weight pad.
        tk_cands = [c for c in (1024, 512, 256, 128) if d_inner_pad % c == 0]
        picked = False
        for c in tm_cands:                      # tm is the primary traffic knob
            t = _round_up(min(c, m_pad0), row_align)
            for ck in tk_cands:                 # then the largest slab that fits
                if streamed_bytes(t, ck) <= vmem_budget:
                    tm, tk, picked = t, ck, True
                    break
            if picked:
                break
        if not picked:
            tm, tk = row_align, 128             # minimal tiles; compiler will cope

    grid_m = _round_up(m_pad0, tm) // tm
    m_pad = grid_m * tm

    # ---- operands (casts are no-ops when callers pass pre-cast weights) ----
    x2d = x.reshape(m, d_model).astype(compute_dtype)
    w1c = w1.astype(compute_dtype)
    w2c = w2.astype(compute_dtype)
    b1f = b1.astype(jnp.float32).reshape(1, d_inner)
    b2f = b2.astype(jnp.float32).reshape(1, d_model)

    if m_pad != m:
        x2d = jnp.pad(x2d, ((0, m_pad - m), (0, 0)))
    if d_inner_pad != d_inner:
        # Zero-padded hidden units are exact: relu(0 + 0) hits zero W2 rows.
        w1c = jnp.pad(w1c, ((0, 0), (0, d_inner_pad - d_inner)))
        b1f = jnp.pad(b1f, ((0, 0), (0, d_inner_pad - d_inner)))
        w2c = jnp.pad(w2c, ((0, d_inner_pad - d_inner), (0, 0)))

    if use_resident:
        grid = (grid_m,)
        in_specs = [
            pl.BlockSpec((tm, d_model), lambda i: (i, 0)),           # x tile
            pl.BlockSpec((d_model, d_inner_pad), lambda i: (0, 0)),  # W1 (resident)
            pl.BlockSpec((1, d_inner_pad), lambda i: (0, 0)),        # b1 (resident)
            pl.BlockSpec((d_inner_pad, d_model), lambda i: (0, 0)),  # W2 (resident)
            pl.BlockSpec((1, d_model), lambda i: (0, 0)),            # b2 (resident)
        ]
        out_specs = pl.BlockSpec((tm, d_model), lambda i: (i, 0))
        scratch_shapes = []
        kernel = _ffn_resident_kernel
        dim_sem = ("parallel",)
        est = resident_bytes(tm)
        w_reads = 1
    else:
        grid = (grid_m, d_inner_pad // tk)
        in_specs = [
            pl.BlockSpec((tm, d_model), lambda i, k: (i, 0)),        # x tile
            pl.BlockSpec((d_model, tk), lambda i, k: (0, k)),        # W1 slab
            pl.BlockSpec((1, tk), lambda i, k: (0, k)),              # b1 slab
            pl.BlockSpec((tk, d_model), lambda i, k: (k, 0)),        # W2 slab
            pl.BlockSpec((1, d_model), lambda i, k: (0, 0)),         # b2
        ]
        out_specs = pl.BlockSpec((tm, d_model), lambda i, k: (i, 0))
        scratch_shapes = [pltpu.VMEM((tm, d_model), jnp.float32)]
        kernel = _ffn_streamed_kernel
        dim_sem = ("parallel", "arbitrary")
        est = streamed_bytes(tm, tk)
        w_reads = grid_m

    # VMEM limit: what the chosen tiles need, clamped to physical VMEM - headroom.
    vmem_limit = int(min(vmem_cap - (2 << 20),
                         max(32 << 20, int(est * 1.25) + (4 << 20))))
    vmem_limit = max(vmem_limit, 16 << 20)

    weight_bytes = 2 * d_model * d_inner_pad * cbytes
    cost = pl.CostEstimate(
        flops=4 * m_pad * d_model * d_inner_pad,
        transcendentals=0,
        bytes_accessed=int(m_pad * d_model * cbytes
                           + w_reads * weight_bytes
                           + d_inner_pad * 4 + d_model * 4
                           + m_pad * d_model * obytes),
    )

    out2d = pl.pallas_call(
        kernel,
        out_shape=jax.ShapeDtypeStruct((m_pad, d_model), out_dtype),
        grid_spec=pltpu.PrefetchScalarGridSpec(
            num_scalar_prefetch=0,
            grid=grid,
            in_specs=in_specs,
            out_specs=out_specs,
            scratch_shapes=scratch_shapes,
        ),
        compiler_params=pltpu.CompilerParams(
            dimension_semantics=dim_sem,
            vmem_limit_bytes=vmem_limit,
        ),
        cost_estimate=cost,
    )(x2d, w1c, b1f, w2c, b2f)

    if m_pad != m:
        out2d = out2d[:m]
    return out2d.reshape(batch, seq, d_model)


# ----------------------------- test utils -----------------------------

def init_params(key, d_model, d_inner, dtype=jnp.float32):
    """Synthetic init mimicking nn.Linear's uniform(-1/sqrt(fan_in), 1/sqrt(fan_in))."""
    k1, k2, k3, k4 = jax.random.split(key, 4)
    lim1 = 1.0 / (d_model ** 0.5)
    lim2 = 1.0 / (d_inner ** 0.5)
    w1 = jax.random.uniform(k1, (d_model, d_inner), dtype, -lim1, lim1)
    b1 = jax.random.uniform(k2, (d_inner,), dtype, -lim1, lim1)
    w2 = jax.random.uniform(k3, (d_inner, d_model), dtype, -lim2, lim2)
    b2 = jax.random.uniform(k4, (d_model,), dtype, -lim2, lim2)
    return w1, b1, w2, b2


def _ref_ffn(x, w1, b1, w2, b2):
    h = jnp.maximum(
        jnp.einsum("bsd,df->bsf", x, w1, precision=jax.lax.Precision.HIGHEST) + b1,
        0.0)
    return jnp.einsum("bsf,fd->bsd", h, w2,
                      precision=jax.lax.Precision.HIGHEST) + b2


if __name__ == "__main__":
    # Module defaults: d_model=512, d_inner=2048; small token count.
    batch, seq, d_model, d_inner = 2, 8, 512, 2048
    key = jax.random.PRNGKey(0)
    kx, kp = jax.random.split(key)
    x = jax.random.normal(kx, (batch, seq, d_model), dtype=jnp.float32)
    w1, b1, w2, b2 = init_params(kp, d_model, d_inner)
    ref = _ref_ffn(x, w1, b1, w2, b2)

    # bf16 MXU path: pre-cast weights ONCE (wrapper cast is then a no-op per call).
    w1_bf16 = w1.astype(jnp.bfloat16)
    w2_bf16 = w2.astype(jnp.bfloat16)
    out_bf16 = jax.block_until_ready(
        feed_forward(x, w1_bf16, b1, w2_bf16, b2, compute_dtype=jnp.bfloat16))
    assert out_bf16.shape == x.shape
    assert jnp.allclose(out_bf16, ref, atol=5e-2, rtol=5e-2)

    # f32 path (resident weights) for tight numerics.
    out_f32 = jax.block_until_ready(
        feed_forward(x, w1, b1, w2, b2, compute_dtype=jnp.float32))
    assert jnp.allclose(out_f32, ref, atol=1e-4, rtol=1e-4)

    # Streamed-reduction fallback path (used for very large FFNs), validated here
    # at a small shape by forcing it on.
    out_st = jax.block_until_ready(
        feed_forward(x, w1, b1, w2, b2, compute_dtype=jnp.float32,
                     force_streamed=True))
    assert jnp.allclose(out_st, ref, atol=1e-4, rtol=1e-4)

    # Ragged shapes: odd token count + non-multiple-of-128 d_inner (exercises padding).
    x2 = jax.random.normal(jax.random.PRNGKey(1), (3, 5, d_model), dtype=jnp.float32)
    w1b, b1b, w2b, b2b = init_params(jax.random.PRNGKey(2), d_model, 700)
    ref2 = _ref_ffn(x2, w1b, b1b, w2b, b2b)
    out2 = jax.block_until_ready(
        feed_forward(x2, w1b, b1b, w2b, b2b, compute_dtype=jnp.float32))
    assert jnp.allclose(out2, ref2, atol=1e-4, rtol=1e-4)

    print("KERNEL_OK")
</pallas_src>

<mosaic_0001>
module attributes {stable_mosaic.version = 11 : i64} {
  func.func @_ffn_resident_kernel(%arg0: i32, %arg1: memref<16x512xbf16, #tpu.memory_space<vmem>>, %arg2: memref<512x2048xbf16, #tpu.memory_space<vmem>>, %arg3: memref<1x2048xf32, #tpu.memory_space<vmem>>, %arg4: memref<2048x512xbf16, #tpu.memory_space<vmem>>, %arg5: memref<1x512xf32, #tpu.memory_space<vmem>>, %arg6: memref<16x512xf32, #tpu.memory_space<vmem>>) attributes {dimension_semantics = [#tpu.dimension_semantics<parallel>], iteration_bounds = array<i64: 1>, scalar_prefetch = 0 : i64, scratch_operands = 0 : i64, tpu.core_type = #tpu.core_type<tc>, window_params = [{transform_indices = @transform_0, window_bounds = array<i64: 16, 512>}, {pipeline_mode = #tpu.pipeline_mode<synchronous>, transform_indices = @transform_1, window_bounds = array<i64: 512, 2048>}, {pipeline_mode = #tpu.pipeline_mode<synchronous>, transform_indices = @transform_2, window_bounds = array<i64: 1, 2048>}, {pipeline_mode = #tpu.pipeline_mode<synchronous>, transform_indices = @transform_3, window_bounds = array<i64: 2048, 512>}, {pipeline_mode = #tpu.pipeline_mode<synchronous>, transform_indices = @transform_4, window_bounds = array<i64: 1, 512>}, {transform_indices = @transform_5, window_bounds = array<i64: 16, 512>}]} {
    %c0 = arith.constant 0 : index
    %c0_0 = arith.constant 0 : index
    %0 = vector.load %arg1[%c0, %c0_0] : memref<16x512xbf16, #tpu.memory_space<vmem>>, vector<16x512xbf16>
    %c0_1 = arith.constant 0 : index
    %c0_2 = arith.constant 0 : index
    %1 = vector.load %arg2[%c0_1, %c0_2] : memref<512x2048xbf16, #tpu.memory_space<vmem>>, vector<512x2048xbf16>
    %cst = arith.constant dense<0.000000e+00> : vector<16x2048xf32>
    %2 = tpu.matmul %0, %1, %cst {dimension_numbers = #tpu.dot_dimension_numbers<[1], [0], [0], [1], [0, 0, 1, 1], [], []>} : vector<16x512xbf16>, vector<512x2048xbf16>, vector<16x2048xf32> -> vector<16x2048xf32>
    %c0_3 = arith.constant 0 : index
    %c0_4 = arith.constant 0 : index
    %3 = vector.load %arg3[%c0_3, %c0_4] : memref<1x2048xf32, #tpu.memory_space<vmem>>, vector<1x2048xf32>
    %4 = vector.broadcast %3 : vector<1x2048xf32> to vector<16x2048xf32>
    %5 = arith.addf %2, %4 : vector<16x2048xf32>
    %cst_5 = arith.constant 0.000000e+00 : f32
    %6 = vector.broadcast %cst_5 : f32 to vector<16x2048xf32>
    %7 = arith.maximumf %5, %6 : vector<16x2048xf32>
    %8 = arith.truncf %7 : vector<16x2048xf32> to vector<16x2048xbf16>
    %c0_6 = arith.constant 0 : index
    %c0_7 = arith.constant 0 : index
    %9 = vector.load %arg4[%c0_6, %c0_7] : memref<2048x512xbf16, #tpu.memory_space<vmem>>, vector<2048x512xbf16>
    %cst_8 = arith.constant dense<0.000000e+00> : vector<16x512xf32>
    %10 = tpu.matmul %8, %9, %cst_8 {dimension_numbers = #tpu.dot_dimension_numbers<[1], [0], [0], [1], [0, 0, 1, 1], [], []>} : vector<16x2048xbf16>, vector<2048x512xbf16>, vector<16x512xf32> -> vector<16x512xf32>
    %c0_9 = arith.constant 0 : index
    %c0_10 = arith.constant 0 : index
    %11 = vector.load %arg5[%c0_9, %c0_10] : memref<1x512xf32, #tpu.memory_space<vmem>>, vector<1x512xf32>
    %12 = vector.broadcast %11 : vector<1x512xf32> to vector<16x512xf32>
    %13 = arith.addf %10, %12 : vector<16x512xf32>
    %c0_11 = arith.constant 0 : index
    %c0_12 = arith.constant 0 : index
    %14 = vector.load %arg6[%c0_11, %c0_12] : memref<16x512xf32, #tpu.memory_space<vmem>>, vector<16x512xf32>
    tpu.vector_store %arg6[%c0_11, %c0_12], %13 {strides = array<i32>} : memref<16x512xf32, #tpu.memory_space<vmem>>, vector<16x512xf32>,
    return
  }
  func.func @transform_0(%arg0: i32) -> (i32, i32) {
    %c0_i32 = arith.constant 0 : i32
    %c0_i32_0 = arith.constant 0 : i32
    return %arg0, %c0_i32 : i32, i32
  }
  func.func @transform_1(%arg0: i32) -> (i32, i32) {
    %c0_i32 = arith.constant 0 : i32
    %c0_i32_0 = arith.constant 0 : i32
    %c0_i32_1 = arith.constant 0 : i32
    return %c0_i32, %c0_i32_0 : i32, i32
  }
  func.func @transform_2(%arg0: i32) -> (i32, i32) {
    %c0_i32 = arith.constant 0 : i32
    %c0_i32_0 = arith.constant 0 : i32
    %c0_i32_1 = arith.constant 0 : i32
    return %c0_i32, %c0_i32_0 : i32, i32
  }
  func.func @transform_3(%arg0: i32) -> (i32, i32) {
    %c0_i32 = arith.constant 0 : i32
    %c0_i32_0 = arith.constant 0 : i32
    %c0_i32_1 = arith.constant 0 : i32
    return %c0_i32, %c0_i32_0 : i32, i32
  }
  func.func @transform_4(%arg0: i32) -> (i32, i32) {
    %c0_i32 = arith.constant 0 : i32
    %c0_i32_0 = arith.constant 0 : i32
    %c0_i32_1 = arith.constant 0 : i32
    return %c0_i32, %c0_i32_0 : i32, i32
  }
  func.func @transform_5(%arg0: i32) -> (i32, i32) {
    %c0_i32 = arith.constant 0 : i32
    %c0_i32_0 = arith.constant 0 : i32
    return %arg0, %c0_i32 : i32, i32
  }
}

</mosaic_0001>

<llo_original>
// kernel: feed_forward.1
$region0: #{feed_forward.1}
  #allocation0 [shape = 'u32[]', space=smem, size = 0x4, offset = 0x4, fixed_abs, tag = 'smem constant byte address 0x4 - core index']
  #allocation1 [shape = 'u32[144,128]{1,0:T(1,128)}', space=vmem, size = 0x12000, scoped, tag = 'internal scratch']
  %s0 = inlined_call_operand.vmem [shape: bf16[16,512], index: 0, kind: input, shape index: {}]
  %s1 = inlined_call_operand.hbm [shape: bf16[512,2048], index: 1, kind: input, shape index: {}]
  %s2 = inlined_call_operand.hbm [shape: f32[1,2048], index: 2, kind: input, shape index: {}]
  %s3 = inlined_call_operand.hbm [shape: bf16[2048,512], index: 3, kind: input, shape index: {}]
  %s4 = inlined_call_operand.hbm [shape: f32[1,512], index: 4, kind: input, shape index: {}]
  %s5 = inlined_call_operand.hbm [shape: f32[16,512], index: 5, kind: output, shape index: {}]
  %s6 = sld [smem:[#allocation0]]
  $region46: #{feed_forward.1} parent=0
    _
  %s8 = ssub.s32 1, %s6
  %s9 = scalar_select 0, %s8, %s6
  $region1: #{feed_forward.1} parent=0
    #allocation2 [shape = 'u8[2097152]{0}', space=vmem, size = 0x200000, scoped, tag = 'input window, operand 1, single buffered']
    #allocation3 [shape = 's32[1]{0}', space=sflag, size = 0x4, scoped, tag = 'scoped memory for feed_forward.1']
    #allocation4 [shape = 's32[1]{0}', space=sflag, size = 0x4, scoped, tag = 'scoped memory for feed_forward.1']
    #allocation5 [shape = 'u8[8192]{0}', space=vmem, size = 0x2000, scoped, tag = 'input window, operand 2, single buffered']
    #allocation6 [shape = 's32[1]{0}', space=sflag, size = 0x4, scoped, tag = 'scoped memory for feed_forward.1']
    #allocation7 [shape = 'u8[2097152]{0}', space=vmem, size = 0x200000, scoped, tag = 'input window, operand 3, single buffered']
    #allocation8 [shape = 'u8[2048]{0}', space=vmem, size = 0x800, scoped, tag = 'input window, operand 4, single buffered']
    #allocation9 [shape = 's32[1]{0}', space=sflag, size = 0x4, scoped, tag = 'scoped memory for feed_forward.1']
    #allocation10 [shape = 'u8[32768]{0}', space=vmem, size = 0x8000, scoped, tag = 'output window, operand 0, single buffered']
    %10 = vsyncpa [#allocation3], 0
    %11 = vsyncpa [#allocation6], 0
    %12 = vsyncpa [#allocation9], 0
    %13 = vsyncpa [#allocation4], 0
    // Predicated region
    $region2: #{feed_forward.1} parent=1 // pred_check
      _
    $region3: #{feed_forward.1} parent=1 // pred_check_branch
      %15 = sbr.rel (0) target = $region5
    $region4: #{feed_forward.1} parent=1 // pred_region
      _
    $region5: #{feed_forward.1} parent=1 // pred_fallthru
      _
    // Predicated region
    $region6: #{feed_forward.1} parent=1 // pred_check
      _
    $region7: #{feed_forward.1} parent=1 // pred_check_branch
      %17 = sbr.rel (0) target = $region9
    $region8: #{feed_forward.1} parent=1 // pred_region
      %s19 = ssub.s32 65536, 65536
      %20 = vsyncadd [#allocation3], %s19
      %s21 = sshll.u32 [#allocation2], 4
      %s22 = int_to_ptr.vmem [resolvable:$true] %s21
      %27 = dma.hbm_to_vmem [thread:$0]  %s1, 65536, %s22, [#allocation3], 1024, 1024, 64
    $region9: #{feed_forward.1} parent=1 // pred_fallthru
      _
    // Predicated region
    $region10: #{feed_forward.1} parent=1 // pred_check
      _
    $region11: #{feed_forward.1} parent=1 // pred_check_branch
      %29 = sbr.rel (0) target = $region13
    $region12: #{feed_forward.1} parent=1 // pred_region
      %s31 = ssub.s32 256, 256
      %32 = vsyncadd [#allocation6], %s31
      %s34 = sshll.u32 [#allocation5], 4
      %s35 = int_to_ptr.vmem [resolvable:$true] %s34
      %37 = dma.hbm_to_vmem [thread:$0]  %s2, 256, %s35, [#allocation6]
    $region13: #{feed_forward.1} parent=1 // pred_fallthru
      _
    // Predicated region
    $region14: #{feed_forward.1} parent=1 // pred_check
      _
    $region15: #{feed_forward.1} parent=1 // pred_check_branch
      %39 = sbr.rel (0) target = $region17
    $region16: #{feed_forward.1} parent=1 // pred_region
      %s41 = ssub.s32 65536, 65536
      %42 = vsyncadd [#allocation6], %s41
      %s43 = sshll.u32 [#allocation7], 4
      %s44 = int_to_ptr.vmem [resolvable:$true] %s43
      %49 = dma.hbm_to_vmem [thread:$0]  %s3, 65536, %s44, [#allocation6], 256, 256, 16
    $region17: #{feed_forward.1} parent=1 // pred_fallthru
      _
    // Predicated region
    $region18: #{feed_forward.1} parent=1 // pred_check
      _
    $region19: #{feed_forward.1} parent=1 // pred_check_branch
      %51 = sbr.rel (0) target = $region21
    $region20: #{feed_forward.1} parent=1 // pred_region
      %s53 = ssub.s32 64, 64
      %54 = vsyncadd [#allocation9], %s53
      %s56 = sshll.u32 [#allocation8], 4
      %s57 = int_to_ptr.vmem [resolvable:$true] %s56
      %59 = dma.hbm_to_vmem [thread:$0]  %s4, 64, %s57, [#allocation9]
    $region21: #{feed_forward.1} parent=1 // pred_fallthru
      _
    // Predicated region
    $region22: #{feed_forward.1} parent=1 // pred_check
      _
    $region23: #{feed_forward.1} parent=1 // pred_check_branch
      %61 = sbr.rel (0) target = $region25
    $region24: #{feed_forward.1} parent=1 // pred_region
      %62 = dma.done [#allocation3], 65536
    $region25: #{feed_forward.1} parent=1 // pred_fallthru
      _
    // Predicated region
    $region26: #{feed_forward.1} parent=1 // pred_check
      _
    $region27: #{feed_forward.1} parent=1 // pred_check_branch
      %64 = sbr.rel (0) target = $region29
    $region28: #{feed_forward.1} parent=1 // pred_region
      %65 = dma.done [#allocation6], 256
    $region29: #{feed_forward.1} parent=1 // pred_fallthru
      _
    // Predicated region
    $region30: #{feed_forward.1} parent=1 // pred_check
      _
    $region31: #{feed_forward.1} parent=1 // pred_check_branch
      %67 = sbr.rel (0) target = $region33
    $region32: #{feed_forward.1} parent=1 // pred_region
      %68 = dma.done [#allocation6], 65536
    $region33: #{feed_forward.1} parent=1 // pred_fallthru
      _
    // Predicated region
    $region34: #{feed_forward.1} parent=1 // pred_check
      _
    $region35: #{feed_forward.1} parent=1 // pred_check_branch
      %70 = sbr.rel (0) target = $region37
    $region36: #{feed_forward.1} parent=1 // pred_region
      %71 = dma.done [#allocation9], 64
    $region37: #{feed_forward.1} parent=1 // pred_fallthru
      _
    %v72 = vld [vmem:[%s0] sm:$0xff]
    %v73 = vld [vmem:[%s0 + $0x8] sm:$0xff]
    %v74 = vld [vmem:[%s0 + $0x10] sm:$0xff]
    %v75 = vld [vmem:[%s0 + $0x18] sm:$0xff]
    %v76 = vld [vmem:[#allocation2] sm:$0xff]
    %v77 = vld [vmem:[#allocation2 + $0x8] sm:$0xff]
    %v78 = vld [vmem:[#allocation2 + $0x10] sm:$0xff]
    %v79 = vld [vmem:[#allocation2 + $0x18] sm:$0xff]
    %v80 = vld [vmem:[#allocation2 + $0x20] sm:$0xff]
    %v81 = vld [vmem:[#allocation2 + $0x28] sm:$0xff]
    %v82 = vld [vmem:[#allocation2 + $0x30] sm:$0xff]
    %v83 = vld [vmem:[#allocation2 + $0x38] sm:$0xff]
    %v84 = vld [vmem:[#allocation2 + $0x40] sm:$0xff]
    %v85 = vld [vmem:[#allocation2 + $0x48] sm:$0xff]
    %v86 = vld [vmem:[#allocation2 + $0x50] sm:$0xff]
    %v87 = vld [vmem:[#allocation2 + $0x58] sm:$0xff]
    %v88 = vld [vmem:[#allocation2 + $0x60] sm:$0xff]
    %v89 = vld [vmem:[#allocation2 + $0x68] sm:$0xff]
    %v90 = vld [vmem:[#allocation2 + $0x70] sm:$0xff]
    %v91 = vld [vmem:[#allocation2 + $0x78] sm:$0xff]
    %v92 = vld [vmem:[#allocation2 + $0x80] sm:$0xff]
    %v93 = vld [vmem:[#allocation2 + $0x88] sm:$0xff]
    %v94 = vld [vmem:[#allocation2 + $0x90] sm:$0xff]
    %v95 = vld [vmem:[#allocation2 + $0x98] sm:$0xff]
    %v96 = vld [vmem:[#allocation2 + $0xa0] sm:$0xff]
    %v97 = vld [vmem:[#allocation2 + $0xa8] sm:$0xff]
    %v98 = vld [vmem:[#allocation2 + $0xb0] sm:$0xff]
    %v99 = vld [vmem:[#allocation2 + $0xb8] sm:$0xff]
    %v100 = vld [vmem:[#allocation2 + $0xc0] sm:$0xff]
    %v101 = vld [vmem:[#allocation2 + $0xc8] sm:$0xff]
    %v102 = vld [vmem:[#allocation2 + $0xd0] sm:$0xff]
    %v103 = vld [vmem:[#allocation2 + $0xd8] sm:$0xff]
    %v104 = vld [vmem:[#allocation2 + $0xe0] sm:$0xff]
    %v105 = vld [vmem:[#allocation2 + $0xe8] sm:$0xff]
    %v106 = vld [vmem:[#allocation2 + $0xf0] sm:$0xff]
    %v107 = vld [vmem:[#allocation2 + $0xf8] sm:$0xff]
    %v108 = vld [vmem:[#allocation2 + $0x100] sm:$0xff]
    %v109 = vld [vmem:[#allocation2 + $0x108] sm:$0xff]
    %v110 = vld [vmem:[#allocation2 + $0x110] sm:$0xff]
    %v111 = vld [vmem:[#allocation2 + $0x118] sm:$0xff]
    %v112 = vld [vmem:[#allocation2 + $0x120] sm:$0xff]
    %v113 = vld [vmem:[#allocation2 + $0x128] sm:$0xff]
    %v114 = vld [vmem:[#allocation2 + $0x130] sm:$0xff]
    %v115 = vld [vmem:[#allocation2 + $0x138] sm:$0xff]
    %v116 = vld [vmem:[#allocation2 + $0x140] sm:$0xff]
    %v117 = vld [vmem:[#allocation2 + $0x148] sm:$0xff]
    %v118 = vld [vmem:[#allocation2 + $0x150] sm:$0xff]
    %v119 = vld [vmem:[#allocation2 + $0x158] sm:$0xff]
    %v120 = vld [vmem:[#allocation2 + $0x160] sm:$0xff]
    %v121 = vld [vmem:[#allocation2 + $0x168] sm:$0xff]
    %v122 = vld [vmem:[#allocation2 + $0x170] sm:$0xff]
    %v123 = vld [vmem:[#allocation2 + $0x178] sm:$0xff]
    %v124 = vld [vmem:[#allocation2 + $0x180] sm:$0xff]
    %v125 = vld [vmem:[#allocation2 + $0x188] sm:$0xff]
    %v126 = vld [vmem:[#allocation2 + $0x190] sm:$0xff]
    %v127 = vld [vmem:[#allocation2 + $0x198] sm:$0xff]
    %v128 = vld [vmem:[#allocation2 + $0x1a0] sm:$0xff]
    %v129 = vld [vmem:[#allocation2 + $0x1a8] sm:$0xff]
    %v130 = vld [vmem:[#allocation2 + $0x1b0] sm:$0xff]
    %v131 = vld [vmem:[#allocation2 + $0x1b8] sm:$0xff]
    %v132 = vld [vmem:[#allocation2 + $0x1c0] sm:$0xff]
    %v133 = vld [vmem:[#allocation2 + $0x1c8] sm:$0xff]
    %v134 = vld [vmem:[#allocation2 + $0x1d0] sm:$0xff]
    %v135 = vld [vmem:[#allocation2 + $0x1d8] sm:$0xff]
    %v136 = vld [vmem:[#allocation2 + $0x1e0] sm:$0xff]
    %v137 = vld [vmem:[#allocation2 + $0x1e8] sm:$0xff]
    %v138 = vld [vmem:[#allocation2 + $0x1f0] sm:$0xff]
    %v139 = vld [vmem:[#allocation2 + $0x1f8] sm:$0xff]
    %v140 = vld [vmem:[#allocation2 + $0x200] sm:$0xff]
    %v141 = vld [vmem:[#allocation2 + $0x208] sm:$0xff]
    %v142 = vld [vmem:[#allocation2 + $0x210] sm:$0xff]
    %v143 = vld [vmem:[#allocation2 + $0x218] sm:$0xff]
    %v144 = vld [vmem:[#allocation2 + $0x220] sm:$0xff]
    %v145 = vld [vmem:[#allocation2 + $0x228] sm:$0xff]
    %v146 = vld [vmem:[#allocation2 + $0x230] sm:$0xff]
    %v147 = vld [vmem:[#allocation2 + $0x238] sm:$0xff]
    %v148 = vld [vmem:[#allocation2 + $0x240] sm:$0xff]
    %v149 = vld [vmem:[#allocation2 + $0x248] sm:$0xff]
    %v150 = vld [vmem:[#allocation2 + $0x250] sm:$0xff]
    %v151 = vld [vmem:[#allocation2 + $0x258] sm:$0xff]
    %v152 = vld [vmem:[#allocation2 + $0x260] sm:$0xff]
    %v153 = vld [vmem:[#allocation2 + $0x268] sm:$0xff]
    %v154 = vld [vmem:[#allocation2 + $0x270] sm:$0xff]
    %v155 = vld [vmem:[#allocation2 + $0x278] sm:$0xff]
    %v156 = vld [vmem:[#allocation2 + $0x280] sm:$0xff]
    %v157 = vld [vmem:[#allocation2 + $0x288] sm:$0xff]
    %v158 = vld [vmem:[#allocation2 + $0x290] sm:$0xff]
    %v159 = vld [vmem:[#allocation2 + $0x298] sm:$0xff]
    %v160 = vld [vmem:[#allocation2 + $0x2a0] sm:$0xff]
    %v161 = vld [vmem:[#allocation2 + $0x2a8] sm:$0xff]
    %v162 = vld [vmem:[#allocation2 + $0x2b0] sm:$0xff]
    %v163 = vld [vmem:[#allocation2 + $0x2b8] sm:$0xff]
    %v164 = vld [vmem:[#allocation2 + $0x2c0] sm:$0xff]
    %v165 = vld [vmem:[#allocation2 + $0x2c8] sm:$0xff]
    %v166 = vld [vmem:[#allocation2 + $0x2d0] sm:$0xff]
    %v167 = vld [vmem:[#allocation2 + $0x2d8] sm:$0xff]
    %v168 = vld [vmem:[#allocation2 + $0x2e0] sm:$0xff]
    %v169 = vld [vmem:[#allocation2 + $0x2e8] sm:$0xff]
    %v170 = vld [vmem:[#allocation2 + $0x2f0] sm:$0xff]
    %v171 = vld [vmem:[#allocation2 + $0x2f8] sm:$0xff]
    %v172 = vld [vmem:[#allocation2 + $0x300] sm:$0xff]
    %v173 = vld [vmem:[#allocation2 + $0x308] sm:$0xff]
    %v174 = vld [vmem:[#allocation2 + $0x310] sm:$0xff]
    %v175 = vld [vmem:[#allocation2 + $0x318] sm:$0xff]
    %v176 = vld [vmem:[#allocation2 + $0x320] sm:$0xff]
    %v177 = vld [vmem:[#allocation2 + $0x328] sm:$0xff]
    %v178 = vld [vmem:[#allocation2 + $0x330] sm:$0xff]
    %v179 = vld [vmem:[#allocation2 + $0x338] sm:$0xff]
    %v180 = vld [vmem:[#allocation2 + $0x340] sm:$0xff]
    %v181 = vld [vmem:[#allocation2 + $0x348] sm:$0xff]
    %v182 = vld [vmem:[#allocation2 + $0x350] sm:$0xff]
    %v183 = vld [vmem:[#allocation2 + $0x358] sm:$0xff]
    %v184 = vld [vmem:[#allocation2 + $0x360] sm:$0xff]
    %v185 = vld [vmem:[#allocation2 + $0x368] sm:$0xff]
    %v186 = vld [vmem:[#allocation2 + $0x370] sm:$0xff]
    %v187 = vld [vmem:[#allocation2 + $0x378] sm:$0xff]
    %v188 = vld [vmem:[#allocation2 + $0x380] sm:$0xff]
    %v189 = vld [vmem:[#allocation2 + $0x388] sm:$0xff]
    %v190 = vld [vmem:[#allocation2 + $0x390] sm:$0xff]
    %v191 = vld [vmem:[#allocation2 + $0x398] sm:$0xff]
    %v192 = vld [vmem:[#allocation2 + $0x3a0] sm:$0xff]
    %v193 = vld [vmem:[#allocation2 + $0x3a8] sm:$0xff]
    %v194 = vld [vmem:[#allocation2 + $0x3b0] sm:$0xff]
    %v195 = vld [vmem:[#allocation2 + $0x3b8] sm:$0xff]
    %v196 = vld [vmem:[#allocation2 + $0x3c0] sm:$0xff]
    %v197 = vld [vmem:[#allocation2 + $0x3c8] sm:$0xff]
    %v198 = vld [vmem:[#allocation2 + $0x3d0] sm:$0xff]
    %v199 = vld [vmem:[#allocation2 + $0x3d8] sm:$0xff]
    %v200 = vld [vmem:[#allocation2 + $0x3e0] sm:$0xff]
    %v201 = vld [vmem:[#allocation2 + $0x3e8] sm:$0xff]
    %v202 = vld [vmem:[#allocation2 + $0x3f0] sm:$0xff]
    %v203 = vld [vmem:[#allocation2 + $0x3f8] sm:$0xff]
    %v204 = vld [vmem:[#allocation2 + $0x400] sm:$0xff]
    %v205 = vld [vmem:[#allocation2 + $0x408] sm:$0xff]
    %v206 = vld [vmem:[#allocation2 + $0x410] sm:$0xff]
    %v207 = vld [vmem:[#allocation2 + $0x418] sm:$0xff]
    %v208 = vld [vmem:[#allocation2 + $0x420] sm:$0xff]
    %v209 = vld [vmem:[#allocation2 + $0x428] sm:$0xff]
    %v210 = vld [vmem:[#allocation2 + $0x430] sm:$0xff]
    %v211 = vld [vmem:[#allocation2 + $0x438] sm:$0xff]
    %v212 = vld [vmem:[#allocation2 + $0x440] sm:$0xff]
    %v213 = vld [vmem:[#allocation2 + $0x448] sm:$0xff]
    %v214 = vld [vmem:[#allocation2 + $0x450] sm:$0xff]
    %v215 = vld [vmem:[#allocation2 + $0x458] sm:$0xff]
    %v216 = vld [vmem:[#allocation2 + $0x460] sm:$0xff]
    %v217 = vld [vmem:[#allocation2 + $0x468] sm:$0xff]
    %v218 = vld [vmem:[#allocation2 + $0x470] sm:$0xff]
    %v219 = vld [vmem:[#allocation2 + $0x478] sm:$0xff]
    %v220 = vld [vmem:[#allocation2 + $0x480] sm:$0xff]
    %v221 = vld [vmem:[#allocation2 + $0x488] sm:$0xff]
    %v222 = vld [vmem:[#allocation2 + $0x490] sm:$0xff]
    %v223 = vld [vmem:[#allocation2 + $0x498] sm:$0xff]
    %v224 = vld [vmem:[#allocation2 + $0x4a0] sm:$0xff]
    %v225 = vld [vmem:[#allocation2 + $0x4a8] sm:$0xff]
    %v226 = vld [vmem:[#allocation2 + $0x4b0] sm:$0xff]
    %v227 = vld [vmem:[#allocation2 + $0x4b8] sm:$0xff]
    %v228 = vld [vmem:[#allocation2 + $0x4c0] sm:$0xff]
    %v229 = vld [vmem:[#allocation2 + $0x4c8] sm:$0xff]
    %v230 = vld [vmem:[#allocation2 + $0x4d0] sm:$0xff]
    %v231 = vld [vmem:[#allocation2 + $0x4d8] sm:$0xff]
    %v232 = vld [vmem:[#allocation2 + $0x4e0] sm:$0xff]
    %v233 = vld [vmem:[#allocation2 + $0x4e8] sm:$0xff]
    %v234 = vld [vmem:[#allocation2 + $0x4f0] sm:$0xff]
    %v235 = vld [vmem:[#allocation2 + $0x4f8] sm:$0xff]
    %v236 = vld [vmem:[#allocation2 + $0x500] sm:$0xff]
    %v237 = vld [vmem:[#allocation2 + $0x508] sm:$0xff]
    %v238 = vld [vmem:[#allocation2 + $0x510] sm:$0xff]
    %v239 = vld [vmem:[#allocation2 + $0x518] sm:$0xff]
    %v240 = vld [vmem:[#allocation2 + $0x520] sm:$0xff]
    %v241 = vld [vmem:[#allocation2 + $0x528] sm:$0xff]
    %v242 = vld [vmem:[#allocation2 + $0x530] sm:$0xff]
    %v243 = vld [vmem:[#allocation2 + $0x538] sm:$0xff]
    %v244 = vld [vmem:[#allocation2 + $0x540] sm:$0xff]
    %v245 = vld [vmem:[#allocation2 + $0x548] sm:$0xff]
    %v246 = vld [vmem:[#allocation2 + $0x550] sm:$0xff]
    %v247 = vld [vmem:[#allocation2 + $0x558] sm:$0xff]
    %v248 = vld [vmem:[#allocation2 + $0x560] sm:$0xff]
    %v249 = vld [vmem:[#allocation2 + $0x568] sm:$0xff]
    %v250 = vld [vmem:[#allocation2 + $0x570] sm:$0xff]
    %v251 = vld [vmem:[#allocation2 + $0x578] sm:$0xff]
    %v252 = vld [vmem:[#allocation2 + $0x580] sm:$0xff]
    %v253 = vld [vmem:[#allocation2 + $0x588] sm:$0xff]
    %v254 = vld [vmem:[#allocation2 + $0x590] sm:$0xff]
    %v255 = vld [vmem:[#allocation2 + $0x598] sm:$0xff]
    %v256 = vld [vmem:[#allocation2 + $0x5a0] sm:$0xff]
    %v257 = vld [vmem:[#allocation2 + $0x5a8] sm:$0xff]
    %v258 = vld [vmem:[#allocation2 + $0x5b0] sm:$0xff]
    %v259 = vld [vmem:[#allocation2 + $0x5b8] sm:$0xff]
    %v260 = vld [vmem:[#allocation2 + $0x5c0] sm:$0xff]
    %v261 = vld [vmem:[#allocation2 + $0x5c8] sm:$0xff]
    %v262 = vld [vmem:[#allocation2 + $0x5d0] sm:$0xff]
    %v263 = vld [vmem:[#allocation2 + $0x5d8] sm:$0xff]
    %v264 = vld [vmem:[#allocation2 + $0x5e0] sm:$0xff]
    %v265 = vld [vmem:[#allocation2 + $0x5e8] sm:$0xff]
    %v266 = vld [vmem:[#allocation2 + $0x5f0] sm:$0xff]
    %v267 = vld [vmem:[#allocation2 + $0x5f8] sm:$0xff]
    %v268 = vld [vmem:[#allocation2 + $0x600] sm:$0xff]
    %v269 = vld [vmem:[#allocation2 + $0x608] sm:$0xff]
    %v270 = vld [vmem:[#allocation2 + $0x610] sm:$0xff]
    %v271 = vld [vmem:[#allocation2 + $0x618] sm:$0xff]
    %v272 = vld [vmem:[#allocation2 + $0x620] sm:$0xff]
    %v273 = vld [vmem:[#allocation2 + $0x628] sm:$0xff]
    %v274 = vld [vmem:[#allocation2 + $0x630] sm:$0xff]
    %v275 = vld [vmem:[#allocation2 + $0x638] sm:$0xff]
    %v276 = vld [vmem:[#allocation2 + $0x640] sm:$0xff]
    %v277 = vld [vmem:[#allocation2 + $0x648] sm:$0xff]
    %v278 = vld [vmem:[#allocation2 + $0x650] sm:$0xff]
    %v279 = vld [vmem:[#allocation2 + $0x658] sm:$0xff]
    %v280 = vld [vmem:[#allocation2 + $0x660] sm:$0xff]
    %v281 = vld [vmem:[#allocation2 + $0x668] sm:$0xff]
    %v282 = vld [vmem:[#allocation2 + $0x670] sm:$0xff]
    %v283 = vld [vmem:[#allocation2 + $0x678] sm:$0xff]
    %v284 = vld [vmem:[#allocation2 + $0x680] sm:$0xff]
    %v285 = vld [vmem:[#allocation2 + $0x688] sm:$0xff]
    %v286 = vld [vmem:[#allocation2 + $0x690] sm:$0xff]
    %v287 = vld [vmem:[#allocation2 + $0x698] sm:$0xff]
    %v288 = vld [vmem:[#allocation2 + $0x6a0] sm:$0xff]
    %v289 = vld [vmem:[#allocation2 + $0x6a8] sm:$0xff]
    %v290 = vld [vmem:[#allocation2 + $0x6b0] sm:$0xff]
    %v291 = vld [vmem:[#allocation2 + $0x6b8] sm:$0xff]
    %v292 = vld [vmem:[#allocation2 + $0x6c0] sm:$0xff]
    %v293 = vld [vmem:[#allocation2 + $0x6c8] sm:$0xff]
    %v294 = vld [vmem:[#allocation2 + $0x6d0] sm:$0xff]
    %v295 = vld [vmem:[#allocation2 + $0x6d8] sm:$0xff]
    %v296 = vld [vmem:[#allocation2 + $0x6e0] sm:$0xff]
    %v297 = vld [vmem:[#allocation2 + $0x6e8] sm:$0xff]
    %v298 = vld [vmem:[#allocation2 + $0x6f0] sm:$0xff]
    %v299 = vld [vmem:[#allocation2 + $0x6f8] sm:$0xff]
    %v300 = vld [vmem:[#allocation2 + $0x700] sm:$0xff]
    %v301 = vld [vmem:[#allocation2 + $0x708] sm:$0xff]
    %v302 = vld [vmem:[#allocation2 + $0x710] sm:$0xff]
    %v303 = vld [vmem:[#allocation2 + $0x718] sm:$0xff]
    %v304 = vld [vmem:[#allocation2 + $0x720] sm:$0xff]
    %v305 = vld [vmem:[#allocation2 + $0x728] sm:$0xff]
    %v306 = vld [vmem:[#allocation2 + $0x730] sm:$0xff]
    %v307 = vld [vmem:[#allocation2 + $0x738] sm:$0xff]
    %v308 = vld [vmem:[#allocation2 + $0x740] sm:$0xff]
    %v309 = vld [vmem:[#allocation2 + $0x748] sm:$0xff]
    %v310 = vld [vmem:[#allocation2 + $0x750] sm:$0xff]
    %v311 = vld [vmem:[#allocation2 + $0x758] sm:$0xff]
    %v312 = vld [vmem:[#allocation2 + $0x760] sm:$0xff]
    %v313 = vld [vmem:[#allocation2 + $0x768] sm:$0xff]
    %v314 = vld [vmem:[#allocation2 + $0x770] sm:$0xff]
    %v315 = vld [vmem:[#allocation2 + $0x778] sm:$0xff]
    %v316 = vld [vmem:[#allocation2 + $0x780] sm:$0xff]
    %v317 = vld [vmem:[#allocation2 + $0x788] sm:$0xff]
    %v318 = vld [vmem:[#allocation2 + $0x790] sm:$0xff]
    %v319 = vld [vmem:[#allocation2 + $0x798] sm:$0xff]
    %v320 = vld [vmem:[#allocation2 + $0x7a0] sm:$0xff]
    %v321 = vld [vmem:[#allocation2 + $0x7a8] sm:$0xff]
    %v322 = vld [vmem:[#allocation2 + $0x7b0] sm:$0xff]
    %v323 = vld [vmem:[#allocation2 + $0x7b8] sm:$0xff]
    %v324 = vld [vmem:[#allocation2 + $0x7c0] sm:$0xff]
    %v325 = vld [vmem:[#allocation2 + $0x7c8] sm:$0xff]
    %v326 = vld [vmem:[#allocation2 + $0x7d0] sm:$0xff]
    %v327 = vld [vmem:[#allocation2 + $0x7d8] sm:$0xff]
    %v328 = vld [vmem:[#allocation2 + $0x7e0] sm:$0xff]
    %v329 = vld [vmem:[#allocation2 + $0x7e8] sm:$0xff]
    %v330 = vld [vmem:[#allocation2 + $0x7f0] sm:$0xff]
    %v331 = vld [vmem:[#allocation2 + $0x7f8] sm:$0xff]
    %v332 = vld [vmem:[#allocation2 + $0x800] sm:$0xff]
    %v333 = vld [vmem:[#allocation2 + $0x808] sm:$0xff]
    %v334 = vld [vmem:[#allocation2 + $0x810] sm:$0xff]
    %v335 = vld [vmem:[#allocation2 + $0x818] sm:$0xff]
    %v336 = vld [vmem:[#allocation2 + $0x820] sm:$0xff]
    %v337 = vld [vmem:[#allocation2 + $0x828] sm:$0xff]
    %v338 = vld [vmem:[#allocation2 + $0x830] sm:$0xff]
    %v339 = vld [vmem:[#allocation2 + $0x838] sm:$0xff]
    %v340 = vld [vmem:[#allocation2 + $0x840] sm:$0xff]
    %v341 = vld [vmem:[#allocation2 + $0x848] sm:$0xff]
    %v342 = vld [vmem:[#allocation2 + $0x850] sm:$0xff]
    %v343 = vld [vmem:[#allocation2 + $0x858] sm:$0xff]
    %v344 = vld [vmem:[#allocation2 + $0x860] sm:$0xff]
    %v345 = vld [vmem:[#allocation2 + $0x868] sm:$0xff]
    %v346 = vld [vmem:[#allocation2 + $0x870] sm:$0xff]
    %v347 = vld [vmem:[#allocation2 + $0x878] sm:$0xff]
    %v348 = vld [vmem:[#allocation2 + $0x880] sm:$0xff]
    %v349 = vld [vmem:[#allocation2 + $0x888] sm:$0xff]
    %v350 = vld [vmem:[#allocation2 + $0x890] sm:$0xff]
    %v351 = vld [vmem:[#allocation2 + $0x898] sm:$0xff]
    %v352 = vld [vmem:[#allocation2 + $0x8a0] sm:$0xff]
    %v353 = vld [vmem:[#allocation2 + $0x8a8] sm:$0xff]
    %v354 = vld [vmem:[#allocation2 + $0x8b0] sm:$0xff]
    %v355 = vld [vmem:[#allocation2 + $0x8b8] sm:$0xff]
    %v356 = vld [vmem:[#allocation2 + $0x8c0] sm:$0xff]
    %v357 = vld [vmem:[#allocation2 + $0x8c8] sm:$0xff]
    %v358 = vld [vmem:[#allocation2 + $0x8d0] sm:$0xff]
    %v359 = vld [vmem:[#allocation2 + $0x8d8] sm:$0xff]
    %v360 = vld [vmem:[#allocation2 + $0x8e0] sm:$0xff]
    %v361 = vld [vmem:[#allocation2 + $0x8e8] sm:$0xff]
    %v362 = vld [vmem:[#allocation2 + $0x8f0] sm:$0xff]
    %v363 = vld [vmem:[#allocation2 + $0x8f8] sm:$0xff]
    %v364 = vld [vmem:[#allocation2 + $0x900] sm:$0xff]
    %v365 = vld [vmem:[#allocation2 + $0x908] sm:$0xff]
    %v366 = vld [vmem:[#allocation2 + $0x910] sm:$0xff]
    %v367 = vld [vmem:[#allocation2 + $0x918] sm:$0xff]
    %v368 = vld [vmem:[#allocation2 + $0x920] sm:$0xff]
    %v369 = vld [vmem:[#allocation2 + $0x928] sm:$0xff]
    %v370 = vld [vmem:[#allocation2 + $0x930] sm:$0xff]
    %v371 = vld [vmem:[#allocation2 + $0x938] sm:$0xff]
    %v372 = vld [vmem:[#allocation2 + $0x940] sm:$0xff]
    %v373 = vld [vmem:[#allocation2 + $0x948] sm:$0xff]
    %v374 = vld [vmem:[#allocation2 + $0x950] sm:$0xff]
    %v375 = vld [vmem:[#allocation2 + $0x958] sm:$0xff]
    %v376 = vld [vmem:[#allocation2 + $0x960] sm:$0xff]
    %v377 = vld [vmem:[#allocation2 + $0x968] sm:$0xff]
    %v378 = vld [vmem:[#allocation2 + $0x970] sm:$0xff]
    %v379 = vld [vmem:[#allocation2 + $0x978] sm:$0xff]
    %v380 = vld [vmem:[#allocation2 + $0x980] sm:$0xff]
    %v381 = vld [vmem:[#allocation2 + $0x988] sm:$0xff]
    %v382 = vld [vmem:[#allocation2 + $0x990] sm:$0xff]
    %v383 = vld [vmem:[#allocation2 + $0x998] sm:$0xff]
    %v384 = vld [vmem:[#allocation2 + $0x9a0] sm:$0xff]
    %v385 = vld [vmem:[#allocation2 + $0x9a8] sm:$0xff]
    %v386 = vld [vmem:[#allocation2 + $0x9b0] sm:$0xff]
    %v387 = vld [vmem:[#allocation2 + $0x9b8] sm:$0xff]
    %v388 = vld [vmem:[#allocation2 + $0x9c0] sm:$0xff]
    %v389 = vld [vmem:[#allocation2 + $0x9c8] sm:$0xff]
    %v390 = vld [vmem:[#allocation2 + $0x9d0] sm:$0xff]
    %v391 = vld [vmem:[#allocation2 + $0x9d8] sm:$0xff]
    %v392 = vld [vmem:[#allocation2 + $0x9e0] sm:$0xff]
    %v393 = vld [vmem:[#allocation2 + $0x9e8] sm:$0xff]
    %v394 = vld [vmem:[#allocation2 + $0x9f0] sm:$0xff]
    %v395 = vld [vmem:[#allocation2 + $0x9f8] sm:$0xff]
    %v396 = vld [vmem:[#allocation2 + $0xa00] sm:$0xff]
    %v397 = vld [vmem:[#allocation2 + $0xa08] sm:$0xff]
    %v398 = vld [vmem:[#allocation2 + $0xa10] sm:$0xff]
    %v399 = vld [vmem:[#allocation2 + $0xa18] sm:$0xff]
    %v400 = vld [vmem:[#allocation2 + $0xa20] sm:$0xff]
    %v401 = vld [vmem:[#allocation2 + $0xa28] sm:$0xff]
    %v402 = vld [vmem:[#allocation2 + $0xa30] sm:$0xff]
    %v403 = vld [vmem:[#allocation2 + $0xa38] sm:$0xff]
    %v404 = vld [vmem:[#allocation2 + $0xa40] sm:$0xff]
    %v405 = vld [vmem:[#allocation2 + $0xa48] sm:$0xff]
    %v406 = vld [vmem:[#allocation2 + $0xa50] sm:$0xff]
    %v407 = vld [vmem:[#allocation2 + $0xa58] sm:$0xff]
    %v408 = vld [vmem:[#allocation2 + $0xa60] sm:$0xff]
    %v409 = vld [vmem:[#allocation2 + $0xa68] sm:$0xff]
    %v410 = vld [vmem:[#allocation2 + $0xa70] sm:$0xff]
    %v411 = vld [vmem:[#allocation2 + $0xa78] sm:$0xff]
    %v412 = vld [vmem:[#allocation2 + $0xa80] sm:$0xff]
    %v413 = vld [vmem:[#allocation2 + $0xa88] sm:$0xff]
    %v414 = vld [vmem:[#allocation2 + $0xa90] sm:$0xff]
    %v415 = vld [vmem:[#allocation2 + $0xa98] sm:$0xff]
    %v416 = vld [vmem:[#allocation2 + $0xaa0] sm:$0xff]
    %v417 = vld [vmem:[#allocation2 + $0xaa8] sm:$0xff]
    %v418 = vld [vmem:[#allocation2 + $0xab0] sm:$0xff]
    %v419 = vld [vmem:[#allocation2 + $0xab8] sm:$0xff]
    %v420 = vld [vmem:[#allocation2 + $0xac0] sm:$0xff]
    %v421 = vld [vmem:[#allocation2 + $0xac8] sm:$0xff]
    %v422 = vld [vmem:[#allocation2 + $0xad0] sm:$0xff]
    %v423 = vld [vmem:[#allocation2 + $0xad8] sm:$0xff]
    %v424 = vld [vmem:[#allocation2 + $0xae0] sm:$0xff]
    %v425 = vld [vmem:[#allocation2 + $0xae8] sm:$0xff]
    %v426 = vld [vmem:[#allocation2 + $0xaf0] sm:$0xff]
    %v427 = vld [vmem:[#allocation2 + $0xaf8] sm:$0xff]
    %v428 = vld [vmem:[#allocation2 + $0xb00] sm:$0xff]
    %v429 = vld [vmem:[#allocation2 + $0xb08] sm:$0xff]
    %v430 = vld [vmem:[#allocation2 + $0xb10] sm:$0xff]
    %v431 = vld [vmem:[#allocation2 + $0xb18] sm:$0xff]
    %v432 = vld [vmem:[#allocation2 + $0xb20] sm:$0xff]
    %v433 = vld [vmem:[#allocation2 + $0xb28] sm:$0xff]
    %v434 = vld [vmem:[#allocation2 + $0xb30] sm:$0xff]
    %v435 = vld [vmem:[#allocation2 + $0xb38] sm:$0xff]
    %v436 = vld [vmem:[#allocation2 + $0xb40] sm:$0xff]
    %v437 = vld [vmem:[#allocation2 + $0xb48] sm:$0xff]
    %v438 = vld [vmem:[#allocation2 + $0xb50] sm:$0xff]
    %v439 = vld [vmem:[#allocation2 + $0xb58] sm:$0xff]
    %v440 = vld [vmem:[#allocation2 + $0xb60] sm:$0xff]
    %v441 = vld [vmem:[#allocation2 + $0xb68] sm:$0xff]
    %v442 = vld [vmem:[#allocation2 + $0xb70] sm:$0xff]
    %v443 = vld [vmem:[#allocation2 + $0xb78] sm:$0xff]
    %v444 = vld [vmem:[#allocation2 + $0xb80] sm:$0xff]
    %v445 = vld [vmem:[#allocation2 + $0xb88] sm:$0xff]
    %v446 = vld [vmem:[#allocation2 + $0xb90] sm:$0xff]
    %v447 = vld [vmem:[#allocation2 + $0xb98] sm:$0xff]
    %v448 = vld [vmem:[#allocation2 + $0xba0] sm:$0xff]
    %v449 = vld [vmem:[#allocation2 + $0xba8] sm:$0xff]
    %v450 = vld [vmem:[#allocation2 + $0xbb0] sm:$0xff]
    %v451 = vld [vmem:[#allocation2 + $0xbb8] sm:$0xff]
    %v452 = vld [vmem:[#allocation2 + $0xbc0] sm:$0xff]
    %v453 = vld [vmem:[#allocation2 + $0xbc8] sm:$0xff]
    %v454 = vld [vmem:[#allocation2 + $0xbd0] sm:$0xff]
    %v455 = vld [vmem:[#allocation2 + $0xbd8] sm:$0xff]
    %v456 = vld [vmem:[#allocation2 + $0xbe0] sm:$0xff]
    %v457 = vld [vmem:[#allocation2 + $0xbe8] sm:$0xff]
    %v458 = vld [vmem:[#allocation2 + $0xbf0] sm:$0xff]
    %v459 = vld [vmem:[#allocation2 + $0xbf8] sm:$0xff]
    %v460 = vld [vmem:[#allocation2 + $0xc00] sm:$0xff]
    %v461 = vld [vmem:[#allocation2 + $0xc08] sm:$0xff]
    %v462 = vld [vmem:[#allocation2 + $0xc10] sm:$0xff]
    %v463 = vld [vmem:[#allocation2 + $0xc18] sm:$0xff]
    %v464 = vld [vmem:[#allocation2 + $0xc20] sm:$0xff]
    %v465 = vld [vmem:[#allocation2 + $0xc28] sm:$0xff]
    %v466 = vld [vmem:[#allocation2 + $0xc30] sm:$0xff]
    %v467 = vld [vmem:[#allocation2 + $0xc38] sm:$0xff]
    %v468 = vld [vmem:[#allocation2 + $0xc40] sm:$0xff]
    %v469 = vld [vmem:[#allocation2 + $0xc48] sm:$0xff]
    %v470 = vld [vmem:[#allocation2 + $0xc50] sm:$0xff]
    %v471 = vld [vmem:[#allocation2 + $0xc58] sm:$0xff]
    %v472 = vld [vmem:[#allocation2 + $0xc60] sm:$0xff]
    %v473 = vld [vmem:[#allocation2 + $0xc68] sm:$0xff]
    %v474 = vld [vmem:[#allocation2 + $0xc70] sm:$0xff]
    %v475 = vld [vmem:[#allocation2 + $0xc78] sm:$0xff]
    %v476 = vld [vmem:[#allocation2 + $0xc80] sm:$0xff]
    %v477 = vld [vmem:[#allocation2 + $0xc88] sm:$0xff]
    %v478 = vld [vmem:[#allocation2 + $0xc90] sm:$0xff]
    %v479 = vld [vmem:[#allocation2 + $0xc98] sm:$0xff]
    %v480 = vld [vmem:[#allocation2 + $0xca0] sm:$0xff]
    %v481 = vld [vmem:[#allocation2 + $0xca8] sm:$0xff]
    %v482 = vld [vmem:[#allocation2 + $0xcb0] sm:$0xff]
    %v483 = vld [vmem:[#allocation2 + $0xcb8] sm:$0xff]
    %v484 = vld [vmem:[#allocation2 + $0xcc0] sm:$0xff]
    %v485 = vld [vmem:[#allocation2 + $0xcc8] sm:$0xff]
    %v486 = vld [vmem:[#allocation2 + $0xcd0] sm:$0xff]
    %v487 = vld [vmem:[#allocation2 + $0xcd8] sm:$0xff]
    %v488 = vld [vmem:[#allocation2 + $0xce0] sm:$0xff]
    %v489 = vld [vmem:[#allocation2 + $0xce8] sm:$0xff]
    %v490 = vld [vmem:[#allocation2 + $0xcf0] sm:$0xff]
    %v491 = vld [vmem:[#allocation2 + $0xcf8] sm:$0xff]
    %v492 = vld [vmem:[#allocation2 + $0xd00] sm:$0xff]
    %v493 = vld [vmem:[#allocation2 + $0xd08] sm:$0xff]
    %v494 = vld [vmem:[#allocation2 + $0xd10] sm:$0xff]
    %v495 = vld [vmem:[#allocation2 + $0xd18] sm:$0xff]
    %v496 = vld [vmem:[#allocation2 + $0xd20] sm:$0xff]
    %v497 = vld [vmem:[#allocation2 + $0xd28] sm:$0xff]
    %v498 = vld [vmem:[#allocation2 + $0xd30] sm:$0xff]
    %v499 = vld [vmem:[#allocation2 + $0xd38] sm:$0xff]
    %v500 = vld [vmem:[#allocation2 + $0xd40] sm:$0xff]
    %v501 = vld [vmem:[#allocation2 + $0xd48] sm:$0xff]
    %v502 = vld [vmem:[#allocation2 + $0xd50] sm:$0xff]
    %v503 = vld [vmem:[#allocation2 + $0xd58] sm:$0xff]
    %v504 = vld [vmem:[#allocation2 + $0xd60] sm:$0xff]
    %v505 = vld [vmem:[#allocation2 + $0xd68] sm:$0xff]
    %v506 = vld [vmem:[#allocation2 + $0xd70] sm:$0xff]
    %v507 = vld [vmem:[#allocation2 + $0xd78] sm:$0xff]
    %v508 = vld [vmem:[#allocation2 + $0xd80] sm:$0xff]
    %v509 = vld [vmem:[#allocation2 + $0xd88] sm:$0xff]
    %v510 = vld [vmem:[#allocation2 + $0xd90] sm:$0xff]
    %v511 = vld [vmem:[#allocation2 + $0xd98] sm:$0xff]
    %v512 = vld [vmem:[#allocation2 + $0xda0] sm:$0xff]
    %v513 = vld [vmem:[#allocation2 + $0xda8] sm:$0xff]
    %v514 = vld [vmem:[#allocation2 + $0xdb0] sm:$0xff]
    %v515 = vld [vmem:[#allocation2 + $0xdb8] sm:$0xff]
    %v516 = vld [vmem:[#allocation2 + $0xdc0] sm:$0xff]
    %v517 = vld [vmem:[#allocation2 + $0xdc8] sm:$0xff]
    %v518 = vld [vmem:[#allocation2 + $0xdd0] sm:$0xff]
    %v519 = vld [vmem:[#allocation2 + $0xdd8] sm:$0xff]
    %v520 = vld [vmem:[#allocation2 + $0xde0] sm:$0xff]
    %v521 = vld [vmem:[#allocation2 + $0xde8] sm:$0xff]
    %v522 = vld [vmem:[#allocation2 + $0xdf0] sm:$0xff]
    %v523 = vld [vmem:[#allocation2 + $0xdf8] sm:$0xff]
    %v524 = vld [vmem:[#allocation2 + $0xe00] sm:$0xff]
    %v525 = vld [vmem:[#allocation2 + $0xe08] sm:$0xff]
    %v526 = vld [vmem:[#allocation2 + $0xe10] sm:$0xff]
    %v527 = vld [vmem:[#allocation2 + $0xe18] sm:$0xff]
    %v528 = vld [vmem:[#allocation2 + $0xe20] sm:$0xff]
    %v529 = vld [vmem:[#allocation2 + $0xe28] sm:$0xff]
    %v530 = vld [vmem:[#allocation2 + $0xe30] sm:$0xff]
    %v531 = vld [vmem:[#allocation2 + $0xe38] sm:$0xff]
    %v532 = vld [vmem:[#allocation2 + $0xe40] sm:$0xff]
    %v533 = vld [vmem:[#allocation2 + $0xe48] sm:$0xff]
    %v534 = vld [vmem:[#allocation2 + $0xe50] sm:$0xff]
    %v535 = vld [vmem:[#allocation2 + $0xe58] sm:$0xff]
    %v536 = vld [vmem:[#allocation2 + $0xe60] sm:$0xff]
    %v537 = vld [vmem:[#allocation2 + $0xe68] sm:$0xff]
    %v538 = vld [vmem:[#allocation2 + $0xe70] sm:$0xff]
    %v539 = vld [vmem:[#allocation2 + $0xe78] sm:$0xff]
    %v540 = vld [vmem:[#allocation2 + $0xe80] sm:$0xff]
    %v541 = vld [vmem:[#allocation2 + $0xe88] sm:$0xff]
    %v542 = vld [vmem:[#allocation2 + $0xe90] sm:$0xff]
    %v543 = vld [vmem:[#allocation2 + $0xe98] sm:$0xff]
    %v544 = vld [vmem:[#allocation2 + $0xea0] sm:$0xff]
    %v545 = vld [vmem:[#allocation2 + $0xea8] sm:$0xff]
    %v546 = vld [vmem:[#allocation2 + $0xeb0] sm:$0xff]
    %v547 = vld [vmem:[#allocation2 + $0xeb8] sm:$0xff]
    %v548 = vld [vmem:[#allocation2 + $0xec0] sm:$0xff]
    %v549 = vld [vmem:[#allocation2 + $0xec8] sm:$0xff]
    %v550 = vld [vmem:[#allocation2 + $0xed0] sm:$0xff]
    %v551 = vld [vmem:[#allocation2 + $0xed8] sm:$0xff]
    %v552 = vld [vmem:[#allocation2 + $0xee0] sm:$0xff]
    %v553 = vld [vmem:[#allocation2 + $0xee8] sm:$0xff]
    %v554 = vld [vmem:[#allocation2 + $0xef0] sm:$0xff]
    %v555 = vld [vmem:[#allocation2 + $0xef8] sm:$0xff]
    %v556 = vld [vmem:[#allocation2 + $0xf00] sm:$0xff]
    %v557 = vld [vmem:[#allocation2 + $0xf08] sm:$0xff]
    %v558 = vld [vmem:[#allocation2 + $0xf10] sm:$0xff]
    %v559 = vld [vmem:[#allocation2 + $0xf18] sm:$0xff]
    %v560 = vld [vmem:[#allocation2 + $0xf20] sm:$0xff]
    %v561 = vld [vmem:[#allocation2 + $0xf28] sm:$0xff]
    %v562 = vld [vmem:[#allocation2 + $0xf30] sm:$0xff]
    %v563 = vld [vmem:[#allocation2 + $0xf38] sm:$0xff]
    %v564 = vld [vmem:[#allocation2 + $0xf40] sm:$0xff]
    %v565 = vld [vmem:[#allocation2 + $0xf48] sm:$0xff]
    %v566 = vld [vmem:[#allocation2 + $0xf50] sm:$0xff]
    %v567 = vld [vmem:[#allocation2 + $0xf58] sm:$0xff]
    %v568 = vld [vmem:[#allocation2 + $0xf60] sm:$0xff]
    %v569 = vld [vmem:[#allocation2 + $0xf68] sm:$0xff]
    %v570 = vld [vmem:[#allocation2 + $0xf70] sm:$0xff]
    %v571 = vld [vmem:[#allocation2 + $0xf78] sm:$0xff]
    %v572 = vld [vmem:[#allocation2 + $0xf80] sm:$0xff]
    %v573 = vld [vmem:[#allocation2 + $0xf88] sm:$0xff]
    %v574 = vld [vmem:[#allocation2 + $0xf90] sm:$0xff]
    %v575 = vld [vmem:[#allocation2 + $0xf98] sm:$0xff]
    %v576 = vld [vmem:[#allocation2 + $0xfa0] sm:$0xff]
    %v577 = vld [vmem:[#allocation2 + $0xfa8] sm:$0xff]
    %v578 = vld [vmem:[#allocation2 + $0xfb0] sm:$0xff]
    %v579 = vld [vmem:[#allocation2 + $0xfb8] sm:$0xff]
    %v580 = vld [vmem:[#allocation2 + $0xfc0] sm:$0xff]
    %v581 = vld [vmem:[#allocation2 + $0xfc8] sm:$0xff]
    %v582 = vld [vmem:[#allocation2 + $0xfd0] sm:$0xff]
    %v583 = vld [vmem:[#allocation2 + $0xfd8] sm:$0xff]
    %v584 = vld [vmem:[#allocation2 + $0xfe0] sm:$0xff]
    %v585 = vld [vmem:[#allocation2 + $0xfe8] sm:$0xff]
    %v586 = vld [vmem:[#allocation2 + $0xff0] sm:$0xff]
    %v587 = vld [vmem:[#allocation2 + $0xff8] sm:$0xff]
    %v588 = vld [vmem:[#allocation5] sm:$0xff]
    %v589 = vld [vmem:[#allocation5 + $0x8] sm:$0xff]
    %v592 = vlaneseq
    %v593 = vshrl.u32 %v592, 7
    %v594 = vsub.s32 0, %v593
    %v595 = vrot.slane %v588, %v594
    %v596 = vlaneseq
    %v597 = vshrl.u32 %v596, 7
    %v598 = vsub.s32 1, %v597
    %v599 = vrot.slane %v588, %v598
    %v600 = vlaneseq
    %v601 = vshrl.u32 %v600, 7
    %v602 = vsub.s32 2, %v601
    %v603 = vrot.slane %v588, %v602
    %v604 = vlaneseq
    %v605 = vshrl.u32 %v604, 7
    %v606 = vsub.s32 3, %v605
    %v607 = vrot.slane %v588, %v606
    %v608 = vlaneseq
    %v609 = vshrl.u32 %v608, 7
    %v610 = vsub.s32 4, %v609
    %v611 = vrot.slane %v588, %v610
    %v612 = vlaneseq
    %v613 = vshrl.u32 %v612, 7
    %v614 = vsub.s32 5, %v613
    %v615 = vrot.slane %v588, %v614
    %v616 = vlaneseq
    %v617 = vshrl.u32 %v616, 7
    %v618 = vsub.s32 6, %v617
    %v619 = vrot.slane %v588, %v618
    %v620 = vlaneseq
    %v621 = vshrl.u32 %v620, 7
    %v622 = vsub.s32 7, %v621
    %v623 = vrot.slane %v588, %v622
    %v624 = vlaneseq
    %v625 = vshrl.u32 %v624, 7
    %v626 = vsub.s32 0, %v625
    %v627 = vrot.slane %v589, %v626
    %v628 = vlaneseq
    %v629 = vshrl.u32 %v628, 7
    %v630 = vsub.s32 1, %v629
    %v631 = vrot.slane %v589, %v630
    %v632 = vlaneseq
    %v633 = vshrl.u32 %v632, 7
    %v634 = vsub.s32 2, %v633
    %v635 = vrot.slane %v589, %v634
    %v636 = vlaneseq
    %v637 = vshrl.u32 %v636, 7
    %v638 = vsub.s32 3, %v637
    %v639 = vrot.slane %v589, %v638
    %v640 = vlaneseq
    %v641 = vshrl.u32 %v640, 7
    %v642 = vsub.s32 4, %v641
    %v643 = vrot.slane %v589, %v642
    %v644 = vlaneseq
    %v645 = vshrl.u32 %v644, 7
    %v646 = vsub.s32 5, %v645
    %v647 = vrot.slane %v589, %v646
    %v648 = vlaneseq
    %v649 = vshrl.u32 %v648, 7
    %v650 = vsub.s32 6, %v649
    %v651 = vrot.slane %v589, %v650
    %v652 = vlaneseq
    %v653 = vshrl.u32 %v652, 7
    %v654 = vsub.s32 7, %v653
    %v655 = vrot.slane %v589, %v654
    %v676 = vunpack.c.l.b16 %v72
    %v677 = vunpack.c.h.b16 %v72
    %v678 = vunpack.c.l.b16 %v73
    %v679 = vunpack.c.h.b16 %v73
    %v680 = vunpack.c.l.b16 %v74
    %v681 = vunpack.c.h.b16 %v74
    %v682 = vunpack.c.l.b16 %v75
    %v683 = vunpack.c.h.b16 %v75
    %v684 = vpack.c.b16 %v680, %v676
    %v685 = vpack.c.b16 %v681, %v677
    %v686 = vpack.c.b16 %v682, %v678
    %v687 = vpack.c.b16 %v683, %v679
    %v1204 = vunpack.c.l.b16 %v76
    %v1205 = vunpack.c.h.b16 %v76
    %v1206 = vunpack.c.l.b16 %v77
    %v1207 = vunpack.c.h.b16 %v77
    %v1208 = vunpack.c.l.b16 %v78
    %v1209 = vunpack.c.h.b16 %v78
    %v1210 = vunpack.c.l.b16 %v79
    %v1211 = vunpack.c.h.b16 %v79
    %v1212 = vunpack.c.l.b16 %v80
    %v1213 = vunpack.c.h.b16 %v80
    %v1214 = vunpack.c.l.b16 %v81
    %v1215 = vunpack.c.h.b16 %v81
    %v1216 = vunpack.c.l.b16 %v82
    %v1217 = vunpack.c.h.b16 %v82
    %v1218 = vunpack.c.l.b16 %v83
    %v1219 = vunpack.c.h.b16 %v83
    %v1220 = vunpack.c.l.b16 %v84
    %v1221 = vunpack.c.h.b16 %v84
    %v1222 = vunpack.c.l.b16 %v85
    %v1223 = vunpack.c.h.b16 %v85
    %v1224 = vunpack.c.l.b16 %v86
    %v1225 = vunpack.c.h.b16 %v86
    %v1226 = vunpack.c.l.b16 %v87
    %v1227 = vunpack.c.h.b16 %v87
    %v1228 = vunpack.c.l.b16 %v88
    %v1229 = vunpack.c.h.b16 %v88
    %v1230 = vunpack.c.l.b16 %v89
    %v1231 = vunpack.c.h.b16 %v89
    %v1232 = vunpack.c.l.b16 %v90
    %v1233 = vunpack.c.h.b16 %v90
    %v1234 = vunpack.c.l.b16 %v91
    %v1235 = vunpack.c.h.b16 %v91
    %v1236 = vunpack.c.l.b16 %v92
    %v1237 = vunpack.c.h.b16 %v92
    %v1238 = vunpack.c.l.b16 %v93
    %v1239 = vunpack.c.h.b16 %v93
    %v1240 = vunpack.c.l.b16 %v94
    %v1241 = vunpack.c.h.b16 %v94
    %v1242 = vunpack.c.l.b16 %v95
    %v1243 = vunpack.c.h.b16 %v95
    %v1244 = vunpack.c.l.b16 %v96
    %v1245 = vunpack.c.h.b16 %v96
    %v1246 = vunpack.c.l.b16 %v97
    %v1247 = vunpack.c.h.b16 %v97
    %v1248 = vunpack.c.l.b16 %v98
    %v1249 = vunpack.c.h.b16 %v98
    %v1250 = vunpack.c.l.b16 %v99
    %v1251 = vunpack.c.h.b16 %v99
    %v1252 = vunpack.c.l.b16 %v100
    %v1253 = vunpack.c.h.b16 %v100
    %v1254 = vunpack.c.l.b16 %v101
    %v1255 = vunpack.c.h.b16 %v101
    %v1256 = vunpack.c.l.b16 %v102
    %v1257 = vunpack.c.h.b16 %v102
    %v1258 = vunpack.c.l.b16 %v103
    %v1259 = vunpack.c.h.b16 %v103
    %v1260 = vunpack.c.l.b16 %v104
    %v1261 = vunpack.c.h.b16 %v104
    %v1262 = vunpack.c.l.b16 %v105
    %v1263 = vunpack.c.h.b16 %v105
    %v1264 = vunpack.c.l.b16 %v106
    %v1265 = vunpack.c.h.b16 %v106
    %v1266 = vunpack.c.l.b16 %v107
    %v1267 = vunpack.c.h.b16 %v107
    %v1268 = vunpack.c.l.b16 %v108
    %v1269 = vunpack.c.h.b16 %v108
    %v1270 = vunpack.c.l.b16 %v109
    %v1271 = vunpack.c.h.b16 %v109
    %v1272 = vunpack.c.l.b16 %v110
    %v1273 = vunpack.c.h.b16 %v110
    %v1274 = vunpack.c.l.b16 %v111
    %v1275 = vunpack.c.h.b16 %v111
    %v1276 = vunpack.c.l.b16 %v112
    %v1277 = vunpack.c.h.b16 %v112
    %v1278 = vunpack.c.l.b16 %v113
    %v1279 = vunpack.c.h.b16 %v113
    %v1280 = vunpack.c.l.b16 %v114
    %v1281 = vunpack.c.h.b16 %v114
    %v1282 = vunpack.c.l.b16 %v115
    %v1283 = vunpack.c.h.b16 %v115
    %v1284 = vunpack.c.l.b16 %v116
    %v1285 = vunpack.c.h.b16 %v116
    %v1286 = vunpack.c.l.b16 %v117
    %v1287 = vunpack.c.h.b16 %v117
    %v1288 = vunpack.c.l.b16 %v118
    %v1289 = vunpack.c.h.b16 %v118
    %v1290 = vunpack.c.l.b16 %v119
    %v1291 = vunpack.c.h.b16 %v119
    %v1292 = vunpack.c.l.b16 %v120
    %v1293 = vunpack.c.h.b16 %v120
    %v1294 = vunpack.c.l.b16 %v121
    %v1295 = vunpack.c.h.b16 %v121
    %v1296 = vunpack.c.l.b16 %v122
    %v1297 = vunpack.c.h.b16 %v122
    %v1298 = vunpack.c.l.b16 %v123
    %v1299 = vunpack.c.h.b16 %v123
    %v1300 = vunpack.c.l.b16 %v124
    %v1301 = vunpack.c.h.b16 %v124
    %v1302 = vunpack.c.l.b16 %v125
    %v1303 = vunpack.c.h.b16 %v125
    %v1304 = vunpack.c.l.b16 %v126
    %v1305 = vunpack.c.h.b16 %v126
    %v1306 = vunpack.c.l.b16 %v127
    %v1307 = vunpack.c.h.b16 %v127
    %v1308 = vunpack.c.l.b16 %v128
    %v1309 = vunpack.c.h.b16 %v128
    %v1310 = vunpack.c.l.b16 %v129
    %v1311 = vunpack.c.h.b16 %v129
    %v1312 = vunpack.c.l.b16 %v130
    %v1313 = vunpack.c.h.b16 %v130
    %v1314 = vunpack.c.l.b16 %v131
    %v1315 = vunpack.c.h.b16 %v131
    %v1316 = vunpack.c.l.b16 %v132
    %v1317 = vunpack.c.h.b16 %v132
    %v1318 = vunpack.c.l.b16 %v133
    %v1319 = vunpack.c.h.b16 %v133
    %v1320 = vunpack.c.l.b16 %v134
    %v1321 = vunpack.c.h.b16 %v134
    %v1322 = vunpack.c.l.b16 %v135
    %v1323 = vunpack.c.h.b16 %v135
    %v1324 = vunpack.c.l.b16 %v136
    %v1325 = vunpack.c.h.b16 %v136
    %v1326 = vunpack.c.l.b16 %v137
    %v1327 = vunpack.c.h.b16 %v137
    %v1328 = vunpack.c.l.b16 %v138
    %v1329 = vunpack.c.h.b16 %v138
    %v1330 = vunpack.c.l.b16 %v139
    %v1331 = vunpack.c.h.b16 %v139
    %v1332 = vunpack.c.l.b16 %v140
    %v1333 = vunpack.c.h.b16 %v140
    %v1334 = vunpack.c.l.b16 %v141
    %v1335 = vunpack.c.h.b16 %v141
    %v1336 = vunpack.c.l.b16 %v142
    %v1337 = vunpack.c.h.b16 %v142
    %v1338 = vunpack.c.l.b16 %v143
    %v1339 = vunpack.c.h.b16 %v143
    %v1340 = vunpack.c.l.b16 %v144
    %v1341 = vunpack.c.h.b16 %v144
    %v1342 = vunpack.c.l.b16 %v145
    %v1343 = vunpack.c.h.b16 %v145
    %v1344 = vunpack.c.l.b16 %v146
    %v1345 = vunpack.c.h.b16 %v146
    %v1346 = vunpack.c.l.b16 %v147
    %v1347 = vunpack.c.h.b16 %v147
    %v1348 = vunpack.c.l.b16 %v148
    %v1349 = vunpack.c.h.b16 %v148
    %v1350 = vunpack.c.l.b16 %v149
    %v1351 = vunpack.c.h.b16 %v149
    %v1352 = vunpack.c.l.b16 %v150
    %v1353 = vunpack.c.h.b16 %v150
    %v1354 = vunpack.c.l.b16 %v151
    %v1355 = vunpack.c.h.b16 %v151
    %v1356 = vunpack.c.l.b16 %v152
    %v1357 = vunpack.c.h.b16 %v152
    %v1358 = vunpack.c.l.b16 %v153
    %v1359 = vunpack.c.h.b16 %v153
    %v1360 = vunpack.c.l.b16 %v154
    %v1361 = vunpack.c.h.b16 %v154
    %v1362 = vunpack.c.l.b16 %v155
    %v1363 = vunpack.c.h.b16 %v155
    %v1364 = vunpack.c.l.b16 %v156
    %v1365 = vunpack.c.h.b16 %v156
    %v1366 = vunpack.c.l.b16 %v157
    %v1367 = vunpack.c.h.b16 %v157
    %v1368 = vunpack.c.l.b16 %v158
    %v1369 = vunpack.c.h.b16 %v158
    %v1370 = vunpack.c.l.b16 %v159
    %v1371 = vunpack.c.h.b16 %v159
    %v1372 = vunpack.c.l.b16 %v160
    %v1373 = vunpack.c.h.b16 %v160
    %v1374 = vunpack.c.l.b16 %v161
    %v1375 = vunpack.c.h.b16 %v161
    %v1376 = vunpack.c.l.b16 %v162
    %v1377 = vunpack.c.h.b16 %v162
    %v1378 = vunpack.c.l.b16 %v163
    %v1379 = vunpack.c.h.b16 %v163
    %v1380 = vunpack.c.l.b16 %v164
    %v1381 = vunpack.c.h.b16 %v164
    %v1382 = vunpack.c.l.b16 %v165
    %v1383 = vunpack.c.h.b16 %v165
    %v1384 = vunpack.c.l.b16 %v166
    %v1385 = vunpack.c.h.b16 %v166
    %v1386 = vunpack.c.l.b16 %v167
    %v1387 = vunpack.c.h.b16 %v167
    %v1388 = vunpack.c.l.b16 %v168
    %v1389 = vunpack.c.h.b16 %v168
    %v1390 = vunpack.c.l.b16 %v169
    %v1391 = vunpack.c.h.b16 %v169
    %v1392 = vunpack.c.l.b16 %v170
    %v1393 = vunpack.c.h.b16 %v170
    %v1394 = vunpack.c.l.b16 %v171
    %v1395 = vunpack.c.h.b16 %v171
    %v1396 = vunpack.c.l.b16 %v172
    %v1397 = vunpack.c.h.b16 %v172
    %v1398 = vunpack.c.l.b16 %v173
    %v1399 = vunpack.c.h.b16 %v173
    %v1400 = vunpack.c.l.b16 %v174
    %v1401 = vunpack.c.h.b16 %v174
    %v1402 = vunpack.c.l.b16 %v175
    %v1403 = vunpack.c.h.b16 %v175
    %v1404 = vunpack.c.l.b16 %v176
    %v1405 = vunpack.c.h.b16 %v176
    %v1406 = vunpack.c.l.b16 %v177
    %v1407 = vunpack.c.h.b16 %v177
    %v1408 = vunpack.c.l.b16 %v178
    %v1409 = vunpack.c.h.b16 %v178
    %v1410 = vunpack.c.l.b16 %v179
    %v1411 = vunpack.c.h.b16 %v179
    %v1412 = vunpack.c.l.b16 %v180
    %v1413 = vunpack.c.h.b16 %v180
    %v1414 = vunpack.c.l.b16 %v181
    %v1415 = vunpack.c.h.b16 %v181
    %v1416 = vunpack.c.l.b16 %v182
    %v1417 = vunpack.c.h.b16 %v182
    %v1418 = vunpack.c.l.b16 %v183
    %v1419 = vunpack.c.h.b16 %v183
    %v1420 = vunpack.c.l.b16 %v184
    %v1421 = vunpack.c.h.b16 %v184
    %v1422 = vunpack.c.l.b16 %v185
    %v1423 = vunpack.c.h.b16 %v185
    %v1424 = vunpack.c.l.b16 %v186
    %v1425 = vunpack.c.h.b16 %v186
    %v1426 = vunpack.c.l.b16 %v187
    %v1427 = vunpack.c.h.b16 %v187
    %v1428 = vunpack.c.l.b16 %v188
    %v1429 = vunpack.c.h.b16 %v188
    %v1430 = vunpack.c.l.b16 %v189
    %v1431 = vunpack.c.h.b16 %v189
    %v1432 = vunpack.c.l.b16 %v190
    %v1433 = vunpack.c.h.b16 %v190
    %v1434 = vunpack.c.l.b16 %v191
    %v1435 = vunpack.c.h.b16 %v191
    %v1436 = vunpack.c.l.b16 %v192
    %v1437 = vunpack.c.h.b16 %v192
    %v1438 = vunpack.c.l.b16 %v193
    %v1439 = vunpack.c.h.b16 %v193
    %v1440 = vunpack.c.l.b16 %v194
    %v1441 = vunpack.c.h.b16 %v194
    %v1442 = vunpack.c.l.b16 %v195
    %v1443 = vunpack.c.h.b16 %v195
    %v1444 = vunpack.c.l.b16 %v196
    %v1445 = vunpack.c.h.b16 %v196
    %v1446 = vunpack.c.l.b16 %v197
    %v1447 = vunpack.c.h.b16 %v197
    %v1448 = vunpack.c.l.b16 %v198
    %v1449 = vunpack.c.h.b16 %v198
    %v1450 = vunpack.c.l.b16 %v199
    %v1451 = vunpack.c.h.b16 %v199
    %v1452 = vunpack.c.l.b16 %v200
    %v1453 = vunpack.c.h.b16 %v200
    %v1454 = vunpack.c.l.b16 %v201
    %v1455 = vunpack.c.h.b16 %v201
    %v1456 = vunpack.c.l.b16 %v202
    %v1457 = vunpack.c.h.b16 %v202
    %v1458 = vunpack.c.l.b16 %v203
    %v1459 = vunpack.c.h.b16 %v203
    %v1460 = vunpack.c.l.b16 %v204
    %v1461 = vunpack.c.h.b16 %v204
    %v1462 = vunpack.c.l.b16 %v205
    %v1463 = vunpack.c.h.b16 %v205
    %v1464 = vunpack.c.l.b16 %v206
    %v1465 = vunpack.c.h.b16 %v206
    %v1466 = vunpack.c.l.b16 %v207
    %v1467 = vunpack.c.h.b16 %v207
    %v1468 = vunpack.c.l.b16 %v208
    %v1469 = vunpack.c.h.b16 %v208
    %v1470 = vunpack.c.l.b16 %v209
    %v1471 = vunpack.c.h.b16 %v209
    %v1472 = vunpack.c.l.b16 %v210
    %v1473 = vunpack.c.h.b16 %v210
    %v1474 = vunpack.c.l.b16 %v211
    %v1475 = vunpack.c.h.b16 %v211
    %v1476 = vunpack.c.l.b16 %v212
    %v1477 = vunpack.c.h.b16 %v212
    %v1478 = vunpack.c.l.b16 %v213
    %v1479 = vunpack.c.h.b16 %v213
    %v1480 = vunpack.c.l.b16 %v214
    %v1481 = vunpack.c.h.b16 %v214
    %v1482 = vunpack.c.l.b16 %v215
    %v1483 = vunpack.c.h.b16 %v215
    %v1484 = vunpack.c.l.b16 %v216
    %v1485 = vunpack.c.h.b16 %v216
    %v1486 = vunpack.c.l.b16 %v217
    %v1487 = vunpack.c.h.b16 %v217
    %v1488 = vunpack.c.l.b16 %v218
    %v1489 = vunpack.c.h.b16 %v218
    %v1490 = vunpack.c.l.b16 %v219
    %v1491 = vunpack.c.h.b16 %v219
    %v1492 = vunpack.c.l.b16 %v220
    %v1493 = vunpack.c.h.b16 %v220
    %v1494 = vunpack.c.l.b16 %v221
    %v1495 = vunpack.c.h.b16 %v221
    %v1496 = vunpack.c.l.b16 %v222
    %v1497 = vunpack.c.h.b16 %v222
    %v1498 = vunpack.c.l.b16 %v223
    %v1499 = vunpack.c.h.b16 %v223
    %v1500 = vunpack.c.l.b16 %v224
    %v1501 = vunpack.c.h.b16 %v224
    %v1502 = vunpack.c.l.b16 %v225
    %v1503 = vunpack.c.h.b16 %v225
    %v1504 = vunpack.c.l.b16 %v226
    %v1505 = vunpack.c.h.b16 %v226
    %v1506 = vunpack.c.l.b16 %v227
    %v1507 = vunpack.c.h.b16 %v227
    %v1508 = vunpack.c.l.b16 %v228
    %v1509 = vunpack.c.h.b16 %v228
    %v1510 = vunpack.c.l.b16 %v229
    %v1511 = vunpack.c.h.b16 %v229
    %v1512 = vunpack.c.l.b16 %v230
    %v1513 = vunpack.c.h.b16 %v230
    %v1514 = vunpack.c.l.b16 %v231
    %v1515 = vunpack.c.h.b16 %v231
    %v1516 = vunpack.c.l.b16 %v232
    %v1517 = vunpack.c.h.b16 %v232
    %v1518 = vunpack.c.l.b16 %v233
    %v1519 = vunpack.c.h.b16 %v233
    %v1520 = vunpack.c.l.b16 %v234
    %v1521 = vunpack.c.h.b16 %v234
    %v1522 = vunpack.c.l.b16 %v235
    %v1523 = vunpack.c.h.b16 %v235
    %v1524 = vunpack.c.l.b16 %v236
    %v1525 = vunpack.c.h.b16 %v236
    %v1526 = vunpack.c.l.b16 %v237
    %v1527 = vunpack.c.h.b16 %v237
    %v1528 = vunpack.c.l.b16 %v238
    %v1529 = vunpack.c.h.b16 %v238
    %v1530 = vunpack.c.l.b16 %v239
    %v1531 = vunpack.c.h.b16 %v239
    %v1532 = vunpack.c.l.b16 %v240
    %v1533 = vunpack.c.h.b16 %v240
    %v1534 = vunpack.c.l.b16 %v241
    %v1535 = vunpack.c.h.b16 %v241
    %v1536 = vunpack.c.l.b16 %v242
    %v1537 = vunpack.c.h.b16 %v242
    %v1538 = vunpack.c.l.b16 %v243
    %v1539 = vunpack.c.h.b16 %v243
    %v1540 = vunpack.c.l.b16 %v244
    %v1541 = vunpack.c.h.b16 %v244
    %v1542 = vunpack.c.l.b16 %v245
    %v1543 = vunpack.c.h.b16 %v245
    %v1544 = vunpack.c.l.b16 %v246
    %v1545 = vunpack.c.h.b16 %v246
    %v1546 = vunpack.c.l.b16 %v247
    %v1547 = vunpack.c.h.b16 %v247
    %v1548 = vunpack.c.l.b16 %v248
    %v1549 = vunpack.c.h.b16 %v248
    %v1550 = vunpack.c.l.b16 %v249
    %v1551 = vunpack.c.h.b16 %v249
    %v1552 = vunpack.c.l.b16 %v250
    %v1553 = vunpack.c.h.b16 %v250
    %v1554 = vunpack.c.l.b16 %v251
    %v1555 = vunpack.c.h.b16 %v251
    %v1556 = vunpack.c.l.b16 %v252
    %v1557 = vunpack.c.h.b16 %v252
    %v1558 = vunpack.c.l.b16 %v253
    %v1559 = vunpack.c.h.b16 %v253
    %v1560 = vunpack.c.l.b16 %v254
    %v1561 = vunpack.c.h.b16 %v254
    %v1562 = vunpack.c.l.b16 %v255
    %v1563 = vunpack.c.h.b16 %v255
    %v1564 = vunpack.c.l.b16 %v256
    %v1565 = vunpack.c.h.b16 %v256
    %v1566 = vunpack.c.l.b16 %v257
    %v1567 = vunpack.c.h.b16 %v257
    %v1568 = vunpack.c.l.b16 %v258
    %v1569 = vunpack.c.h.b16 %v258
    %v1570 = vunpack.c.l.b16 %v259
    %v1571 = vunpack.c.h.b16 %v259
    %v1572 = vunpack.c.l.b16 %v260
    %v1573 = vunpack.c.h.b16 %v260
    %v1574 = vunpack.c.l.b16 %v261
    %v1575 = vunpack.c.h.b16 %v261
    %v1576 = vunpack.c.l.b16 %v262
    %v1577 = vunpack.c.h.b16 %v262
    %v1578 = vunpack.c.l.b16 %v263
    %v1579 = vunpack.c.h.b16 %v263
    %v1580 = vunpack.c.l.b16 %v264
    %v1581 = vunpack.c.h.b16 %v264
    %v1582 = vunpack.c.l.b16 %v265
    %v1583 = vunpack.c.h.b16 %v265
    %v1584 = vunpack.c.l.b16 %v266
    %v1585 = vunpack.c.h.b16 %v266
    %v1586 = vunpack.c.l.b16 %v267
    %v1587 = vunpack.c.h.b16 %v267
    %v1588 = vunpack.c.l.b16 %v268
    %v1589 = vunpack.c.h.b16 %v268
    %v1590 = vunpack.c.l.b16 %v269
    %v1591 = vunpack.c.h.b16 %v269
    %v1592 = vunpack.c.l.b16 %v270
    %v1593 = vunpack.c.h.b16 %v270
    %v1594 = vunpack.c.l.b16 %v271
    %v1595 = vunpack.c.h.b16 %v271
    %v1596 = vunpack.c.l.b16 %v272
    %v1597 = vunpack.c.h.b16 %v272
    %v1598 = vunpack.c.l.b16 %v273
    %v1599 = vunpack.c.h.b16 %v273
    %v1600 = vunpack.c.l.b16 %v274
    %v1601 = vunpack.c.h.b16 %v274
    %v1602 = vunpack.c.l.b16 %v275
    %v1603 = vunpack.c.h.b16 %v275
    %v1604 = vunpack.c.l.b16 %v276
    %v1605 = vunpack.c.h.b16 %v276
    %v1606 = vunpack.c.l.b16 %v277
    %v1607 = vunpack.c.h.b16 %v277
    %v1608 = vunpack.c.l.b16 %v278
    %v1609 = vunpack.c.h.b16 %v278
    %v1610 = vunpack.c.l.b16 %v279
    %v1611 = vunpack.c.h.b16 %v279
    %v1612 = vunpack.c.l.b16 %v280
    %v1613 = vunpack.c.h.b16 %v280
    %v1614 = vunpack.c.l.b16 %v281
    %v1615 = vunpack.c.h.b16 %v281
    %v1616 = vunpack.c.l.b16 %v282
    %v1617 = vunpack.c.h.b16 %v282
    %v1618 = vunpack.c.l.b16 %v283
    %v1619 = vunpack.c.h.b16 %v283
    %v1620 = vunpack.c.l.b16 %v284
    %v1621 = vunpack.c.h.b16 %v284
    %v1622 = vunpack.c.l.b16 %v285
    %v1623 = vunpack.c.h.b16 %v285
    %v1624 = vunpack.c.l.b16 %v286
    %v1625 = vunpack.c.h.b16 %v286
    %v1626 = vunpack.c.l.b16 %v287
    %v1627 = vunpack.c.h.b16 %v287
    %v1628 = vunpack.c.l.b16 %v288
    %v1629 = vunpack.c.h.b16 %v288
    %v1630 = vunpack.c.l.b16 %v289
    %v1631 = vunpack.c.h.b16 %v289
    %v1632 = vunpack.c.l.b16 %v290
    %v1633 = vunpack.c.h.b16 %v290
    %v1634 = vunpack.c.l.b16 %v291
    %v1635 = vunpack.c.h.b16 %v291
    %v1636 = vunpack.c.l.b16 %v292
    %v1637 = vunpack.c.h.b16 %v292
    %v1638 = vunpack.c.l.b16 %v293
    %v1639 = vunpack.c.h.b16 %v293
    %v1640 = vunpack.c.l.b16 %v294
    %v1641 = vunpack.c.h.b16 %v294
    %v1642 = vunpack.c.l.b16 %v295
    %v1643 = vunpack.c.h.b16 %v295
    %v1644 = vunpack.c.l.b16 %v296
    %v1645 = vunpack.c.h.b16 %v296
    %v1646 = vunpack.c.l.b16 %v297
    %v1647 = vunpack.c.h.b16 %v297
    %v1648 = vunpack.c.l.b16 %v298
    %v1649 = vunpack.c.h.b16 %v298
    %v1650 = vunpack.c.l.b16 %v299
    %v1651 = vunpack.c.h.b16 %v299
    %v1652 = vunpack.c.l.b16 %v300
    %v1653 = vunpack.c.h.b16 %v300
    %v1654 = vunpack.c.l.b16 %v301
    %v1655 = vunpack.c.h.b16 %v301
    %v1656 = vunpack.c.l.b16 %v302
    %v1657 = vunpack.c.h.b16 %v302
    %v1658 = vunpack.c.l.b16 %v303
    %v1659 = vunpack.c.h.b16 %v303
    %v1660 = vunpack.c.l.b16 %v304
    %v1661 = vunpack.c.h.b16 %v304
    %v1662 = vunpack.c.l.b16 %v305
    %v1663 = vunpack.c.h.b16 %v305
    %v1664 = vunpack.c.l.b16 %v306
    %v1665 = vunpack.c.h.b16 %v306
    %v1666 = vunpack.c.l.b16 %v307
    %v1667 = vunpack.c.h.b16 %v307
    %v1668 = vunpack.c.l.b16 %v308
    %v1669 = vunpack.c.h.b16 %v308
    %v1670 = vunpack.c.l.b16 %v309
    %v1671 = vunpack.c.h.b16 %v309
    %v1672 = vunpack.c.l.b16 %v310
    %v1673 = vunpack.c.h.b16 %v310
    %v1674 = vunpack.c.l.b16 %v311
    %v1675 = vunpack.c.h.b16 %v311
    %v1676 = vunpack.c.l.b16 %v312
    %v1677 = vunpack.c.h.b16 %v312
    %v1678 = vunpack.c.l.b16 %v313
    %v1679 = vunpack.c.h.b16 %v313
    %v1680 = vunpack.c.l.b16 %v314
    %v1681 = vunpack.c.h.b16 %v314
    %v1682 = vunpack.c.l.b16 %v315
    %v1683 = vunpack.c.h.b16 %v315
    %v1684 = vunpack.c.l.b16 %v316
    %v1685 = vunpack.c.h.b16 %v316
    %v1686 = vunpack.c.l.b16 %v317
    %v1687 = vunpack.c.h.b16 %v317
    %v1688 = vunpack.c.l.b16 %v318
    %v1689 = vunpack.c.h.b16 %v318
    %v1690 = vunpack.c.l.b16 %v319
    %v1691 = vunpack.c.h.b16 %v319
    %v1692 = vunpack.c.l.b16 %v320
    %v1693 = vunpack.c.h.b16 %v320
    %v1694 = vunpack.c.l.b16 %v321
    %v1695 = vunpack.c.h.b16 %v321
    %v1696 = vunpack.c.l.b16 %v322
    %v1697 = vunpack.c.h.b16 %v322
    %v1698 = vunpack.c.l.b16 %v323
    %v1699 = vunpack.c.h.b16 %v323
    %v1700 = vunpack.c.l.b16 %v324
    %v1701 = vunpack.c.h.b16 %v324
    %v1702 = vunpack.c.l.b16 %v325
    %v1703 = vunpack.c.h.b16 %v325
    %v1704 = vunpack.c.l.b16 %v326
    %v1705 = vunpack.c.h.b16 %v326
    %v1706 = vunpack.c.l.b16 %v327
    %v1707 = vunpack.c.h.b16 %v327
    %v1708 = vunpack.c.l.b16 %v328
    %v1709 = vunpack.c.h.b16 %v328
    %v1710 = vunpack.c.l.b16 %v329
    %v1711 = vunpack.c.h.b16 %v329
    %v1712 = vunpack.c.l.b16 %v330
    %v1713 = vunpack.c.h.b16 %v330
    %v1714 = vunpack.c.l.b16 %v331
    %v1715 = vunpack.c.h.b16 %v331
    %v1716 = vunpack.c.l.b16 %v332
    %v1717 = vunpack.c.h.b16 %v332
    %v1718 = vunpack.c.l.b16 %v333
    %v1719 = vunpack.c.h.b16 %v333
    %v1720 = vunpack.c.l.b16 %v334
    %v1721 = vunpack.c.h.b16 %v334
    %v1722 = vunpack.c.l.b16 %v335
    %v1723 = vunpack.c.h.b16 %v335
    %v1724 = vunpack.c.l.b16 %v336
    %v1725 = vunpack.c.h.b16 %v336
    %v1726 = vunpack.c.l.b16 %v337
    %v1727 = vunpack.c.h.b16 %v337
    %v1728 = vunpack.c.l.b16 %v338
    %v1729 = vunpack.c.h.b16 %v338
    %v1730 = vunpack.c.l.b16 %v339
    %v1731 = vunpack.c.h.b16 %v339
    %v1732 = vunpack.c.l.b16 %v340
    %v1733 = vunpack.c.h.b16 %v340
    %v1734 = vunpack.c.l.b16 %v341
    %v1735 = vunpack.c.h.b16 %v341
    %v1736 = vunpack.c.l.b16 %v342
    %v1737 = vunpack.c.h.b16 %v342
    %v1738 = vunpack.c.l.b16 %v343
    %v1739 = vunpack.c.h.b16 %v343
    %v1740 = vunpack.c.l.b16 %v344
    %v1741 = vunpack.c.h.b16 %v344
    %v1742 = vunpack.c.l.b16 %v345
    %v1743 = vunpack.c.h.b16 %v345
    %v1744 = vunpack.c.l.b16 %v346
    %v1745 = vunpack.c.h.b16 %v346
    %v1746 = vunpack.c.l.b16 %v347
    %v1747 = vunpack.c.h.b16 %v347
    %v1748 = vunpack.c.l.b16 %v348
    %v1749 = vunpack.c.h.b16 %v348
    %v1750 = vunpack.c.l.b16 %v349
    %v1751 = vunpack.c.h.b16 %v349
    %v1752 = vunpack.c.l.b16 %v350
    %v1753 = vunpack.c.h.b16 %v350
    %v1754 = vunpack.c.l.b16 %v351
    %v1755 = vunpack.c.h.b16 %v351
    %v1756 = vunpack.c.l.b16 %v352
    %v1757 = vunpack.c.h.b16 %v352
    %v1758 = vunpack.c.l.b16 %v353
    %v1759 = vunpack.c.h.b16 %v353
    %v1760 = vunpack.c.l.b16 %v354
    %v1761 = vunpack.c.h.b16 %v354
    %v1762 = vunpack.c.l.b16 %v355
    %v1763 = vunpack.c.h.b16 %v355
    %v1764 = vunpack.c.l.b16 %v356
    %v1765 = vunpack.c.h.b16 %v356
    %v1766 = vunpack.c.l.b16 %v357
    %v1767 = vunpack.c.h.b16 %v357
    %v1768 = vunpack.c.l.b16 %v358
    %v1769 = vunpack.c.h.b16 %v358
    %v1770 = vunpack.c.l.b16 %v359
    %v1771 = vunpack.c.h.b16 %v359
    %v1772 = vunpack.c.l.b16 %v360
    %v1773 = vunpack.c.h.b16 %v360
    %v1774 = vunpack.c.l.b16 %v361
    %v1775 = vunpack.c.h.b16 %v361
    %v1776 = vunpack.c.l.b16 %v362
    %v1777 = vunpack.c.h.b16 %v362
    %v1778 = vunpack.c.l.b16 %v363
    %v1779 = vunpack.c.h.b16 %v363
    %v1780 = vunpack.c.l.b16 %v364
    %v1781 = vunpack.c.h.b16 %v364
    %v1782 = vunpack.c.l.b16 %v365
    %v1783 = vunpack.c.h.b16 %v365
    %v1784 = vunpack.c.l.b16 %v366
    %v1785 = vunpack.c.h.b16 %v366
    %v1786 = vunpack.c.l.b16 %v367
    %v1787 = vunpack.c.h.b16 %v367
    %v1788 = vunpack.c.l.b16 %v368
    %v1789 = vunpack.c.h.b16 %v368
    %v1790 = vunpack.c.l.b16 %v369
    %v1791 = vunpack.c.h.b16 %v369
    %v1792 = vunpack.c.l.b16 %v370
    %v1793 = vunpack.c.h.b16 %v370
    %v1794 = vunpack.c.l.b16 %v371
    %v1795 = vunpack.c.h.b16 %v371
    %v1796 = vunpack.c.l.b16 %v372
    %v1797 = vunpack.c.h.b16 %v372
    %v1798 = vunpack.c.l.b16 %v373
    %v1799 = vunpack.c.h.b16 %v373
    %v1800 = vunpack.c.l.b16 %v374
    %v1801 = vunpack.c.h.b16 %v374
    %v1802 = vunpack.c.l.b16 %v375
    %v1803 = vunpack.c.h.b16 %v375
    %v1804 = vunpack.c.l.b16 %v376
    %v1805 = vunpack.c.h.b16 %v376
    %v1806 = vunpack.c.l.b16 %v377
    %v1807 = vunpack.c.h.b16 %v377
    %v1808 = vunpack.c.l.b16 %v378
    %v1809 = vunpack.c.h.b16 %v378
    %v1810 = vunpack.c.l.b16 %v379
    %v1811 = vunpack.c.h.b16 %v379
    %v1812 = vunpack.c.l.b16 %v380
    %v1813 = vunpack.c.h.b16 %v380
    %v1814 = vunpack.c.l.b16 %v381
    %v1815 = vunpack.c.h.b16 %v381
    %v1816 = vunpack.c.l.b16 %v382
    %v1817 = vunpack.c.h.b16 %v382
    %v1818 = vunpack.c.l.b16 %v383
    %v1819 = vunpack.c.h.b16 %v383
    %v1820 = vunpack.c.l.b16 %v384
    %v1821 = vunpack.c.h.b16 %v384
    %v1822 = vunpack.c.l.b16 %v385
    %v1823 = vunpack.c.h.b16 %v385
    %v1824 = vunpack.c.l.b16 %v386
    %v1825 = vunpack.c.h.b16 %v386
    %v1826 = vunpack.c.l.b16 %v387
    %v1827 = vunpack.c.h.b16 %v387
    %v1828 = vunpack.c.l.b16 %v388
    %v1829 = vunpack.c.h.b16 %v388
    %v1830 = vunpack.c.l.b16 %v389
    %v1831 = vunpack.c.h.b16 %v389
    %v1832 = vunpack.c.l.b16 %v390
    %v1833 = vunpack.c.h.b16 %v390
    %v1834 = vunpack.c.l.b16 %v391
    %v1835 = vunpack.c.h.b16 %v391
    %v1836 = vunpack.c.l.b16 %v392
    %v1837 = vunpack.c.h.b16 %v392
    %v1838 = vunpack.c.l.b16 %v393
    %v1839 = vunpack.c.h.b16 %v393
    %v1840 = vunpack.c.l.b16 %v394
    %v1841 = vunpack.c.h.b16 %v394
    %v1842 = vunpack.c.l.b16 %v395
    %v1843 = vunpack.c.h.b16 %v395
    %v1844 = vunpack.c.l.b16 %v396
    %v1845 = vunpack.c.h.b16 %v396
    %v1846 = vunpack.c.l.b16 %v397
    %v1847 = vunpack.c.h.b16 %v397
    %v1848 = vunpack.c.l.b16 %v398
    %v1849 = vunpack.c.h.b16 %v398
    %v1850 = vunpack.c.l.b16 %v399
    %v1851 = vunpack.c.h.b16 %v399
    %v1852 = vunpack.c.l.b16 %v400
    %v1853 = vunpack.c.h.b16 %v400
    %v1854 = vunpack.c.l.b16 %v401
    %v1855 = vunpack.c.h.b16 %v401
    %v1856 = vunpack.c.l.b16 %v402
    %v1857 = vunpack.c.h.b16 %v402
    %v1858 = vunpack.c.l.b16 %v403
    %v1859 = vunpack.c.h.b16 %v403
    %v1860 = vunpack.c.l.b16 %v404
    %v1861 = vunpack.c.h.b16 %v404
    %v1862 = vunpack.c.l.b16 %v405
    %v1863 = vunpack.c.h.b16 %v405
    %v1864 = vunpack.c.l.b16 %v406
    %v1865 = vunpack.c.h.b16 %v406
    %v1866 = vunpack.c.l.b16 %v407
    %v1867 = vunpack.c.h.b16 %v407
    %v1868 = vunpack.c.l.b16 %v408
    %v1869 = vunpack.c.h.b16 %v408
    %v1870 = vunpack.c.l.b16 %v409
    %v1871 = vunpack.c.h.b16 %v409
    %v1872 = vunpack.c.l.b16 %v410
    %v1873 = vunpack.c.h.b16 %v410
    %v1874 = vunpack.c.l.b16 %v411
    %v1875 = vunpack.c.h.b16 %v411
    %v1876 = vunpack.c.l.b16 %v412
    %v1877 = vunpack.c.h.b16 %v412
    %v1878 = vunpack.c.l.b16 %v413
    %v1879 = vunpack.c.h.b16 %v413
    %v1880 = vunpack.c.l.b16 %v414
    %v1881 = vunpack.c.h.b16 %v414
    %v1882 = vunpack.c.l.b16 %v415
    %v1883 = vunpack.c.h.b16 %v415
    %v1884 = vunpack.c.l.b16 %v416
    %v1885 = vunpack.c.h.b16 %v416
    %v1886 = vunpack.c.l.b16 %v417
    %v1887 = vunpack.c.h.b16 %v417
    %v1888 = vunpack.c.l.b16 %v418
    %v1889 = vunpack.c.h.b16 %v418
    %v1890 = vunpack.c.l.b16 %v419
    %v1891 = vunpack.c.h.b16 %v419
    %v1892 = vunpack.c.l.b16 %v420
    %v1893 = vunpack.c.h.b16 %v420
    %v1894 = vunpack.c.l.b16 %v421
    %v1895 = vunpack.c.h.b16 %v421
    %v1896 = vunpack.c.l.b16 %v422
    %v1897 = vunpack.c.h.b16 %v422
    %v1898 = vunpack.c.l.b16 %v423
    %v1899 = vunpack.c.h.b16 %v423
    %v1900 = vunpack.c.l.b16 %v424
    %v1901 = vunpack.c.h.b16 %v424
    %v1902 = vunpack.c.l.b16 %v425
    %v1903 = vunpack.c.h.b16 %v425
    %v1904 = vunpack.c.l.b16 %v426
    %v1905 = vunpack.c.h.b16 %v426
    %v1906 = vunpack.c.l.b16 %v427
    %v1907 = vunpack.c.h.b16 %v427
    %v1908 = vunpack.c.l.b16 %v428
    %v1909 = vunpack.c.h.b16 %v428
    %v1910 = vunpack.c.l.b16 %v429
    %v1911 = vunpack.c.h.b16 %v429
    %v1912 = vunpack.c.l.b16 %v430
    %v1913 = vunpack.c.h.b16 %v430
    %v1914 = vunpack.c.l.b16 %v431
    %v1915 = vunpack.c.h.b16 %v431
    %v1916 = vunpack.c.l.b16 %v432
    %v1917 = vunpack.c.h.b16 %v432
    %v1918 = vunpack.c.l.b16 %v433
    %v1919 = vunpack.c.h.b16 %v433
    %v1920 = vunpack.c.l.b16 %v434
    %v1921 = vunpack.c.h.b16 %v434
    %v1922 = vunpack.c.l.b16 %v435
    %v1923 = vunpack.c.h.b16 %v435
    %v1924 = vunpack.c.l.b16 %v436
    %v1925 = vunpack.c.h.b16 %v436
    %v1926 = vunpack.c.l.b16 %v437
    %v1927 = vunpack.c.h.b16 %v437
    %v1928 = vunpack.c.l.b16 %v438
    %v1929 = vunpack.c.h.b16 %v438
    %v1930 = vunpack.c.l.b16 %v439
    %v1931 = vunpack.c.h.b16 %v439
    %v1932 = vunpack.c.l.b16 %v440
    %v1933 = vunpack.c.h.b16 %v440
    %v1934 = vunpack.c.l.b16 %v441
    %v1935 = vunpack.c.h.b16 %v441
    %v1936 = vunpack.c.l.b16 %v442
    %v1937 = vunpack.c.h.b16 %v442
    %v1938 = vunpack.c.l.b16 %v443
    %v1939 = vunpack.c.h.b16 %v443
    %v1940 = vunpack.c.l.b16 %v444
    %v1941 = vunpack.c.h.b16 %v444
    %v1942 = vunpack.c.l.b16 %v445
    %v1943 = vunpack.c.h.b16 %v445
    %v1944 = vunpack.c.l.b16 %v446
    %v1945 = vunpack.c.h.b16 %v446
    %v1946 = vunpack.c.l.b16 %v447
    %v1947 = vunpack.c.h.b16 %v447
    %v1948 = vunpack.c.l.b16 %v448
    %v1949 = vunpack.c.h.b16 %v448
    %v1950 = vunpack.c.l.b16 %v449
    %v1951 = vunpack.c.h.b16 %v449
    %v1952 = vunpack.c.l.b16 %v450
    %v1953 = vunpack.c.h.b16 %v450
    %v1954 = vunpack.c.l.b16 %v451
    %v1955 = vunpack.c.h.b16 %v451
    %v1956 = vunpack.c.l.b16 %v452
    %v1957 = vunpack.c.h.b16 %v452
    %v1958 = vunpack.c.l.b16 %v453
    %v1959 = vunpack.c.h.b16 %v453
    %v1960 = vunpack.c.l.b16 %v454
    %v1961 = vunpack.c.h.b16 %v454
    %v1962 = vunpack.c.l.b16 %v455
    %v1963 = vunpack.c.h.b16 %v455
    %v1964 = vunpack.c.l.b16 %v456
    %v1965 = vunpack.c.h.b16 %v456
    %v1966 = vunpack.c.l.b16 %v457
    %v1967 = vunpack.c.h.b16 %v457
    %v1968 = vunpack.c.l.b16 %v458
    %v1969 = vunpack.c.h.b16 %v458
    %v1970 = vunpack.c.l.b16 %v459
    %v1971 = vunpack.c.h.b16 %v459
    %v1972 = vunpack.c.l.b16 %v460
    %v1973 = vunpack.c.h.b16 %v460
    %v1974 = vunpack.c.l.b16 %v461
    %v1975 = vunpack.c.h.b16 %v461
    %v1976 = vunpack.c.l.b16 %v462
    %v1977 = vunpack.c.h.b16 %v462
    %v1978 = vunpack.c.l.b16 %v463
    %v1979 = vunpack.c.h.b16 %v463
    %v1980 = vunpack.c.l.b16 %v464
    %v1981 = vunpack.c.h.b16 %v464
    %v1982 = vunpack.c.l.b16 %v465
    %v1983 = vunpack.c.h.b16 %v465
    %v1984 = vunpack.c.l.b16 %v466
    %v1985 = vunpack.c.h.b16 %v466
    %v1986 = vunpack.c.l.b16 %v467
    %v1987 = vunpack.c.h.b16 %v467
    %v1988 = vunpack.c.l.b16 %v468
    %v1989 = vunpack.c.h.b16 %v468
    %v1990 = vunpack.c.l.b16 %v469
    %v1991 = vunpack.c.h.b16 %v469
    %v1992 = vunpack.c.l.b16 %v470
    %v1993 = vunpack.c.h.b16 %v470
    %v1994 = vunpack.c.l.b16 %v471
    %v1995 = vunpack.c.h.b16 %v471
    %v1996 = vunpack.c.l.b16 %v472
    %v1997 = vunpack.c.h.b16 %v472
    %v1998 = vunpack.c.l.b16 %v473
    %v1999 = vunpack.c.h.b16 %v473
    %v2000 = vunpack.c.l.b16 %v474
    %v2001 = vunpack.c.h.b16 %v474
    %v2002 = vunpack.c.l.b16 %v475
    %v2003 = vunpack.c.h.b16 %v475
    %v2004 = vunpack.c.l.b16 %v476
    %v2005 = vunpack.c.h.b16 %v476
    %v2006 = vunpack.c.l.b16 %v477
    %v2007 = vunpack.c.h.b16 %v477
    %v2008 = vunpack.c.l.b16 %v478
    %v2009 = vunpack.c.h.b16 %v478
    %v2010 = vunpack.c.l.b16 %v479
    %v2011 = vunpack.c.h.b16 %v479
    %v2012 = vunpack.c.l.b16 %v480
    %v2013 = vunpack.c.h.b16 %v480
    %v2014 = vunpack.c.l.b16 %v481
    %v2015 = vunpack.c.h.b16 %v481
    %v2016 = vunpack.c.l.b16 %v482
    %v2017 = vunpack.c.h.b16 %v482
    %v2018 = vunpack.c.l.b16 %v483
    %v2019 = vunpack.c.h.b16 %v483
    %v2020 = vunpack.c.l.b16 %v484
    %v2021 = vunpack.c.h.b16 %v484
    %v2022 = vunpack.c.l.b16 %v485
    %v2023 = vunpack.c.h.b16 %v485
    %v2024 = vunpack.c.l.b16 %v486
    %v2025 = vunpack.c.h.b16 %v486
    %v2026 = vunpack.c.l.b16 %v487
    %v2027 = vunpack.c.h.b16 %v487
    %v2028 = vunpack.c.l.b16 %v488
    %v2029 = vunpack.c.h.b16 %v488
    %v2030 = vunpack.c.l.b16 %v489
    %v2031 = vunpack.c.h.b16 %v489
    %v2032 = vunpack.c.l.b16 %v490
    %v2033 = vunpack.c.h.b16 %v490
    %v2034 = vunpack.c.l.b16 %v491
    %v2035 = vunpack.c.h.b16 %v491
    %v2036 = vunpack.c.l.b16 %v492
    %v2037 = vunpack.c.h.b16 %v492
    %v2038 = vunpack.c.l.b16 %v493
    %v2039 = vunpack.c.h.b16 %v493
    %v2040 = vunpack.c.l.b16 %v494
    %v2041 = vunpack.c.h.b16 %v494
    %v2042 = vunpack.c.l.b16 %v495
    %v2043 = vunpack.c.h.b16 %v495
    %v2044 = vunpack.c.l.b16 %v496
    %v2045 = vunpack.c.h.b16 %v496
    %v2046 = vunpack.c.l.b16 %v497
    %v2047 = vunpack.c.h.b16 %v497
    %v2048 = vunpack.c.l.b16 %v498
    %v2049 = vunpack.c.h.b16 %v498
    %v2050 = vunpack.c.l.b16 %v499
    %v2051 = vunpack.c.h.b16 %v499
    %v2052 = vunpack.c.l.b16 %v500
    %v2053 = vunpack.c.h.b16 %v500
    %v2054 = vunpack.c.l.b16 %v501
    %v2055 = vunpack.c.h.b16 %v501
    %v2056 = vunpack.c.l.b16 %v502
    %v2057 = vunpack.c.h.b16 %v502
    %v2058 = vunpack.c.l.b16 %v503
    %v2059 = vunpack.c.h.b16 %v503
    %v2060 = vunpack.c.l.b16 %v504
    %v2061 = vunpack.c.h.b16 %v504
    %v2062 = vunpack.c.l.b16 %v505
    %v2063 = vunpack.c.h.b16 %v505
    %v2064 = vunpack.c.l.b16 %v506
    %v2065 = vunpack.c.h.b16 %v506
    %v2066 = vunpack.c.l.b16 %v507
    %v2067 = vunpack.c.h.b16 %v507
    %v2068 = vunpack.c.l.b16 %v508
    %v2069 = vunpack.c.h.b16 %v508
    %v2070 = vunpack.c.l.b16 %v509
    %v2071 = vunpack.c.h.b16 %v509
    %v2072 = vunpack.c.l.b16 %v510
    %v2073 = vunpack.c.h.b16 %v510
    %v2074 = vunpack.c.l.b16 %v511
    %v2075 = vunpack.c.h.b16 %v511
    %v2076 = vunpack.c.l.b16 %v512
    %v2077 = vunpack.c.h.b16 %v512
    %v2078 = vunpack.c.l.b16 %v513
    %v2079 = vunpack.c.h.b16 %v513
    %v2080 = vunpack.c.l.b16 %v514
    %v2081 = vunpack.c.h.b16 %v514
    %v2082 = vunpack.c.l.b16 %v515
    %v2083 = vunpack.c.h.b16 %v515
    %v2084 = vunpack.c.l.b16 %v516
    %v2085 = vunpack.c.h.b16 %v516
    %v2086 = vunpack.c.l.b16 %v517
    %v2087 = vunpack.c.h.b16 %v517
    %v2088 = vunpack.c.l.b16 %v518
    %v2089 = vunpack.c.h.b16 %v518
    %v2090 = vunpack.c.l.b16 %v519
    %v2091 = vunpack.c.h.b16 %v519
    %v2092 = vunpack.c.l.b16 %v520
    %v2093 = vunpack.c.h.b16 %v520
    %v2094 = vunpack.c.l.b16 %v521
    %v2095 = vunpack.c.h.b16 %v521
    %v2096 = vunpack.c.l.b16 %v522
    %v2097 = vunpack.c.h.b16 %v522
    %v2098 = vunpack.c.l.b16 %v523
    %v2099 = vunpack.c.h.b16 %v523
    %v2100 = vunpack.c.l.b16 %v524
    %v2101 = vunpack.c.h.b16 %v524
    %v2102 = vunpack.c.l.b16 %v525
    %v2103 = vunpack.c.h.b16 %v525
    %v2104 = vunpack.c.l.b16 %v526
    %v2105 = vunpack.c.h.b16 %v526
    %v2106 = vunpack.c.l.b16 %v527
    %v2107 = vunpack.c.h.b16 %v527
    %v2108 = vunpack.c.l.b16 %v528
    %v2109 = vunpack.c.h.b16 %v528
    %v2110 = vunpack.c.l.b16 %v529
    %v2111 = vunpack.c.h.b16 %v529
    %v2112 = vunpack.c.l.b16 %v530
    %v2113 = vunpack.c.h.b16 %v530
    %v2114 = vunpack.c.l.b16 %v531
    %v2115 = vunpack.c.h.b16 %v531
    %v2116 = vunpack.c.l.b16 %v532
    %v2117 = vunpack.c.h.b16 %v532
    %v2118 = vunpack.c.l.b16 %v533
    %v2119 = vunpack.c.h.b16 %v533
    %v2120 = vunpack.c.l.b16 %v534
    %v2121 = vunpack.c.h.b16 %v534
    %v2122 = vunpack.c.l.b16 %v535
    %v2123 = vunpack.c.h.b16 %v535
    %v2124 = vunpack.c.l.b16 %v536
    %v2125 = vunpack.c.h.b16 %v536
    %v2126 = vunpack.c.l.b16 %v537
    %v2127 = vunpack.c.h.b16 %v537
    %v2128 = vunpack.c.l.b16 %v538
    %v2129 = vunpack.c.h.b16 %v538
    %v2130 = vunpack.c.l.b16 %v539
    %v2131 = vunpack.c.h.b16 %v539
    %v2132 = vunpack.c.l.b16 %v540
    %v2133 = vunpack.c.h.b16 %v540
    %v2134 = vunpack.c.l.b16 %v541
    %v2135 = vunpack.c.h.b16 %v541
    %v2136 = vunpack.c.l.b16 %v542
    %v2137 = vunpack.c.h.b16 %v542
    %v2138 = vunpack.c.l.b16 %v543
    %v2139 = vunpack.c.h.b16 %v543
    %v2140 = vunpack.c.l.b16 %v544
    %v2141 = vunpack.c.h.b16 %v544
    %v2142 = vunpack.c.l.b16 %v545
    %v2143 = vunpack.c.h.b16 %v545
    %v2144 = vunpack.c.l.b16 %v546
    %v2145 = vunpack.c.h.b16 %v546
    %v2146 = vunpack.c.l.b16 %v547
    %v2147 = vunpack.c.h.b16 %v547
    %v2148 = vunpack.c.l.b16 %v548
    %v2149 = vunpack.c.h.b16 %v548
    %v2150 = vunpack.c.l.b16 %v549
    %v2151 = vunpack.c.h.b16 %v549
    %v2152 = vunpack.c.l.b16 %v550
    %v2153 = vunpack.c.h.b16 %v550
    %v2154 = vunpack.c.l.b16 %v551
    %v2155 = vunpack.c.h.b16 %v551
    %v2156 = vunpack.c.l.b16 %v552
    %v2157 = vunpack.c.h.b16 %v552
    %v2158 = vunpack.c.l.b16 %v553
    %v2159 = vunpack.c.h.b16 %v553
    %v2160 = vunpack.c.l.b16 %v554
    %v2161 = vunpack.c.h.b16 %v554
    %v2162 = vunpack.c.l.b16 %v555
    %v2163 = vunpack.c.h.b16 %v555
    %v2164 = vunpack.c.l.b16 %v556
    %v2165 = vunpack.c.h.b16 %v556
    %v2166 = vunpack.c.l.b16 %v557
    %v2167 = vunpack.c.h.b16 %v557
    %v2168 = vunpack.c.l.b16 %v558
    %v2169 = vunpack.c.h.b16 %v558
    %v2170 = vunpack.c.l.b16 %v559
    %v2171 = vunpack.c.h.b16 %v559
    %v2172 = vunpack.c.l.b16 %v560
    %v2173 = vunpack.c.h.b16 %v560
    %v2174 = vunpack.c.l.b16 %v561
    %v2175 = vunpack.c.h.b16 %v561
    %v2176 = vunpack.c.l.b16 %v562
    %v2177 = vunpack.c.h.b16 %v562
    %v2178 = vunpack.c.l.b16 %v563
    %v2179 = vunpack.c.h.b16 %v563
    %v2180 = vunpack.c.l.b16 %v564
    %v2181 = vunpack.c.h.b16 %v564
    %v2182 = vunpack.c.l.b16 %v565
    %v2183 = vunpack.c.h.b16 %v565
    %v2184 = vunpack.c.l.b16 %v566
    %v2185 = vunpack.c.h.b16 %v566
    %v2186 = vunpack.c.l.b16 %v567
    %v2187 = vunpack.c.h.b16 %v567
    %v2188 = vunpack.c.l.b16 %v568
    %v2189 = vunpack.c.h.b16 %v568
    %v2190 = vunpack.c.l.b16 %v569
    %v2191 = vunpack.c.h.b16 %v569
    %v2192 = vunpack.c.l.b16 %v570
    %v2193 = vunpack.c.h.b16 %v570
    %v2194 = vunpack.c.l.b16 %v571
    %v2195 = vunpack.c.h.b16 %v571
    %v2196 = vunpack.c.l.b16 %v572
    %v2197 = vunpack.c.h.b16 %v572
    %v2198 = vunpack.c.l.b16 %v573
    %v2199 = vunpack.c.h.b16 %v573
    %v2200 = vunpack.c.l.b16 %v574
    %v2201 = vunpack.c.h.b16 %v574
    %v2202 = vunpack.c.l.b16 %v575
    %v2203 = vunpack.c.h.b16 %v575
    %v2204 = vunpack.c.l.b16 %v576
    %v2205 = vunpack.c.h.b16 %v576
    %v2206 = vunpack.c.l.b16 %v577
    %v2207 = vunpack.c.h.b16 %v577
    %v2208 = vunpack.c.l.b16 %v578
    %v2209 = vunpack.c.h.b16 %v578
    %v2210 = vunpack.c.l.b16 %v579
    %v2211 = vunpack.c.h.b16 %v579
    %v2212 = vunpack.c.l.b16 %v580
    %v2213 = vunpack.c.h.b16 %v580
    %v2214 = vunpack.c.l.b16 %v581
    %v2215 = vunpack.c.h.b16 %v581
    %v2216 = vunpack.c.l.b16 %v582
    %v2217 = vunpack.c.h.b16 %v582
    %v2218 = vunpack.c.l.b16 %v583
    %v2219 = vunpack.c.h.b16 %v583
    %v2220 = vunpack.c.l.b16 %v584
    %v2221 = vunpack.c.h.b16 %v584
    %v2222 = vunpack.c.l.b16 %v585
    %v2223 = vunpack.c.h.b16 %v585
    %v2224 = vunpack.c.l.b16 %v586
    %v2225 = vunpack.c.h.b16 %v586
    %v2226 = vunpack.c.l.b16 %v587
    %v2227 = vunpack.c.h.b16 %v587
    %v2228 = vpack.c.b16 %v1220, %v1204
    %v2229 = vpack.c.b16 %v1221, %v1205
    %v2230 = vpack.c.b16 %v1222, %v1206
    %v2231 = vpack.c.b16 %v1223, %v1207
    %v2232 = vpack.c.b16 %v1224, %v1208
    %v2233 = vpack.c.b16 %v1225, %v1209
    %v2234 = vpack.c.b16 %v1226, %v1210
    %v2235 = vpack.c.b16 %v1227, %v1211
    %v2236 = vpack.c.b16 %v1228, %v1212
    %v2237 = vpack.c.b16 %v1229, %v1213
    %v2238 = vpack.c.b16 %v1230, %v1214
    %v2239 = vpack.c.b16 %v1231, %v1215
    %v2240 = vpack.c.b16 %v1232, %v1216
    %v2241 = vpack.c.b16 %v1233, %v1217
    %v2242 = vpack.c.b16 %v1234, %v1218
    %v2243 = vpack.c.b16 %v1235, %v1219
    %v2244 = vpack.c.b16 %v1252, %v1236
    %v2245 = vpack.c.b16 %v1253, %v1237
    %v2246 = vpack.c.b16 %v1254, %v1238
    %v2247 = vpack.c.b16 %v1255, %v1239
    %v2248 = vpack.c.b16 %v1256, %v1240
    %v2249 = vpack.c.b16 %v1257, %v1241
    %v2250 = vpack.c.b16 %v1258, %v1242
    %v2251 = vpack.c.b16 %v1259, %v1243
    %v2252 = vpack.c.b16 %v1260, %v1244
    %v2253 = vpack.c.b16 %v1261, %v1245
    %v2254 = vpack.c.b16 %v1262, %v1246
    %v2255 = vpack.c.b16 %v1263, %v1247
    %v2256 = vpack.c.b16 %v1264, %v1248
    %v2257 = vpack.c.b16 %v1265, %v1249
    %v2258 = vpack.c.b16 %v1266, %v1250
    %v2259 = vpack.c.b16 %v1267, %v1251
    %v2260 = vpack.c.b16 %v1284, %v1268
    %v2261 = vpack.c.b16 %v1285, %v1269
    %v2262 = vpack.c.b16 %v1286, %v1270
    %v2263 = vpack.c.b16 %v1287, %v1271
    %v2264 = vpack.c.b16 %v1288, %v1272
    %v2265 = vpack.c.b16 %v1289, %v1273
    %v2266 = vpack.c.b16 %v1290, %v1274
    %v2267 = vpack.c.b16 %v1291, %v1275
    %v2268 = vpack.c.b16 %v1292, %v1276
    %v2269 = vpack.c.b16 %v1293, %v1277
    %v2270 = vpack.c.b16 %v1294, %v1278
    %v2271 = vpack.c.b16 %v1295, %v1279
    %v2272 = vpack.c.b16 %v1296, %v1280
    %v2273 = vpack.c.b16 %v1297, %v1281
    %v2274 = vpack.c.b16 %v1298, %v1282
    %v2275 = vpack.c.b16 %v1299, %v1283
    %v2276 = vpack.c.b16 %v1316, %v1300
    %v2277 = vpack.c.b16 %v1317, %v1301
    %v2278 = vpack.c.b16 %v1318, %v1302
    %v2279 = vpack.c.b16 %v1319, %v1303
    %v2280 = vpack.c.b16 %v1320, %v1304
    %v2281 = vpack.c.b16 %v1321, %v1305
    %v2282 = vpack.c.b16 %v1322, %v1306
    %v2283 = vpack.c.b16 %v1323, %v1307
    %v2284 = vpack.c.b16 %v1324, %v1308
    %v2285 = vpack.c.b16 %v1325, %v1309
    %v2286 = vpack.c.b16 %v1326, %v1310
    %v2287 = vpack.c.b16 %v1327, %v1311
    %v2288 = vpack.c.b16 %v1328, %v1312
    %v2289 = vpack.c.b16 %v1329, %v1313
    %v2290 = vpack.c.b16 %v1330, %v1314
    %v2291 = vpack.c.b16 %v1331, %v1315
    %v2292 = vpack.c.b16 %v1348, %v1332
    %v2293 = vpack.c.b16 %v1349, %v1333
    %v2294 = vpack.c.b16 %v1350, %v1334
    %v2295 = vpack.c.b16 %v1351, %v1335
    %v2296 = vpack.c.b16 %v1352, %v1336
    %v2297 = vpack.c.b16 %v1353, %v1337
    %v2298 = vpack.c.b16 %v1354, %v1338
    %v2299 = vpack.c.b16 %v1355, %v1339
    %v2300 = vpack.c.b16 %v1356, %v1340
    %v2301 = vpack.c.b16 %v1357, %v1341
    %v2302 = vpack.c.b16 %v1358, %v1342
    %v2303 = vpack.c.b16 %v1359, %v1343
    %v2304 = vpack.c.b16 %v1360, %v1344
    %v2305 = vpack.c.b16 %v1361, %v1345
    %v2306 = vpack.c.b16 %v1362, %v1346
    %v2307 = vpack.c.b16 %v1363, %v1347
    %v2308 = vpack.c.b16 %v1380, %v1364
    %v2309 = vpack.c.b16 %v1381, %v1365
    %v2310 = vpack.c.b16 %v1382, %v1366
    %v2311 = vpack.c.b16 %v1383, %v1367
    %v2312 = vpack.c.b16 %v1384, %v1368
    %v2313 = vpack.c.b16 %v1385, %v1369
    %v2314 = vpack.c.b16 %v1386, %v1370
    %v2315 = vpack.c.b16 %v1387, %v1371
    %v2316 = vpack.c.b16 %v1388, %v1372
    %v2317 = vpack.c.b16 %v1389, %v1373
    %v2318 = vpack.c.b16 %v1390, %v1374
    %v2319 = vpack.c.b16 %v1391, %v1375
    %v2320 = vpack.c.b16 %v1392, %v1376
    %v2321 = vpack.c.b16 %v1393, %v1377
    %v2322 = vpack.c.b16 %v1394, %v1378
    %v2323 = vpack.c.b16 %v1395, %v1379
    %v2324 = vpack.c.b16 %v1412, %v1396
    %v2325 = vpack.c.b16 %v1413, %v1397
    %v2326 = vpack.c.b16 %v1414, %v1398
    %v2327 = vpack.c.b16 %v1415, %v1399
    %v2328 = vpack.c.b16 %v1416, %v1400
    %v2329 = vpack.c.b16 %v1417, %v1401
    %v2330 = vpack.c.b16 %v1418, %v1402
    %v2331 = vpack.c.b16 %v1419, %v1403
    %v2332 = vpack.c.b16 %v1420, %v1404
    %v2333 = vpack.c.b16 %v1421, %v1405
    %v2334 = vpack.c.b16 %v1422, %v1406
    %v2335 = vpack.c.b16 %v1423, %v1407
    %v2336 = vpack.c.b16 %v1424, %v1408
    %v2337 = vpack.c.b16 %v1425, %v1409
    %v2338 = vpack.c.b16 %v1426, %v1410
    %v2339 = vpack.c.b16 %v1427, %v1411
    %v2340 = vpack.c.b16 %v1444, %v1428
    %v2341 = vpack.c.b16 %v1445, %v1429
    %v2342 = vpack.c.b16 %v1446, %v1430
    %v2343 = vpack.c.b16 %v1447, %v1431
    %v2344 = vpack.c.b16 %v1448, %v1432
    %v2345 = vpack.c.b16 %v1449, %v1433
    %v2346 = vpack.c.b16 %v1450, %v1434
    %v2347 = vpack.c.b16 %v1451, %v1435
    %v2348 = vpack.c.b16 %v1452, %v1436
    %v2349 = vpack.c.b16 %v1453, %v1437
    %v2350 = vpack.c.b16 %v1454, %v1438
    %v2351 = vpack.c.b16 %v1455, %v1439
    %v2352 = vpack.c.b16 %v1456, %v1440
    %v2353 = vpack.c.b16 %v1457, %v1441
    %v2354 = vpack.c.b16 %v1458, %v1442
    %v2355 = vpack.c.b16 %v1459, %v1443
    %v2356 = vpack.c.b16 %v1476, %v1460
    %v2357 = vpack.c.b16 %v1477, %v1461
    %v2358 = vpack.c.b16 %v1478, %v1462
    %v2359 = vpack.c.b16 %v1479, %v1463
    %v2360 = vpack.c.b16 %v1480, %v1464
    %v2361 = vpack.c.b16 %v1481, %v1465
    %v2362 = vpack.c.b16 %v1482, %v1466
    %v2363 = vpack.c.b16 %v1483, %v1467
    %v2364 = vpack.c.b16 %v1484, %v1468
    %v2365 = vpack.c.b16 %v1485, %v1469
    %v2366 = vpack.c.b16 %v1486, %v1470
    %v2367 = vpack.c.b16 %v1487, %v1471
    %v2368 = vpack.c.b16 %v1488, %v1472
    %v2369 = vpack.c.b16 %v1489, %v1473
    %v2370 = vpack.c.b16 %v1490, %v1474
    %v2371 = vpack.c.b16 %v1491, %v1475
    %v2372 = vpack.c.b16 %v1508, %v1492
    %v2373 = vpack.c.b16 %v1509, %v1493
    %v2374 = vpack.c.b16 %v1510, %v1494
    %v2375 = vpack.c.b16 %v1511, %v1495
    %v2376 = vpack.c.b16 %v1512, %v1496
    %v2377 = vpack.c.b16 %v1513, %v1497
    %v2378 = vpack.c.b16 %v1514, %v1498
    %v2379 = vpack.c.b16 %v1515, %v1499
    %v2380 = vpack.c.b16 %v1516, %v1500
    %v2381 = vpack.c.b16 %v1517, %v1501
    %v2382 = vpack.c.b16 %v1518, %v1502
    %v2383 = vpack.c.b16 %v1519, %v1503
    %v2384 = vpack.c.b16 %v1520, %v1504
    %v2385 = vpack.c.b16 %v1521, %v1505
    %v2386 = vpack.c.b16 %v1522, %v1506
    %v2387 = vpack.c.b16 %v1523, %v1507
    %v2388 = vpack.c.b16 %v1540, %v1524
    %v2389 = vpack.c.b16 %v1541, %v1525
    %v2390 = vpack.c.b16 %v1542, %v1526
    %v2391 = vpack.c.b16 %v1543, %v1527
    %v2392 = vpack.c.b16 %v1544, %v1528
    %v2393 = vpack.c.b16 %v1545, %v1529
    %v2394 = vpack.c.b16 %v1546, %v1530
    %v2395 = vpack.c.b16 %v1547, %v1531
    %v2396 = vpack.c.b16 %v1548, %v1532
    %v2397 = vpack.c.b16 %v1549, %v1533
    %v2398 = vpack.c.b16 %v1550, %v1534
    %v2399 = vpack.c.b16 %v1551, %v1535
    %v2400 = vpack.c.b16 %v1552, %v1536
    %v2401 = vpack.c.b16 %v1553, %v1537
    %v2402 = vpack.c.b16 %v1554, %v1538
    %v2403 = vpack.c.b16 %v1555, %v1539
    %v2404 = vpack.c.b16 %v1572, %v1556
    %v2405 = vpack.c.b16 %v1573, %v1557
    %v2406 = vpack.c.b16 %v1574, %v1558
    %v2407 = vpack.c.b16 %v1575, %v1559
    %v2408 = vpack.c.b16 %v1576, %v1560
    %v2409 = vpack.c.b16 %v1577, %v1561
    %v2410 = vpack.c.b16 %v1578, %v1562
    %v2411 = vpack.c.b16 %v1579, %v1563
    %v2412 = vpack.c.b16 %v1580, %v1564
    %v2413 = vpack.c.b16 %v1581, %v1565
    %v2414 = vpack.c.b16 %v1582, %v1566
    %v2415 = vpack.c.b16 %v1583, %v1567
    %v2416 = vpack.c.b16 %v1584, %v1568
    %v2417 = vpack.c.b16 %v1585, %v1569
    %v2418 = vpack.c.b16 %v1586, %v1570
    %v2419 = vpack.c.b16 %v1587, %v1571
    %v2420 = vpack.c.b16 %v1604, %v1588
    %v2421 = vpack.c.b16 %v1605, %v1589
    %v2422 = vpack.c.b16 %v1606, %v1590
    %v2423 = vpack.c.b16 %v1607, %v1591
    %v2424 = vpack.c.b16 %v1608, %v1592
    %v2425 = vpack.c.b16 %v1609, %v1593
    %v2426 = vpack.c.b16 %v1610, %v1594
    %v2427 = vpack.c.b16 %v1611, %v1595
    %v2428 = vpack.c.b16 %v1612, %v1596
    %v2429 = vpack.c.b16 %v1613, %v1597
    %v2430 = vpack.c.b16 %v1614, %v1598
    %v2431 = vpack.c.b16 %v1615, %v1599
    %v2432 = vpack.c.b16 %v1616, %v1600
    %v2433 = vpack.c.b16 %v1617, %v1601
    %v2434 = vpack.c.b16 %v1618, %v1602
    %v2435 = vpack.c.b16 %v1619, %v1603
    %v2436 = vpack.c.b16 %v1636, %v1620
    %v2437 = vpack.c.b16 %v1637, %v1621
    %v2438 = vpack.c.b16 %v1638, %v1622
    %v2439 = vpack.c.b16 %v1639, %v1623
    %v2440 = vpack.c.b16 %v1640, %v1624
    %v2441 = vpack.c.b16 %v1641, %v1625
    %v2442 = vpack.c.b16 %v1642, %v1626
    %v2443 = vpack.c.b16 %v1643, %v1627
    %v2444 = vpack.c.b16 %v1644, %v1628
    %v2445 = vpack.c.b16 %v1645, %v1629
    %v2446 = vpack.c.b16 %v1646, %v1630
    %v2447 = vpack.c.b16 %v1647, %v1631
    %v2448 = vpack.c.b16 %v1648, %v1632
    %v2449 = vpack.c.b16 %v1649, %v1633
    %v2450 = vpack.c.b16 %v1650, %v1634
    %v2451 = vpack.c.b16 %v1651, %v1635
    %v2452 = vpack.c.b16 %v1668, %v1652
    %v2453 = vpack.c.b16 %v1669, %v1653
    %v2454 = vpack.c.b16 %v1670, %v1654
    %v2455 = vpack.c.b16 %v1671, %v1655
    %v2456 = vpack.c.b16 %v1672, %v1656
    %v2457 = vpack.c.b16 %v1673, %v1657
    %v2458 = vpack.c.b16 %v1674, %v1658
    %v2459 = vpack.c.b16 %v1675, %v1659
    %v2460 = vpack.c.b16 %v1676, %v1660
    %v2461 = vpack.c.b16 %v1677, %v1661
    %v2462 = vpack.c.b16 %v1678, %v1662
    %v2463 = vpack.c.b16 %v1679, %v1663
    %v2464 = vpack.c.b16 %v1680, %v1664
    %v2465 = vpack.c.b16 %v1681, %v1665
    %v2466 = vpack.c.b16 %v1682, %v1666
    %v2467 = vpack.c.b16 %v1683, %v1667
    %v2468 = vpack.c.b16 %v1700, %v1684
    %v2469 = vpack.c.b16 %v1701, %v1685
    %v2470 = vpack.c.b16 %v1702, %v1686
    %v2471 = vpack.c.b16 %v1703, %v1687
    %v2472 = vpack.c.b16 %v1704, %v1688
    %v2473 = vpack.c.b16 %v1705, %v1689
    %v2474 = vpack.c.b16 %v1706, %v1690
    %v2475 = vpack.c.b16 %v1707, %v1691
    %v2476 = vpack.c.b16 %v1708, %v1692
    %v2477 = vpack.c.b16 %v1709, %v1693
    %v2478 = vpack.c.b16 %v1710, %v1694
    %v2479 = vpack.c.b16 %v1711, %v1695
    %v2480 = vpack.c.b16 %v1712, %v1696
    %v2481 = vpack.c.b16 %v1713, %v1697
    %v2482 = vpack.c.b16 %v1714, %v1698
    %v2483 = vpack.c.b16 %v1715, %v1699
    %v2484 = vpack.c.b16 %v1732, %v1716
    %v2485 = vpack.c.b16 %v1733, %v1717
    %v2486 = vpack.c.b16 %v1734, %v1718
    %v2487 = vpack.c.b16 %v1735, %v1719
    %v2488 = vpack.c.b16 %v1736, %v1720
    %v2489 = vpack.c.b16 %v1737, %v1721
    %v2490 = vpack.c.b16 %v1738, %v1722
    %v2491 = vpack.c.b16 %v1739, %v1723
    %v2492 = vpack.c.b16 %v1740, %v1724
    %v2493 = vpack.c.b16 %v1741, %v1725
    %v2494 = vpack.c.b16 %v1742, %v1726
    %v2495 = vpack.c.b16 %v1743, %v1727
    %v2496 = vpack.c.b16 %v1744, %v1728
    %v2497 = vpack.c.b16 %v1745, %v1729
    %v2498 = vpack.c.b16 %v1746, %v1730
    %v2499 = vpack.c.b16 %v1747, %v1731
    %v2500 = vpack.c.b16 %v1764, %v1748
    %v2501 = vpack.c.b16 %v1765, %v1749
    %v2502 = vpack.c.b16 %v1766, %v1750
    %v2503 = vpack.c.b16 %v1767, %v1751
    %v2504 = vpack.c.b16 %v1768, %v1752
    %v2505 = vpack.c.b16 %v1769, %v1753
    %v2506 = vpack.c.b16 %v1770, %v1754
    %v2507 = vpack.c.b16 %v1771, %v1755
    %v2508 = vpack.c.b16 %v1772, %v1756
    %v2509 = vpack.c.b16 %v1773, %v1757
    %v2510 = vpack.c.b16 %v1774, %v1758
    %v2511 = vpack.c.b16 %v1775, %v1759
    %v2512 = vpack.c.b16 %v1776, %v1760
    %v2513 = vpack.c.b16 %v1777, %v1761
    %v2514 = vpack.c.b16 %v1778, %v1762
    %v2515 = vpack.c.b16 %v1779, %v1763
    %v2516 = vpack.c.b16 %v1796, %v1780
    %v2517 = vpack.c.b16 %v1797, %v1781
    %v2518 = vpack.c.b16 %v1798, %v1782
    %v2519 = vpack.c.b16 %v1799, %v1783
    %v2520 = vpack.c.b16 %v1800, %v1784
    %v2521 = vpack.c.b16 %v1801, %v1785
    %v2522 = vpack.c.b16 %v1802, %v1786
    %v2523 = vpack.c.b16 %v1803, %v1787
    %v2524 = vpack.c.b16 %v1804, %v1788
    %v2525 = vpack.c.b16 %v1805, %v1789
    %v2526 = vpack.c.b16 %v1806, %v1790
    %v2527 = vpack.c.b16 %v1807, %v1791
    %v2528 = vpack.c.b16 %v1808, %v1792
    %v2529 = vpack.c.b16 %v1809, %v1793
    %v2530 = vpack.c.b16 %v1810, %v1794
    %v2531 = vpack.c.b16 %v1811, %v1795
    %v2532 = vpack.c.b16 %v1828, %v1812
    %v2533 = vpack.c.b16 %v1829, %v1813
    %v2534 = vpack.c.b16 %v1830, %v1814
    %v2535 = vpack.c.b16 %v1831, %v1815
    %v2536 = vpack.c.b16 %v1832, %v1816
    %v2537 = vpack.c.b16 %v1833, %v1817
    %v2538 = vpack.c.b16 %v1834, %v1818
    %v2539 = vpack.c.b16 %v1835, %v1819
    %v2540 = vpack.c.b16 %v1836, %v1820
    %v2541 = vpack.c.b16 %v1837, %v1821
    %v2542 = vpack.c.b16 %v1838, %v1822
    %v2543 = vpack.c.b16 %v1839, %v1823
    %v2544 = vpack.c.b16 %v1840, %v1824
    %v2545 = vpack.c.b16 %v1841, %v1825
    %v2546 = vpack.c.b16 %v1842, %v1826
    %v2547 = vpack.c.b16 %v1843, %v1827
    %v2548 = vpack.c.b16 %v1860, %v1844
    %v2549 = vpack.c.b16 %v1861, %v1845
    %v2550 = vpack.c.b16 %v1862, %v1846
    %v2551 = vpack.c.b16 %v1863, %v1847
    %v2552 = vpack.c.b16 %v1864, %v1848
    %v2553 = vpack.c.b16 %v1865, %v1849
    %v2554 = vpack.c.b16 %v1866, %v1850
    %v2555 = vpack.c.b16 %v1867, %v1851
    %v2556 = vpack.c.b16 %v1868, %v1852
    %v2557 = vpack.c.b16 %v1869, %v1853
    %v2558 = vpack.c.b16 %v1870, %v1854
    %v2559 = vpack.c.b16 %v1871, %v1855
    %v2560 = vpack.c.b16 %v1872, %v1856
    %v2561 = vpack.c.b16 %v1873, %v1857
    %v2562 = vpack.c.b16 %v1874, %v1858
    %v2563 = vpack.c.b16 %v1875, %v1859
    %v2564 = vpack.c.b16 %v1892, %v1876
    %v2565 = vpack.c.b16 %v1893, %v1877
    %v2566 = vpack.c.b16 %v1894, %v1878
    %v2567 = vpack.c.b16 %v1895, %v1879
    %v2568 = vpack.c.b16 %v1896, %v1880
    %v2569 = vpack.c.b16 %v1897, %v1881
    %v2570 = vpack.c.b16 %v1898, %v1882
    %v2571 = vpack.c.b16 %v1899, %v1883
    %v2572 = vpack.c.b16 %v1900, %v1884
    %v2573 = vpack.c.b16 %v1901, %v1885
    %v2574 = vpack.c.b16 %v1902, %v1886
    %v2575 = vpack.c.b16 %v1903, %v1887
    %v2576 = vpack.c.b16 %v1904, %v1888
    %v2577 = vpack.c.b16 %v1905, %v1889
    %v2578 = vpack.c.b16 %v1906, %v1890
    %v2579 = vpack.c.b16 %v1907, %v1891
    %v2580 = vpack.c.b16 %v1924, %v1908
    %v2581 = vpack.c.b16 %v1925, %v1909
    %v2582 = vpack.c.b16 %v1926, %v1910
    %v2583 = vpack.c.b16 %v1927, %v1911
    %v2584 = vpack.c.b16 %v1928, %v1912
    %v2585 = vpack.c.b16 %v1929, %v1913
    %v2586 = vpack.c.b16 %v1930, %v1914
    %v2587 = vpack.c.b16 %v1931, %v1915
    %v2588 = vpack.c.b16 %v1932, %v1916
    %v2589 = vpack.c.b16 %v1933, %v1917
    %v2590 = vpack.c.b16 %v1934, %v1918
    %v2591 = vpack.c.b16 %v1935, %v1919
    %v2592 = vpack.c.b16 %v1936, %v1920
    %v2593 = vpack.c.b16 %v1937, %v1921
    %v2594 = vpack.c.b16 %v1938, %v1922
    %v2595 = vpack.c.b16 %v1939, %v1923
    %v2596 = vpack.c.b16 %v1956, %v1940
    %v2597 = vpack.c.b16 %v1957, %v1941
    %v2598 = vpack.c.b16 %v1958, %v1942
    %v2599 = vpack.c.b16 %v1959, %v1943
    %v2600 = vpack.c.b16 %v1960, %v1944
    %v2601 = vpack.c.b16 %v1961, %v1945
    %v2602 = vpack.c.b16 %v1962, %v1946
    %v2603 = vpack.c.b16 %v1963, %v1947
    %v2604 = vpack.c.b16 %v1964, %v1948
    %v2605 = vpack.c.b16 %v1965, %v1949
    %v2606 = vpack.c.b16 %v1966, %v1950
    %v2607 = vpack.c.b16 %v1967, %v1951
    %v2608 = vpack.c.b16 %v1968, %v1952
    %v2609 = vpack.c.b16 %v1969, %v1953
    %v2610 = vpack.c.b16 %v1970, %v1954
    %v2611 = vpack.c.b16 %v1971, %v1955
    %v2612 = vpack.c.b16 %v1988, %v1972
    %v2613 = vpack.c.b16 %v1989, %v1973
    %v2614 = vpack.c.b16 %v1990, %v1974
    %v2615 = vpack.c.b16 %v1991, %v1975
    %v2616 = vpack.c.b16 %v1992, %v1976
    %v2617 = vpack.c.b16 %v1993, %v1977
    %v2618 = vpack.c.b16 %v1994, %v1978
    %v2619 = vpack.c.b16 %v1995, %v1979
    %v2620 = vpack.c.b16 %v1996, %v1980
    %v2621 = vpack.c.b16 %v1997, %v1981
    %v2622 = vpack.c.b16 %v1998, %v1982
    %v2623 = vpack.c.b16 %v1999, %v1983
    %v2624 = vpack.c.b16 %v2000, %v1984
    %v2625 = vpack.c.b16 %v2001, %v1985
    %v2626 = vpack.c.b16 %v2002, %v1986
    %v2627 = vpack.c.b16 %v2003, %v1987
    %v2628 = vpack.c.b16 %v2020, %v2004
    %v2629 = vpack.c.b16 %v2021, %v2005
    %v2630 = vpack.c.b16 %v2022, %v2006
    %v2631 = vpack.c.b16 %v2023, %v2007
    %v2632 = vpack.c.b16 %v2024, %v2008
    %v2633 = vpack.c.b16 %v2025, %v2009
    %v2634 = vpack.c.b16 %v2026, %v2010
    %v2635 = vpack.c.b16 %v2027, %v2011
    %v2636 = vpack.c.b16 %v2028, %v2012
    %v2637 = vpack.c.b16 %v2029, %v2013
    %v2638 = vpack.c.b16 %v2030, %v2014
    %v2639 = vpack.c.b16 %v2031, %v2015
    %v2640 = vpack.c.b16 %v2032, %v2016
    %v2641 = vpack.c.b16 %v2033, %v2017
    %v2642 = vpack.c.b16 %v2034, %v2018
    %v2643 = vpack.c.b16 %v2035, %v2019
    %v2644 = vpack.c.b16 %v2052, %v2036
    %v2645 = vpack.c.b16 %v2053, %v2037
    %v2646 = vpack.c.b16 %v2054, %v2038
    %v2647 = vpack.c.b16 %v2055, %v2039
    %v2648 = vpack.c.b16 %v2056, %v2040
    %v2649 = vpack.c.b16 %v2057, %v2041
    %v2650 = vpack.c.b16 %v2058, %v2042
    %v2651 = vpack.c.b16 %v2059, %v2043
    %v2652 = vpack.c.b16 %v2060, %v2044
    %v2653 = vpack.c.b16 %v2061, %v2045
    %v2654 = vpack.c.b16 %v2062, %v2046
    %v2655 = vpack.c.b16 %v2063, %v2047
    %v2656 = vpack.c.b16 %v2064, %v2048
    %v2657 = vpack.c.b16 %v2065, %v2049
    %v2658 = vpack.c.b16 %v2066, %v2050
    %v2659 = vpack.c.b16 %v2067, %v2051
    %v2660 = vpack.c.b16 %v2084, %v2068
    %v2661 = vpack.c.b16 %v2085, %v2069
    %v2662 = vpack.c.b16 %v2086, %v2070
    %v2663 = vpack.c.b16 %v2087, %v2071
    %v2664 = vpack.c.b16 %v2088, %v2072
    %v2665 = vpack.c.b16 %v2089, %v2073
    %v2666 = vpack.c.b16 %v2090, %v2074
    %v2667 = vpack.c.b16 %v2091, %v2075
    %v2668 = vpack.c.b16 %v2092, %v2076
    %v2669 = vpack.c.b16 %v2093, %v2077
    %v2670 = vpack.c.b16 %v2094, %v2078
    %v2671 = vpack.c.b16 %v2095, %v2079
    %v2672 = vpack.c.b16 %v2096, %v2080
    %v2673 = vpack.c.b16 %v2097, %v2081
    %v2674 = vpack.c.b16 %v2098, %v2082
    %v2675 = vpack.c.b16 %v2099, %v2083
    %v2676 = vpack.c.b16 %v2116, %v2100
    %v2677 = vpack.c.b16 %v2117, %v2101
    %v2678 = vpack.c.b16 %v2118, %v2102
    %v2679 = vpack.c.b16 %v2119, %v2103
    %v2680 = vpack.c.b16 %v2120, %v2104
    %v2681 = vpack.c.b16 %v2121, %v2105
    %v2682 = vpack.c.b16 %v2122, %v2106
    %v2683 = vpack.c.b16 %v2123, %v2107
    %v2684 = vpack.c.b16 %v2124, %v2108
    %v2685 = vpack.c.b16 %v2125, %v2109
    %v2686 = vpack.c.b16 %v2126, %v2110
    %v2687 = vpack.c.b16 %v2127, %v2111
    %v2688 = vpack.c.b16 %v2128, %v2112
    %v2689 = vpack.c.b16 %v2129, %v2113
    %v2690 = vpack.c.b16 %v2130, %v2114
    %v2691 = vpack.c.b16 %v2131, %v2115
    %v2692 = vpack.c.b16 %v2148, %v2132
    %v2693 = vpack.c.b16 %v2149, %v2133
    %v2694 = vpack.c.b16 %v2150, %v2134
    %v2695 = vpack.c.b16 %v2151, %v2135
    %v2696 = vpack.c.b16 %v2152, %v2136
    %v2697 = vpack.c.b16 %v2153, %v2137
    %v2698 = vpack.c.b16 %v2154, %v2138
    %v2699 = vpack.c.b16 %v2155, %v2139
    %v2700 = vpack.c.b16 %v2156, %v2140
    %v2701 = vpack.c.b16 %v2157, %v2141
    %v2702 = vpack.c.b16 %v2158, %v2142
    %v2703 = vpack.c.b16 %v2159, %v2143
    %v2704 = vpack.c.b16 %v2160, %v2144
    %v2705 = vpack.c.b16 %v2161, %v2145
    %v2706 = vpack.c.b16 %v2162, %v2146
    %v2707 = vpack.c.b16 %v2163, %v2147
    %v2708 = vpack.c.b16 %v2180, %v2164
    %v2709 = vpack.c.b16 %v2181, %v2165
    %v2710 = vpack.c.b16 %v2182, %v2166
    %v2711 = vpack.c.b16 %v2183, %v2167
    %v2712 = vpack.c.b16 %v2184, %v2168
    %v2713 = vpack.c.b16 %v2185, %v2169
    %v2714 = vpack.c.b16 %v2186, %v2170
    %v2715 = vpack.c.b16 %v2187, %v2171
    %v2716 = vpack.c.b16 %v2188, %v2172
    %v2717 = vpack.c.b16 %v2189, %v2173
    %v2718 = vpack.c.b16 %v2190, %v2174
    %v2719 = vpack.c.b16 %v2191, %v2175
    %v2720 = vpack.c.b16 %v2192, %v2176
    %v2721 = vpack.c.b16 %v2193, %v2177
    %v2722 = vpack.c.b16 %v2194, %v2178
    %v2723 = vpack.c.b16 %v2195, %v2179
    %v2724 = vpack.c.b16 %v2212, %v2196
    %v2725 = vpack.c.b16 %v2213, %v2197
    %v2726 = vpack.c.b16 %v2214, %v2198
    %v2727 = vpack.c.b16 %v2215, %v2199
    %v2728 = vpack.c.b16 %v2216, %v2200
    %v2729 = vpack.c.b16 %v2217, %v2201
    %v2730 = vpack.c.b16 %v2218, %v2202
    %v2731 = vpack.c.b16 %v2219, %v2203
    %v2732 = vpack.c.b16 %v2220, %v2204
    %v2733 = vpack.c.b16 %v2221, %v2205
    %v2734 = vpack.c.b16 %v2222, %v2206
    %v2735 = vpack.c.b16 %v2223, %v2207
    %v2736 = vpack.c.b16 %v2224, %v2208
    %v2737 = vpack.c.b16 %v2225, %v2209
    %v2738 = vpack.c.b16 %v2226, %v2210
    %v2739 = vpack.c.b16 %v2227, %v2211
    %3252 = vmatprep.subr.bf16.mxu0 %v2341
    %3253 = vmatpush1.bf16.msra.mxu0 %v2340
    %3254 = vmatprep.subr.bf16.mxu0 %v2325
    %3255 = vmatpush1.bf16.msra.mxu0 %v2324
    %3256 = vmatprep.subr.bf16.mxu0 %v2309
    %3257 = vmatpush1.bf16.msra.mxu0 %v2308
    %3258 = vmatprep.subr.bf16.mxu0 %v2293
    %3259 = vmatpush1.bf16.msra.mxu0 %v2292
    %3260 = vmatprep.subr.bf16.mxu0 %v2277
    %3261 = vmatpush1.bf16.msra.mxu0 %v2276
    %3262 = vmatprep.subr.bf16.mxu0 %v2261
    %3263 = vmatpush1.bf16.msra.mxu0 %v2260
    %3264 = vmatprep.subr.bf16.mxu0 %v2245
    %3265 = vmatpush1.bf16.msra.mxu0 %v2244
    %3266 = vmatprep.subr.bf16.mxu0 %v2229
    %3267 = vmatpush1.bf16.msra.mxu0 %v2228
    %3268 = vmatprep.subr.bf16.mxu0 %v2469
    %3269 = vmatpush2.bf16.msra.mxu0 %v2468
    %3270 = vmatprep.subr.bf16.mxu0 %v2453
    %3271 = vmatpush2.bf16.msra.mxu0 %v2452
    %3272 = vmatprep.subr.bf16.mxu0 %v2437
    %3273 = vmatpush2.bf16.msra.mxu0 %v2436
    %3274 = vmatprep.subr.bf16.mxu0 %v2421
    %3275 = vmatpush2.bf16.msra.mxu0 %v2420
    %3276 = vmatprep.subr.bf16.mxu0 %v2405
    %3277 = vmatpush2.bf16.msra.mxu0 %v2404
    %3278 = vmatprep.subr.bf16.mxu0 %v2389
    %3279 = vmatpush2.bf16.msra.mxu0 %v2388
    %3280 = vmatprep.subr.bf16.mxu0 %v2373
    %3281 = vmatpush2.bf16.msra.mxu0 %v2372
    %3282 = vmatprep.subr.bf16.mxu0 %v2357
    %3283 = vmatpush2.bf16.msra.mxu0 %v2356
    %3284 = vmatprep.mubr.bf16.mxu0 %v685
    %3285 = vmatmul.mubr.bf16.gmra.mxu0 %v684
    %v3286 = vpop.f32.mrf.mxu0
    %v3287 = vadd.f32 %v595, %v3286
    %v3288 = vpop.f32.mrf.mxu0
    %v3289 = vadd.f32 %v599, %v3288
    %v3290 = vpop.f32.mrf.mxu0
    %v3291 = vadd.f32 %v595, %v3290
    %v3292 = vpop.f32.mrf.mxu0
    %v3293 = vadd.f32 %v599, %v3292
    %3294 = vdwg.mxu0
    %3295 = vmatprep.subr.bf16.mxu0 %v2597
    %3296 = vmatpush1.bf16.msra.mxu0 %v2596
    %3297 = vmatprep.subr.bf16.mxu0 %v2581
    %3298 = vmatpush1.bf16.msra.mxu0 %v2580
    %3299 = vmatprep.subr.bf16.mxu0 %v2565
    %3300 = vmatpush1.bf16.msra.mxu0 %v2564
    %3301 = vmatprep.subr.bf16.mxu0 %v2549
    %3302 = vmatpush1.bf16.msra.mxu0 %v2548
    %3303 = vmatprep.subr.bf16.mxu0 %v2533
    %3304 = vmatpush1.bf16.msra.mxu0 %v2532
    %3305 = vmatprep.subr.bf16.mxu0 %v2517
    %3306 = vmatpush1.bf16.msra.mxu0 %v2516
    %3307 = vmatprep.subr.bf16.mxu0 %v2501
    %3308 = vmatpush1.bf16.msra.mxu0 %v2500
    %3309 = vmatprep.subr.bf16.mxu0 %v2485
    %3310 = vmatpush1.bf16.msra.mxu0 %v2484
    %3311 = vmatprep.subr.bf16.mxu0 %v2725
    %3312 = vmatpush2.bf16.msra.mxu0 %v2724
    %3313 = vmatprep.subr.bf16.mxu0 %v2709
    %3314 = vmatpush2.bf16.msra.mxu0 %v2708
    %3315 = vmatprep.subr.bf16.mxu0 %v2693
    %3316 = vmatpush2.bf16.msra.mxu0 %v2692
    %3317 = vmatprep.subr.bf16.mxu0 %v2677
    %3318 = vmatpush2.bf16.msra.mxu0 %v2676
    %3319 = vmatprep.subr.bf16.mxu0 %v2661
    %3320 = vmatpush2.bf16.msra.mxu0 %v2660
    %3321 = vmatprep.subr.bf16.mxu0 %v2645
    %3322 = vmatpush2.bf16.msra.mxu0 %v2644
    %3323 = vmatprep.subr.bf16.mxu0 %v2629
    %3324 = vmatpush2.bf16.msra.mxu0 %v2628
    %3325 = vmatprep.subr.bf16.mxu0 %v2613
    %3326 = vmatpush2.bf16.msra.mxu0 %v2612
    %3327 = vmatprep.mubr.bf16.mxu0 %v687
    %3328 = vmatmul.mubr.bf16.gmra.mxu0 %v686
    %v3329 = vpop.f32.mrf.mxu0
    %v3330 = vadd.f32 %v3287, %v3329
    %v3331 = vpop.f32.mrf.mxu0
    %v3332 = vadd.f32 %v3289, %v3331
    %v3333 = vpop.f32.mrf.mxu0
    %v3334 = vadd.f32 %v3291, %v3333
    %v3335 = vpop.f32.mrf.mxu0
    %v3336 = vadd.f32 %v3293, %v3335
    %3337 = vdwg.mxu0
    %3338 = vmatprep.subr.bf16.mxu0 %v2343
    %3339 = vmatpush1.bf16.msra.mxu0 %v2342
    %3340 = vmatprep.subr.bf16.mxu0 %v2327
    %3341 = vmatpush1.bf16.msra.mxu0 %v2326
    %3342 = vmatprep.subr.bf16.mxu0 %v2311
    %3343 = vmatpush1.bf16.msra.mxu0 %v2310
    %3344 = vmatprep.subr.bf16.mxu0 %v2295
    %3345 = vmatpush1.bf16.msra.mxu0 %v2294
    %3346 = vmatprep.subr.bf16.mxu0 %v2279
    %3347 = vmatpush1.bf16.msra.mxu0 %v2278
    %3348 = vmatprep.subr.bf16.mxu0 %v2263
    %3349 = vmatpush1.bf16.msra.mxu0 %v2262
    %3350 = vmatprep.subr.bf16.mxu0 %v2247
    %3351 = vmatpush1.bf16.msra.mxu0 %v2246
    %3352 = vmatprep.subr.bf16.mxu0 %v2231
    %3353 = vmatpush1.bf16.msra.mxu0 %v2230
    %3354 = vmatprep.subr.bf16.mxu0 %v2471
    %3355 = vmatpush2.bf16.msra.mxu0 %v2470
    %3356 = vmatprep.subr.bf16.mxu0 %v2455
    %3357 = vmatpush2.bf16.msra.mxu0 %v2454
    %3358 = vmatprep.subr.bf16.mxu0 %v2439
    %3359 = vmatpush2.bf16.msra.mxu0 %v2438
    %3360 = vmatprep.subr.bf16.mxu0 %v2423
    %3361 = vmatpush2.bf16.msra.mxu0 %v2422
    %3362 = vmatprep.subr.bf16.mxu0 %v2407
    %3363 = vmatpush2.bf16.msra.mxu0 %v2406
    %3364 = vmatprep.subr.bf16.mxu0 %v2391
    %3365 = vmatpush2.bf16.msra.mxu0 %v2390
    %3366 = vmatprep.subr.bf16.mxu0 %v2375
    %3367 = vmatpush2.bf16.msra.mxu0 %v2374
    %3368 = vmatprep.subr.bf16.mxu0 %v2359
    %3369 = vmatpush2.bf16.msra.mxu0 %v2358
    %3370 = vmatprep.mubr.bf16.mxu0 %v685
    %3371 = vmatmul.mubr.bf16.gmra.mxu0 %v684
    %v3372 = vpop.f32.mrf.mxu0
    %v3373 = vadd.f32 %v603, %v3372
    %v3374 = vpop.f32.mrf.mxu0
    %v3375 = vadd.f32 %v607, %v3374
    %v3376 = vpop.f32.mrf.mxu0
    %v3377 = vadd.f32 %v603, %v3376
    %v3378 = vpop.f32.mrf.mxu0
    %v3379 = vadd.f32 %v607, %v3378
    %3380 = vdwg.mxu0
    %3381 = vmatprep.subr.bf16.mxu0 %v2599
    %3382 = vmatpush1.bf16.msra.mxu0 %v2598
    %3383 = vmatprep.subr.bf16.mxu0 %v2583
    %3384 = vmatpush1.bf16.msra.mxu0 %v2582
    %3385 = vmatprep.subr.bf16.mxu0 %v2567
    %3386 = vmatpush1.bf16.msra.mxu0 %v2566
    %3387 = vmatprep.subr.bf16.mxu0 %v2551
    %3388 = vmatpush1.bf16.msra.mxu0 %v2550
    %3389 = vmatprep.subr.bf16.mxu0 %v2535
    %3390 = vmatpush1.bf16.msra.mxu0 %v2534
    %3391 = vmatprep.subr.bf16.mxu0 %v2519
    %3392 = vmatpush1.bf16.msra.mxu0 %v2518
    %3393 = vmatprep.subr.bf16.mxu0 %v2503
    %3394 = vmatpush1.bf16.msra.mxu0 %v2502
    %3395 = vmatprep.subr.bf16.mxu0 %v2487
    %3396 = vmatpush1.bf16.msra.mxu0 %v2486
    %3397 = vmatprep.subr.bf16.mxu0 %v2727
    %3398 = vmatpush2.bf16.msra.mxu0 %v2726
    %3399 = vmatprep.subr.bf16.mxu0 %v2711
    %3400 = vmatpush2.bf16.msra.mxu0 %v2710
    %3401 = vmatprep.subr.bf16.mxu0 %v2695
    %3402 = vmatpush2.bf16.msra.mxu0 %v2694
    %3403 = vmatprep.subr.bf16.mxu0 %v2679
    %3404 = vmatpush2.bf16.msra.mxu0 %v2678
    %3405 = vmatprep.subr.bf16.mxu0 %v2663
    %3406 = vmatpush2.bf16.msra.mxu0 %v2662
    %3407 = vmatprep.subr.bf16.mxu0 %v2647
    %3408 = vmatpush2.bf16.msra.mxu0 %v2646
    %3409 = vmatprep.subr.bf16.mxu0 %v2631
    %3410 = vmatpush2.bf16.msra.mxu0 %v2630
    %3411 = vmatprep.subr.bf16.mxu0 %v2615
    %3412 = vmatpush2.bf16.msra.mxu0 %v2614
    %3413 = vmatprep.mubr.bf16.mxu0 %v687
    %3414 = vmatmul.mubr.bf16.gmra.mxu0 %v686
    %v3415 = vpop.f32.mrf.mxu0
    %v3416 = vadd.f32 %v3373, %v3415
    %v3417 = vpop.f32.mrf.mxu0
    %v3418 = vadd.f32 %v3375, %v3417
    %v3419 = vpop.f32.mrf.mxu0
    %v3420 = vadd.f32 %v3377, %v3419
    %v3421 = vpop.f32.mrf.mxu0
    %v3422 = vadd.f32 %v3379, %v3421
    %3423 = vdwg.mxu0
    %3424 = vmatprep.subr.bf16.mxu0 %v2345
    %3425 = vmatpush1.bf16.msra.mxu0 %v2344
    %3426 = vmatprep.subr.bf16.mxu0 %v2329
    %3427 = vmatpush1.bf16.msra.mxu0 %v2328
    %3428 = vmatprep.subr.bf16.mxu0 %v2313
    %3429 = vmatpush1.bf16.msra.mxu0 %v2312
    %3430 = vmatprep.subr.bf16.mxu0 %v2297
    %3431 = vmatpush1.bf16.msra.mxu0 %v2296
    %3432 = vmatprep.subr.bf16.mxu0 %v2281
    %3433 = vmatpush1.bf16.msra.mxu0 %v2280
    %3434 = vmatprep.subr.bf16.mxu0 %v2265
    %3435 = vmatpush1.bf16.msra.mxu0 %v2264
    %3436 = vmatprep.subr.bf16.mxu0 %v2249
    %3437 = vmatpush1.bf16.msra.mxu0 %v2248
    %3438 = vmatprep.subr.bf16.mxu0 %v2233
    %3439 = vmatpush1.bf16.msra.mxu0 %v2232
    %3440 = vmatprep.subr.bf16.mxu0 %v2473
    %3441 = vmatpush2.bf16.msra.mxu0 %v2472
    %3442 = vmatprep.subr.bf16.mxu0 %v2457
    %3443 = vmatpush2.bf16.msra.mxu0 %v2456
    %3444 = vmatprep.subr.bf16.mxu0 %v2441
    %3445 = vmatpush2.bf16.msra.mxu0 %v2440
    %3446 = vmatprep.subr.bf16.mxu0 %v2425
    %3447 = vmatpush2.bf16.msra.mxu0 %v2424
    %3448 = vmatprep.subr.bf16.mxu0 %v2409
    %3449 = vmatpush2.bf16.msra.mxu0 %v2408
    %3450 = vmatprep.subr.bf16.mxu0 %v2393
    %3451 = vmatpush2.bf16.msra.mxu0 %v2392
    %3452 = vmatprep.subr.bf16.mxu0 %v2377
    %3453 = vmatpush2.bf16.msra.mxu0 %v2376
    %3454 = vmatprep.subr.bf16.mxu0 %v2361
    %3455 = vmatpush2.bf16.msra.mxu0 %v2360
    %3456 = vmatprep.mubr.bf16.mxu0 %v685
    %3457 = vmatmul.mubr.bf16.gmra.mxu0 %v684
    %v3458 = vpop.f32.mrf.mxu0
    %v3459 = vadd.f32 %v611, %v3458
    %v3460 = vpop.f32.mrf.mxu0
    %v3461 = vadd.f32 %v615, %v3460
    %v3462 = vpop.f32.mrf.mxu0
    %v3463 = vadd.f32 %v611, %v3462
    %v3464 = vpop.f32.mrf.mxu0
    %v3465 = vadd.f32 %v615, %v3464
    %3466 = vdwg.mxu0
    %3467 = vmatprep.subr.bf16.mxu0 %v2601
    %3468 = vmatpush1.bf16.msra.mxu0 %v2600
    %3469 = vmatprep.subr.bf16.mxu0 %v2585
    %3470 = vmatpush1.bf16.msra.mxu0 %v2584
    %3471 = vmatprep.subr.bf16.mxu0 %v2569
    %3472 = vmatpush1.bf16.msra.mxu0 %v2568
    %3473 = vmatprep.subr.bf16.mxu0 %v2553
    %3474 = vmatpush1.bf16.msra.mxu0 %v2552
    %3475 = vmatprep.subr.bf16.mxu0 %v2537
    %3476 = vmatpush1.bf16.msra.mxu0 %v2536
    %3477 = vmatprep.subr.bf16.mxu0 %v2521
    %3478 = vmatpush1.bf16.msra.mxu0 %v2520
    %3479 = vmatprep.subr.bf16.mxu0 %v2505
    %3480 = vmatpush1.bf16.msra.mxu0 %v2504
    %3481 = vmatprep.subr.bf16.mxu0 %v2489
    %3482 = vmatpush1.bf16.msra.mxu0 %v2488
    %3483 = vmatprep.subr.bf16.mxu0 %v2729
    %3484 = vmatpush2.bf16.msra.mxu0 %v2728
    %3485 = vmatprep.subr.bf16.mxu0 %v2713
    %3486 = vmatpush2.bf16.msra.mxu0 %v2712
    %3487 = vmatprep.subr.bf16.mxu0 %v2697
    %3488 = vmatpush2.bf16.msra.mxu0 %v2696
    %3489 = vmatprep.subr.bf16.mxu0 %v2681
    %3490 = vmatpush2.bf16.msra.mxu0 %v2680
    %3491 = vmatprep.subr.bf16.mxu0 %v2665
    %3492 = vmatpush2.bf16.msra.mxu0 %v2664
    %3493 = vmatprep.subr.bf16.mxu0 %v2649
    %3494 = vmatpush2.bf16.msra.mxu0 %v2648
    %3495 = vmatprep.subr.bf16.mxu0 %v2633
    %3496 = vmatpush2.bf16.msra.mxu0 %v2632
    %3497 = vmatprep.subr.bf16.mxu0 %v2617
    %3498 = vmatpush2.bf16.msra.mxu0 %v2616
    %3499 = vmatprep.mubr.bf16.mxu0 %v687
    %3500 = vmatmul.mubr.bf16.gmra.mxu0 %v686
    %v3501 = vpop.f32.mrf.mxu0
    %v3502 = vadd.f32 %v3459, %v3501
    %v3503 = vpop.f32.mrf.mxu0
    %v3504 = vadd.f32 %v3461, %v3503
    %v3505 = vpop.f32.mrf.mxu0
    %v3506 = vadd.f32 %v3463, %v3505
    %v3507 = vpop.f32.mrf.mxu0
    %v3508 = vadd.f32 %v3465, %v3507
    %3509 = vdwg.mxu0
    %3510 = vmatprep.subr.bf16.mxu0 %v2347
    %3511 = vmatpush1.bf16.msra.mxu0 %v2346
    %3512 = vmatprep.subr.bf16.mxu0 %v2331
    %3513 = vmatpush1.bf16.msra.mxu0 %v2330
    %3514 = vmatprep.subr.bf16.mxu0 %v2315
    %3515 = vmatpush1.bf16.msra.mxu0 %v2314
    %3516 = vmatprep.subr.bf16.mxu0 %v2299
    %3517 = vmatpush1.bf16.msra.mxu0 %v2298
    %3518 = vmatprep.subr.bf16.mxu0 %v2283
    %3519 = vmatpush1.bf16.msra.mxu0 %v2282
    %3520 = vmatprep.subr.bf16.mxu0 %v2267
    %3521 = vmatpush1.bf16.msra.mxu0 %v2266
    %3522 = vmatprep.subr.bf16.mxu0 %v2251
    %3523 = vmatpush1.bf16.msra.mxu0 %v2250
    %3524 = vmatprep.subr.bf16.mxu0 %v2235
    %3525 = vmatpush1.bf16.msra.mxu0 %v2234
    %3526 = vmatprep.subr.bf16.mxu0 %v2475
    %3527 = vmatpush2.bf16.msra.mxu0 %v2474
    %3528 = vmatprep.subr.bf16.mxu0 %v2459
    %3529 = vmatpush2.bf16.msra.mxu0 %v2458
    %3530 = vmatprep.subr.bf16.mxu0 %v2443
    %3531 = vmatpush2.bf16.msra.mxu0 %v2442
    %3532 = vmatprep.subr.bf16.mxu0 %v2427
    %3533 = vmatpush2.bf16.msra.mxu0 %v2426
    %3534 = vmatprep.subr.bf16.mxu0 %v2411
    %3535 = vmatpush2.bf16.msra.mxu0 %v2410
    %3536 = vmatprep.subr.bf16.mxu0 %v2395
    %3537 = vmatpush2.bf16.msra.mxu0 %v2394
    %3538 = vmatprep.subr.bf16.mxu0 %v2379
    %3539 = vmatpush2.bf16.msra.mxu0 %v2378
    %3540 = vmatprep.subr.bf16.mxu0 %v2363
    %3541 = vmatpush2.bf16.msra.mxu0 %v2362
    %3542 = vmatprep.mubr.bf16.mxu0 %v685
    %3543 = vmatmul.mubr.bf16.gmra.mxu0 %v684
    %v3544 = vpop.f32.mrf.mxu0
    %v3545 = vadd.f32 %v619, %v3544
    %v3546 = vpop.f32.mrf.mxu0
    %v3547 = vadd.f32 %v623, %v3546
    %v3548 = vpop.f32.mrf.mxu0
    %v3549 = vadd.f32 %v619, %v3548
    %v3550 = vpop.f32.mrf.mxu0
    %v3551 = vadd.f32 %v623, %v3550
    %3552 = vdwg.mxu0
    %3553 = vmatprep.subr.bf16.mxu0 %v2603
    %3554 = vmatpush1.bf16.msra.mxu0 %v2602
    %3555 = vmatprep.subr.bf16.mxu0 %v2587
    %3556 = vmatpush1.bf16.msra.mxu0 %v2586
    %3557 = vmatprep.subr.bf16.mxu0 %v2571
    %3558 = vmatpush1.bf16.msra.mxu0 %v2570
    %3559 = vmatprep.subr.bf16.mxu0 %v2555
    %3560 = vmatpush1.bf16.msra.mxu0 %v2554
    %3561 = vmatprep.subr.bf16.mxu0 %v2539
    %3562 = vmatpush1.bf16.msra.mxu0 %v2538
    %3563 = vmatprep.subr.bf16.mxu0 %v2523
    %3564 = vmatpush1.bf16.msra.mxu0 %v2522
    %3565 = vmatprep.subr.bf16.mxu0 %v2507
    %3566 = vmatpush1.bf16.msra.mxu0 %v2506
    %3567 = vmatprep.subr.bf16.mxu0 %v2491
    %3568 = vmatpush1.bf16.msra.mxu0 %v2490
    %3569 = vmatprep.subr.bf16.mxu0 %v2731
    %3570 = vmatpush2.bf16.msra.mxu0 %v2730
    %3571 = vmatprep.subr.bf16.mxu0 %v2715
    %3572 = vmatpush2.bf16.msra.mxu0 %v2714
    %3573 = vmatprep.subr.bf16.mxu0 %v2699
    %3574 = vmatpush2.bf16.msra.mxu0 %v2698
    %3575 = vmatprep.subr.bf16.mxu0 %v2683
    %3576 = vmatpush2.bf16.msra.mxu0 %v2682
    %3577 = vmatprep.subr.bf16.mxu0 %v2667
    %3578 = vmatpush2.bf16.msra.mxu0 %v2666
    %3579 = vmatprep.subr.bf16.mxu0 %v2651
    %3580 = vmatpush2.bf16.msra.mxu0 %v2650
    %3581 = vmatprep.subr.bf16.mxu0 %v2635
    %3582 = vmatpush2.bf16.msra.mxu0 %v2634
    %3583 = vmatprep.subr.bf16.mxu0 %v2619
    %3584 = vmatpush2.bf16.msra.mxu0 %v2618
    %3585 = vmatprep.mubr.bf16.mxu0 %v687
    %3586 = vmatmul.mubr.bf16.gmra.mxu0 %v686
    %v3587 = vpop.f32.mrf.mxu0
    %v3588 = vadd.f32 %v3545, %v3587
    %v3589 = vpop.f32.mrf.mxu0
    %v3590 = vadd.f32 %v3547, %v3589
    %v3591 = vpop.f32.mrf.mxu0
    %v3592 = vadd.f32 %v3549, %v3591
    %v3593 = vpop.f32.mrf.mxu0
    %v3594 = vadd.f32 %v3551, %v3593
    %3595 = vdwg.mxu0
    %3596 = vmatprep.subr.bf16.mxu0 %v2349
    %3597 = vmatpush1.bf16.msra.mxu0 %v2348
    %3598 = vmatprep.subr.bf16.mxu0 %v2333
    %3599 = vmatpush1.bf16.msra.mxu0 %v2332
    %3600 = vmatprep.subr.bf16.mxu0 %v2317
    %3601 = vmatpush1.bf16.msra.mxu0 %v2316
    %3602 = vmatprep.subr.bf16.mxu0 %v2301
    %3603 = vmatpush1.bf16.msra.mxu0 %v2300
    %3604 = vmatprep.subr.bf16.mxu0 %v2285
    %3605 = vmatpush1.bf16.msra.mxu0 %v2284
    %3606 = vmatprep.subr.bf16.mxu0 %v2269
    %3607 = vmatpush1.bf16.msra.mxu0 %v2268
    %3608 = vmatprep.subr.bf16.mxu0 %v2253
    %3609 = vmatpush1.bf16.msra.mxu0 %v2252
    %3610 = vmatprep.subr.bf16.mxu0 %v2237
    %3611 = vmatpush1.bf16.msra.mxu0 %v2236
    %3612 = vmatprep.subr.bf16.mxu0 %v2477
    %3613 = vmatpush2.bf16.msra.mxu0 %v2476
    %3614 = vmatprep.subr.bf16.mxu0 %v2461
    %3615 = vmatpush2.bf16.msra.mxu0 %v2460
    %3616 = vmatprep.subr.bf16.mxu0 %v2445
    %3617 = vmatpush2.bf16.msra.mxu0 %v2444
    %3618 = vmatprep.subr.bf16.mxu0 %v2429
    %3619 = vmatpush2.bf16.msra.mxu0 %v2428
    %3620 = vmatprep.subr.bf16.mxu0 %v2413
    %3621 = vmatpush2.bf16.msra.mxu0 %v2412
    %3622 = vmatprep.subr.bf16.mxu0 %v2397
    %3623 = vmatpush2.bf16.msra.mxu0 %v2396
    %3624 = vmatprep.subr.bf16.mxu0 %v2381
    %3625 = vmatpush2.bf16.msra.mxu0 %v2380
    %3626 = vmatprep.subr.bf16.mxu0 %v2365
    %3627 = vmatpush2.bf16.msra.mxu0 %v2364
    %3628 = vmatprep.mubr.bf16.mxu0 %v685
    %3629 = vmatmul.mubr.bf16.gmra.mxu0 %v684
    %v3630 = vpop.f32.mrf.mxu0
    %v3631 = vadd.f32 %v627, %v3630
    %v3632 = vpop.f32.mrf.mxu0
    %v3633 = vadd.f32 %v631, %v3632
    %v3634 = vpop.f32.mrf.mxu0
    %v3635 = vadd.f32 %v627, %v3634
    %v3636 = vpop.f32.mrf.mxu0
    %v3637 = vadd.f32 %v631, %v3636
    %3638 = vdwg.mxu0
    %3639 = vmatprep.subr.bf16.mxu0 %v2605
    %3640 = vmatpush1.bf16.msra.mxu0 %v2604
    %3641 = vmatprep.subr.bf16.mxu0 %v2589
    %3642 = vmatpush1.bf16.msra.mxu0 %v2588
    %3643 = vmatprep.subr.bf16.mxu0 %v2573
    %3644 = vmatpush1.bf16.msra.mxu0 %v2572
    %3645 = vmatprep.subr.bf16.mxu0 %v2557
    %3646 = vmatpush1.bf16.msra.mxu0 %v2556
    %3647 = vmatprep.subr.bf16.mxu0 %v2541
    %3648 = vmatpush1.bf16.msra.mxu0 %v2540
    %3649 = vmatprep.subr.bf16.mxu0 %v2525
    %3650 = vmatpush1.bf16.msra.mxu0 %v2524
    %3651 = vmatprep.subr.bf16.mxu0 %v2509
    %3652 = vmatpush1.bf16.msra.mxu0 %v2508
    %3653 = vmatprep.subr.bf16.mxu0 %v2493
    %3654 = vmatpush1.bf16.msra.mxu0 %v2492
    %3655 = vmatprep.subr.bf16.mxu0 %v2733
    %3656 = vmatpush2.bf16.msra.mxu0 %v2732
    %3657 = vmatprep.subr.bf16.mxu0 %v2717
    %3658 = vmatpush2.bf16.msra.mxu0 %v2716
    %3659 = vmatprep.subr.bf16.mxu0 %v2701
    %3660 = vmatpush2.bf16.msra.mxu0 %v2700
    %3661 = vmatprep.subr.bf16.mxu0 %v2685
    %3662 = vmatpush2.bf16.msra.mxu0 %v2684
    %3663 = vmatprep.subr.bf16.mxu0 %v2669
    %3664 = vmatpush2.bf16.msra.mxu0 %v2668
    %3665 = vmatprep.subr.bf16.mxu0 %v2653
    %3666 = vmatpush2.bf16.msra.mxu0 %v2652
    %3667 = vmatprep.subr.bf16.mxu0 %v2637
    %3668 = vmatpush2.bf16.msra.mxu0 %v2636
    %3669 = vmatprep.subr.bf16.mxu0 %v2621
    %3670 = vmatpush2.bf16.msra.mxu0 %v2620
    %3671 = vmatprep.mubr.bf16.mxu0 %v687
    %3672 = vmatmul.mubr.bf16.gmra.mxu0 %v686
    %v3673 = vpop.f32.mrf.mxu0
    %v3674 = vadd.f32 %v3631, %v3673
    %v3675 = vpop.f32.mrf.mxu0
    %v3676 = vadd.f32 %v3633, %v3675
    %v3677 = vpop.f32.mrf.mxu0
    %v3678 = vadd.f32 %v3635, %v3677
    %v3679 = vpop.f32.mrf.mxu0
    %v3680 = vadd.f32 %v3637, %v3679
    %3681 = vdwg.mxu0
    %3682 = vmatprep.subr.bf16.mxu0 %v2351
    %3683 = vmatpush1.bf16.msra.mxu0 %v2350
    %3684 = vmatprep.subr.bf16.mxu0 %v2335
    %3685 = vmatpush1.bf16.msra.mxu0 %v2334
    %3686 = vmatprep.subr.bf16.mxu0 %v2319
    %3687 = vmatpush1.bf16.msra.mxu0 %v2318
    %3688 = vmatprep.subr.bf16.mxu0 %v2303
    %3689 = vmatpush1.bf16.msra.mxu0 %v2302
    %3690 = vmatprep.subr.bf16.mxu0 %v2287
    %3691 = vmatpush1.bf16.msra.mxu0 %v2286
    %3692 = vmatprep.subr.bf16.mxu0 %v2271
    %3693 = vmatpush1.bf16.msra.mxu0 %v2270
    %3694 = vmatprep.subr.bf16.mxu0 %v2255
    %3695 = vmatpush1.bf16.msra.mxu0 %v2254
    %3696 = vmatprep.subr.bf16.mxu0 %v2239
    %3697 = vmatpush1.bf16.msra.mxu0 %v2238
    %3698 = vmatprep.subr.bf16.mxu0 %v2479
    %3699 = vmatpush2.bf16.msra.mxu0 %v2478
    %3700 = vmatprep.subr.bf16.mxu0 %v2463
    %3701 = vmatpush2.bf16.msra.mxu0 %v2462
    %3702 = vmatprep.subr.bf16.mxu0 %v2447
    %3703 = vmatpush2.bf16.msra.mxu0 %v2446
    %3704 = vmatprep.subr.bf16.mxu0 %v2431
    %3705 = vmatpush2.bf16.msra.mxu0 %v2430
    %3706 = vmatprep.subr.bf16.mxu0 %v2415
    %3707 = vmatpush2.bf16.msra.mxu0 %v2414
    %3708 = vmatprep.subr.bf16.mxu0 %v2399
    %3709 = vmatpush2.bf16.msra.mxu0 %v2398
    %3710 = vmatprep.subr.bf16.mxu0 %v2383
    %3711 = vmatpush2.bf16.msra.mxu0 %v2382
    %3712 = vmatprep.subr.bf16.mxu0 %v2367
    %3713 = vmatpush2.bf16.msra.mxu0 %v2366
    %3714 = vmatprep.mubr.bf16.mxu0 %v685
    %3715 = vmatmul.mubr.bf16.gmra.mxu0 %v684
    %v3716 = vpop.f32.mrf.mxu0
    %v3717 = vadd.f32 %v635, %v3716
    %v3718 = vpop.f32.mrf.mxu0
    %v3719 = vadd.f32 %v639, %v3718
    %v3720 = vpop.f32.mrf.mxu0
    %v3721 = vadd.f32 %v635, %v3720
    %v3722 = vpop.f32.mrf.mxu0
    %v3723 = vadd.f32 %v639, %v3722
    %3724 = vdwg.mxu0
    %3725 = vmatprep.subr.bf16.mxu0 %v2607
    %3726 = vmatpush1.bf16.msra.mxu0 %v2606
    %3727 = vmatprep.subr.bf16.mxu0 %v2591
    %3728 = vmatpush1.bf16.msra.mxu0 %v2590
    %3729 = vmatprep.subr.bf16.mxu0 %v2575
    %3730 = vmatpush1.bf16.msra.mxu0 %v2574
    %3731 = vmatprep.subr.bf16.mxu0 %v2559
    %3732 = vmatpush1.bf16.msra.mxu0 %v2558
    %3733 = vmatprep.subr.bf16.mxu0 %v2543
    %3734 = vmatpush1.bf16.msra.mxu0 %v2542
    %3735 = vmatprep.subr.bf16.mxu0 %v2527
    %3736 = vmatpush1.bf16.msra.mxu0 %v2526
    %3737 = vmatprep.subr.bf16.mxu0 %v2511
    %3738 = vmatpush1.bf16.msra.mxu0 %v2510
    %3739 = vmatprep.subr.bf16.mxu0 %v2495
    %3740 = vmatpush1.bf16.msra.mxu0 %v2494
    %3741 = vmatprep.subr.bf16.mxu0 %v2735
    %3742 = vmatpush2.bf16.msra.mxu0 %v2734
    %3743 = vmatprep.subr.bf16.mxu0 %v2719
    %3744 = vmatpush2.bf16.msra.mxu0 %v2718
    %3745 = vmatprep.subr.bf16.mxu0 %v2703
    %3746 = vmatpush2.bf16.msra.mxu0 %v2702
    %3747 = vmatprep.subr.bf16.mxu0 %v2687
    %3748 = vmatpush2.bf16.msra.mxu0 %v2686
    %3749 = vmatprep.subr.bf16.mxu0 %v2671
    %3750 = vmatpush2.bf16.msra.mxu0 %v2670
    %3751 = vmatprep.subr.bf16.mxu0 %v2655
    %3752 = vmatpush2.bf16.msra.mxu0 %v2654
    %3753 = vmatprep.subr.bf16.mxu0 %v2639
    %3754 = vmatpush2.bf16.msra.mxu0 %v2638
    %3755 = vmatprep.subr.bf16.mxu0 %v2623
    %3756 = vmatpush2.bf16.msra.mxu0 %v2622
    %3757 = vmatprep.mubr.bf16.mxu0 %v687
    %3758 = vmatmul.mubr.bf16.gmra.mxu0 %v686
    %v3759 = vpop.f32.mrf.mxu0
    %v3760 = vadd.f32 %v3717, %v3759
    %v3761 = vpop.f32.mrf.mxu0
    %v3762 = vadd.f32 %v3719, %v3761
    %v3763 = vpop.f32.mrf.mxu0
    %v3764 = vadd.f32 %v3721, %v3763
    %v3765 = vpop.f32.mrf.mxu0
    %v3766 = vadd.f32 %v3723, %v3765
    %3767 = vdwg.mxu0
    %3768 = vmatprep.subr.bf16.mxu0 %v2353
    %3769 = vmatpush1.bf16.msra.mxu0 %v2352
    %3770 = vmatprep.subr.bf16.mxu0 %v2337
    %3771 = vmatpush1.bf16.msra.mxu0 %v2336
    %3772 = vmatprep.subr.bf16.mxu0 %v2321
    %3773 = vmatpush1.bf16.msra.mxu0 %v2320
    %3774 = vmatprep.subr.bf16.mxu0 %v2305
    %3775 = vmatpush1.bf16.msra.mxu0 %v2304
    %3776 = vmatprep.subr.bf16.mxu0 %v2289
    %3777 = vmatpush1.bf16.msra.mxu0 %v2288
    %3778 = vmatprep.subr.bf16.mxu0 %v2273
    %3779 = vmatpush1.bf16.msra.mxu0 %v2272
    %3780 = vmatprep.subr.bf16.mxu0 %v2257
    %3781 = vmatpush1.bf16.msra.mxu0 %v2256
    %3782 = vmatprep.subr.bf16.mxu0 %v2241
    %3783 = vmatpush1.bf16.msra.mxu0 %v2240
    %3784 = vmatprep.subr.bf16.mxu0 %v2481
    %3785 = vmatpush2.bf16.msra.mxu0 %v2480
    %3786 = vmatprep.subr.bf16.mxu0 %v2465
    %3787 = vmatpush2.bf16.msra.mxu0 %v2464
    %3788 = vmatprep.subr.bf16.mxu0 %v2449
    %3789 = vmatpush2.bf16.msra.mxu0 %v2448
    %3790 = vmatprep.subr.bf16.mxu0 %v2433
    %3791 = vmatpush2.bf16.msra.mxu0 %v2432
    %3792 = vmatprep.subr.bf16.mxu0 %v2417
    %3793 = vmatpush2.bf16.msra.mxu0 %v2416
    %3794 = vmatprep.subr.bf16.mxu0 %v2401
    %3795 = vmatpush2.bf16.msra.mxu0 %v2400
    %3796 = vmatprep.subr.bf16.mxu0 %v2385
    %3797 = vmatpush2.bf16.msra.mxu0 %v2384
    %3798 = vmatprep.subr.bf16.mxu0 %v2369
    %3799 = vmatpush2.bf16.msra.mxu0 %v2368
    %3800 = vmatprep.mubr.bf16.mxu0 %v685
    %3801 = vmatmul.mubr.bf16.gmra.mxu0 %v684
    %v3802 = vpop.f32.mrf.mxu0
    %v3803 = vadd.f32 %v643, %v3802
    %v3804 = vpop.f32.mrf.mxu0
    %v3805 = vadd.f32 %v647, %v3804
    %v3806 = vpop.f32.mrf.mxu0
    %v3807 = vadd.f32 %v643, %v3806
    %v3808 = vpop.f32.mrf.mxu0
    %v3809 = vadd.f32 %v647, %v3808
    %3810 = vdwg.mxu0
    %3811 = vmatprep.subr.bf16.mxu0 %v2609
    %3812 = vmatpush1.bf16.msra.mxu0 %v2608
    %3813 = vmatprep.subr.bf16.mxu0 %v2593
    %3814 = vmatpush1.bf16.msra.mxu0 %v2592
    %3815 = vmatprep.subr.bf16.mxu0 %v2577
    %3816 = vmatpush1.bf16.msra.mxu0 %v2576
    %3817 = vmatprep.subr.bf16.mxu0 %v2561
    %3818 = vmatpush1.bf16.msra.mxu0 %v2560
    %3819 = vmatprep.subr.bf16.mxu0 %v2545
    %3820 = vmatpush1.bf16.msra.mxu0 %v2544
    %3821 = vmatprep.subr.bf16.mxu0 %v2529
    %3822 = vmatpush1.bf16.msra.mxu0 %v2528
    %3823 = vmatprep.subr.bf16.mxu0 %v2513
    %3824 = vmatpush1.bf16.msra.mxu0 %v2512
    %3825 = vmatprep.subr.bf16.mxu0 %v2497
    %3826 = vmatpush1.bf16.msra.mxu0 %v2496
    %3827 = vmatprep.subr.bf16.mxu0 %v2737
    %3828 = vmatpush2.bf16.msra.mxu0 %v2736
    %3829 = vmatprep.subr.bf16.mxu0 %v2721
    %3830 = vmatpush2.bf16.msra.mxu0 %v2720
    %3831 = vmatprep.subr.bf16.mxu0 %v2705
    %3832 = vmatpush2.bf16.msra.mxu0 %v2704
    %3833 = vmatprep.subr.bf16.mxu0 %v2689
    %3834 = vmatpush2.bf16.msra.mxu0 %v2688
    %3835 = vmatprep.subr.bf16.mxu0 %v2673
    %3836 = vmatpush2.bf16.msra.mxu0 %v2672
    %3837 = vmatprep.subr.bf16.mxu0 %v2657
    %3838 = vmatpush2.bf16.msra.mxu0 %v2656
    %3839 = vmatprep.subr.bf16.mxu0 %v2641
    %3840 = vmatpush2.bf16.msra.mxu0 %v2640
    %3841 = vmatprep.subr.bf16.mxu0 %v2625
    %3842 = vmatpush2.bf16.msra.mxu0 %v2624
    %3843 = vmatprep.mubr.bf16.mxu0 %v687
    %3844 = vmatmul.mubr.bf16.gmra.mxu0 %v686
    %v3845 = vpop.f32.mrf.mxu0
    %v3846 = vadd.f32 %v3803, %v3845
    %v3847 = vpop.f32.mrf.mxu0
    %v3848 = vadd.f32 %v3805, %v3847
    %v3849 = vpop.f32.mrf.mxu0
    %v3850 = vadd.f32 %v3807, %v3849
    %v3851 = vpop.f32.mrf.mxu0
    %v3852 = vadd.f32 %v3809, %v3851
    %3853 = vdwg.mxu0
    %3854 = vmatprep.subr.bf16.mxu0 %v2355
    %3855 = vmatpush1.bf16.msra.mxu0 %v2354
    %3856 = vmatprep.subr.bf16.mxu0 %v2339
    %3857 = vmatpush1.bf16.msra.mxu0 %v2338
    %3858 = vmatprep.subr.bf16.mxu0 %v2323
    %3859 = vmatpush1.bf16.msra.mxu0 %v2322
    %3860 = vmatprep.subr.bf16.mxu0 %v2307
    %3861 = vmatpush1.bf16.msra.mxu0 %v2306
    %3862 = vmatprep.subr.bf16.mxu0 %v2291
    %3863 = vmatpush1.bf16.msra.mxu0 %v2290
    %3864 = vmatprep.subr.bf16.mxu0 %v2275
    %3865 = vmatpush1.bf16.msra.mxu0 %v2274
    %3866 = vmatprep.subr.bf16.mxu0 %v2259
    %3867 = vmatpush1.bf16.msra.mxu0 %v2258
    %3868 = vmatprep.subr.bf16.mxu0 %v2243
    %3869 = vmatpush1.bf16.msra.mxu0 %v2242
    %3870 = vmatprep.subr.bf16.mxu0 %v2483
    %3871 = vmatpush2.bf16.msra.mxu0 %v2482
    %3872 = vmatprep.subr.bf16.mxu0 %v2467
    %3873 = vmatpush2.bf16.msra.mxu0 %v2466
    %3874 = vmatprep.subr.bf16.mxu0 %v2451
    %3875 = vmatpush2.bf16.msra.mxu0 %v2450
    %3876 = vmatprep.subr.bf16.mxu0 %v2435
    %3877 = vmatpush2.bf16.msra.mxu0 %v2434
    %3878 = vmatprep.subr.bf16.mxu0 %v2419
    %3879 = vmatpush2.bf16.msra.mxu0 %v2418
    %3880 = vmatprep.subr.bf16.mxu0 %v2403
    %3881 = vmatpush2.bf16.msra.mxu0 %v2402
    %3882 = vmatprep.subr.bf16.mxu0 %v2387
    %3883 = vmatpush2.bf16.msra.mxu0 %v2386
    %3884 = vmatprep.subr.bf16.mxu0 %v2371
    %3885 = vmatpush2.bf16.msra.mxu0 %v2370
    %3886 = vmatprep.mubr.bf16.mxu0 %v685
    %3887 = vmatmul.mubr.bf16.gmra.mxu0 %v684
    %v3888 = vpop.f32.mrf.mxu0
    %v3889 = vadd.f32 %v651, %v3888
    %v3890 = vpop.f32.mrf.mxu0
    %v3891 = vadd.f32 %v655, %v3890
    %v3892 = vpop.f32.mrf.mxu0
    %v3893 = vadd.f32 %v651, %v3892
    %v3894 = vpop.f32.mrf.mxu0
    %v3895 = vadd.f32 %v655, %v3894
    %3896 = vdwg.mxu0
    %3897 = vmatprep.subr.bf16.mxu0 %v2611
    %3898 = vmatpush1.bf16.msra.mxu0 %v2610
    %3899 = vmatprep.subr.bf16.mxu0 %v2595
    %3900 = vmatpush1.bf16.msra.mxu0 %v2594
    %3901 = vmatprep.subr.bf16.mxu0 %v2579
    %3902 = vmatpush1.bf16.msra.mxu0 %v2578
    %3903 = vmatprep.subr.bf16.mxu0 %v2563
    %3904 = vmatpush1.bf16.msra.mxu0 %v2562
    %3905 = vmatprep.subr.bf16.mxu0 %v2547
    %3906 = vmatpush1.bf16.msra.mxu0 %v2546
    %3907 = vmatprep.subr.bf16.mxu0 %v2531
    %3908 = vmatpush1.bf16.msra.mxu0 %v2530
    %3909 = vmatprep.subr.bf16.mxu0 %v2515
    %3910 = vmatpush1.bf16.msra.mxu0 %v2514
    %3911 = vmatprep.subr.bf16.mxu0 %v2499
    %3912 = vmatpush1.bf16.msra.mxu0 %v2498
    %3913 = vmatprep.subr.bf16.mxu0 %v2739
    %3914 = vmatpush2.bf16.msra.mxu0 %v2738
    %3915 = vmatprep.subr.bf16.mxu0 %v2723
    %3916 = vmatpush2.bf16.msra.mxu0 %v2722
    %3917 = vmatprep.subr.bf16.mxu0 %v2707
    %3918 = vmatpush2.bf16.msra.mxu0 %v2706
    %3919 = vmatprep.subr.bf16.mxu0 %v2691
    %3920 = vmatpush2.bf16.msra.mxu0 %v2690
    %3921 = vmatprep.subr.bf16.mxu0 %v2675
    %3922 = vmatpush2.bf16.msra.mxu0 %v2674
    %3923 = vmatprep.subr.bf16.mxu0 %v2659
    %3924 = vmatpush2.bf16.msra.mxu0 %v2658
    %3925 = vmatprep.subr.bf16.mxu0 %v2643
    %3926 = vmatpush2.bf16.msra.mxu0 %v2642
    %3927 = vmatprep.subr.bf16.mxu0 %v2627
    %3928 = vmatpush2.bf16.msra.mxu0 %v2626
    %3929 = vmatprep.mubr.bf16.mxu0 %v687
    %3930 = vmatmul.mubr.bf16.gmra.mxu0 %v686
    %v3931 = vpop.f32.mrf.mxu0
    %v3932 = vadd.f32 %v3889, %v3931
    %v3933 = vpop.f32.mrf.mxu0
    %v3934 = vadd.f32 %v3891, %v3933
    %v3935 = vpop.f32.mrf.mxu0
    %v3936 = vadd.f32 %v3893, %v3935
    %v3937 = vpop.f32.mrf.mxu0
    %v3938 = vadd.f32 %v3895, %v3937
    %3939 = vdwg.mxu0
    %v3940 = vmax.f32 %v3330, 0.0
    %v3941 = vmax.f32 %v3332, 0.0
    %v3942 = vmax.f32 %v3416, 0.0
    %v3943 = vmax.f32 %v3418, 0.0
    %v3944 = vmax.f32 %v3502, 0.0
    %v3945 = vmax.f32 %v3504, 0.0
    %v3946 = vmax.f32 %v3588, 0.0
    %v3947 = vmax.f32 %v3590, 0.0
    %v3948 = vmax.f32 %v3674, 0.0
    %v3949 = vmax.f32 %v3676, 0.0
    %v3950 = vmax.f32 %v3760, 0.0
    %v3951 = vmax.f32 %v3762, 0.0
    %v3952 = vmax.f32 %v3846, 0.0
    %v3953 = vmax.f32 %v3848, 0.0
    %v3954 = vmax.f32 %v3932, 0.0
    %v3955 = vmax.f32 %v3934, 0.0
    %v3956 = vmax.f32 %v3334, 0.0
    %v3957 = vmax.f32 %v3336, 0.0
    %v3958 = vmax.f32 %v3420, 0.0
    %v3959 = vmax.f32 %v3422, 0.0
    %v3960 = vmax.f32 %v3506, 0.0
    %v3961 = vmax.f32 %v3508, 0.0
    %v3962 = vmax.f32 %v3592, 0.0
    %v3963 = vmax.f32 %v3594, 0.0
    %v3964 = vmax.f32 %v3678, 0.0
    %v3965 = vmax.f32 %v3680, 0.0
    %v3966 = vmax.f32 %v3764, 0.0
    %v3967 = vmax.f32 %v3766, 0.0
    %v3968 = vmax.f32 %v3850, 0.0
    %v3969 = vmax.f32 %v3852, 0.0
    %v3970 = vmax.f32 %v3936, 0.0
    %v3971 = vmax.f32 %v3938, 0.0
    %v3972 = vpack.c.bf16 %v3956, %v3940
    %v3973 = vpack.c.bf16 %v3957, %v3941
    %v3974 = vpack.c.bf16 %v3958, %v3942
    %v3975 = vpack.c.bf16 %v3959, %v3943
    %v3976 = vpack.c.bf16 %v3960, %v3944
    %v3977 = vpack.c.bf16 %v3961, %v3945
    %v3978 = vpack.c.bf16 %v3962, %v3946
    %v3979 = vpack.c.bf16 %v3963, %v3947
    %v3980 = vpack.c.bf16 %v3964, %v3948
    %v3981 = vpack.c.bf16 %v3965, %v3949
    %v3982 = vpack.c.bf16 %v3966, %v3950
    %v3983 = vpack.c.bf16 %v3967, %v3951
    %v3984 = vpack.c.bf16 %v3968, %v3952
    %v3985 = vpack.c.bf16 %v3969, %v3953
    %v3986 = vpack.c.bf16 %v3970, %v3954
    %v3987 = vpack.c.bf16 %v3971, %v3955
    %v3988 = vld [vmem:[#allocation7] sm:$0xff]
    %v3989 = vld [vmem:[#allocation7 + $0x8] sm:$0xff]
    %v3990 = vld [vmem:[#allocation7 + $0x10] sm:$0xff]
    %v3991 = vld [vmem:[#allocation7 + $0x18] sm:$0xff]
    %v3992 = vld [vmem:[#allocation7 + $0x20] sm:$0xff]
    %v3993 = vld [vmem:[#allocation7 + $0x28] sm:$0xff]
    %v3994 = vld [vmem:[#allocation7 + $0x30] sm:$0xff]
    %v3995 = vld [vmem:[#allocation7 + $0x38] sm:$0xff]
    %v3996 = vld [vmem:[#allocation7 + $0x40] sm:$0xff]
    %v3997 = vld [vmem:[#allocation7 + $0x48] sm:$0xff]
    %v3998 = vld [vmem:[#allocation7 + $0x50] sm:$0xff]
    %v3999 = vld [vmem:[#allocation7 + $0x58] sm:$0xff]
    %v4000 = vld [vmem:[#allocation7 + $0x60] sm:$0xff]
    %v4001 = vld [vmem:[#allocation7 + $0x68] sm:$0xff]
    %v4002 = vld [vmem:[#allocation7 + $0x70] sm:$0xff]
    %v4003 = vld [vmem:[#allocation7 + $0x78] sm:$0xff]
    %v4004 = vld [vmem:[#allocation7 + $0x80] sm:$0xff]
    %v4005 = vld [vmem:[#allocation7 + $0x88] sm:$0xff]
    %v4006 = vld [vmem:[#allocation7 + $0x90] sm:$0xff]
    %v4007 = vld [vmem:[#allocation7 + $0x98] sm:$0xff]
    %v4008 = vld [vmem:[#allocation7 + $0xa0] sm:$0xff]
    %v4009 = vld [vmem:[#allocation7 + $0xa8] sm:$0xff]
    %v4010 = vld [vmem:[#allocation7 + $0xb0] sm:$0xff]
    %v4011 = vld [vmem:[#allocation7 + $0xb8] sm:$0xff]
    %v4012 = vld [vmem:[#allocation7 + $0xc0] sm:$0xff]
    %v4013 = vld [vmem:[#allocation7 + $0xc8] sm:$0xff]
    %v4014 = vld [vmem:[#allocation7 + $0xd0] sm:$0xff]
    %v4015 = vld [vmem:[#allocation7 + $0xd8] sm:$0xff]
    %v4016 = vld [vmem:[#allocation7 + $0xe0] sm:$0xff]
    %v4017 = vld [vmem:[#allocation7 + $0xe8] sm:$0xff]
    %v4018 = vld [vmem:[#allocation7 + $0xf0] sm:$0xff]
    %v4019 = vld [vmem:[#allocation7 + $0xf8] sm:$0xff]
    %v4020 = vld [vmem:[#allocation7 + $0x100] sm:$0xff]
    %v4021 = vld [vmem:[#allocation7 + $0x108] sm:$0xff]
    %v4022 = vld [vmem:[#allocation7 + $0x110] sm:$0xff]
    %v4023 = vld [vmem:[#allocation7 + $0x118] sm:$0xff]
    %v4024 = vld [vmem:[#allocation7 + $0x120] sm:$0xff]
    %v4025 = vld [vmem:[#allocation7 + $0x128] sm:$0xff]
    %v4026 = vld [vmem:[#allocation7 + $0x130] sm:$0xff]
    %v4027 = vld [vmem:[#allocation7 + $0x138] sm:$0xff]
    %v4028 = vld [vmem:[#allocation7 + $0x140] sm:$0xff]
    %v4029 = vld [vmem:[#allocation7 + $0x148] sm:$0xff]
    %v4030 = vld [vmem:[#allocation7 + $0x150] sm:$0xff]
    %v4031 = vld [vmem:[#allocation7 + $0x158] sm:$0xff]
    %v4032 = vld [vmem:[#allocation7 + $0x160] sm:$0xff]
    %v4033 = vld [vmem:[#allocation7 + $0x168] sm:$0xff]
    %v4034 = vld [vmem:[#allocation7 + $0x170] sm:$0xff]
    %v4035 = vld [vmem:[#allocation7 + $0x178] sm:$0xff]
    %v4036 = vld [vmem:[#allocation7 + $0x180] sm:$0xff]
    %v4037 = vld [vmem:[#allocation7 + $0x188] sm:$0xff]
    %v4038 = vld [vmem:[#allocation7 + $0x190] sm:$0xff]
    %v4039 = vld [vmem:[#allocation7 + $0x198] sm:$0xff]
    %v4040 = vld [vmem:[#allocation7 + $0x1a0] sm:$0xff]
    %v4041 = vld [vmem:[#allocation7 + $0x1a8] sm:$0xff]
    %v4042 = vld [vmem:[#allocation7 + $0x1b0] sm:$0xff]
    %v4043 = vld [vmem:[#allocation7 + $0x1b8] sm:$0xff]
    %v4044 = vld [vmem:[#allocation7 + $0x1c0] sm:$0xff]
    %v4045 = vld [vmem:[#allocation7 + $0x1c8] sm:$0xff]
    %v4046 = vld [vmem:[#allocation7 + $0x1d0] sm:$0xff]
    %v4047 = vld [vmem:[#allocation7 + $0x1d8] sm:$0xff]
    %v4048 = vld [vmem:[#allocation7 + $0x1e0] sm:$0xff]
    %v4049 = vld [vmem:[#allocation7 + $0x1e8] sm:$0xff]
    %v4050 = vld [vmem:[#allocation7 + $0x1f0] sm:$0xff]
    %v4051 = vld [vmem:[#allocation7 + $0x1f8] sm:$0xff]
    %v4052 = vld [vmem:[#allocation7 + $0x200] sm:$0xff]
    %v4053 = vld [vmem:[#allocation7 + $0x208] sm:$0xff]
    %v4054 = vld [vmem:[#allocation7 + $0x210] sm:$0xff]
    %v4055 = vld [vmem:[#allocation7 + $0x218] sm:$0xff]
    %v4056 = vld [vmem:[#allocation7 + $0x220] sm:$0xff]
    %v4057 = vld [vmem:[#allocation7 + $0x228] sm:$0xff]
    %v4058 = vld [vmem:[#allocation7 + $0x230] sm:$0xff]
    %v4059 = vld [vmem:[#allocation7 + $0x238] sm:$0xff]
    %v4060 = vld [vmem:[#allocation7 + $0x240] sm:$0xff]
    %v4061 = vld [vmem:[#allocation7 + $0x248] sm:$0xff]
    %v4062 = vld [vmem:[#allocation7 + $0x250] sm:$0xff]
    %v4063 = vld [vmem:[#allocation7 + $0x258] sm:$0xff]
    %v4064 = vld [vmem:[#allocation7 + $0x260] sm:$0xff]
    %v4065 = vld [vmem:[#allocation7 + $0x268] sm:$0xff]
    %v4066 = vld [vmem:[#allocation7 + $0x270] sm:$0xff]
    %v4067 = vld [vmem:[#allocation7 + $0x278] sm:$0xff]
    %v4068 = vld [vmem:[#allocation7 + $0x280] sm:$0xff]
    %v4069 = vld [vmem:[#allocation7 + $0x288] sm:$0xff]
    %v4070 = vld [vmem:[#allocation7 + $0x290] sm:$0xff]
    %v4071 = vld [vmem:[#allocation7 + $0x298] sm:$0xff]
    %v4072 = vld [vmem:[#allocation7 + $0x2a0] sm:$0xff]
    %v4073 = vld [vmem:[#allocation7 + $0x2a8] sm:$0xff]
    %v4074 = vld [vmem:[#allocation7 + $0x2b0] sm:$0xff]
    %v4075 = vld [vmem:[#allocation7 + $0x2b8] sm:$0xff]
    %v4076 = vld [vmem:[#allocation7 + $0x2c0] sm:$0xff]
    %v4077 = vld [vmem:[#allocation7 + $0x2c8] sm:$0xff]
    %v4078 = vld [vmem:[#allocation7 + $0x2d0] sm:$0xff]
    %v4079 = vld [vmem:[#allocation7 + $0x2d8] sm:$0xff]
    %v4080 = vld [vmem:[#allocation7 + $0x2e0] sm:$0xff]
    %v4081 = vld [vmem:[#allocation7 + $0x2e8] sm:$0xff]
    %v4082 = vld [vmem:[#allocation7 + $0x2f0] sm:$0xff]
    %v4083 = vld [vmem:[#allocation7 + $0x2f8] sm:$0xff]
    %v4084 = vld [vmem:[#allocation7 + $0x300] sm:$0xff]
    %v4085 = vld [vmem:[#allocation7 + $0x308] sm:$0xff]
    %v4086 = vld [vmem:[#allocation7 + $0x310] sm:$0xff]
    %v4087 = vld [vmem:[#allocation7 + $0x318] sm:$0xff]
    %v4088 = vld [vmem:[#allocation7 + $0x320] sm:$0xff]
    %v4089 = vld [vmem:[#allocation7 + $0x328] sm:$0xff]
    %v4090 = vld [vmem:[#allocation7 + $0x330] sm:$0xff]
    %v4091 = vld [vmem:[#allocation7 + $0x338] sm:$0xff]
    %v4092 = vld [vmem:[#allocation7 + $0x340] sm:$0xff]
    %v4093 = vld [vmem:[#allocation7 + $0x348] sm:$0xff]
    %v4094 = vld [vmem:[#allocation7 + $0x350] sm:$0xff]
    %v4095 = vld [vmem:[#allocation7 + $0x358] sm:$0xff]
    %v4096 = vld [vmem:[#allocation7 + $0x360] sm:$0xff]
    %v4097 = vld [vmem:[#allocation7 + $0x368] sm:$0xff]
    %v4098 = vld [vmem:[#allocation7 + $0x370] sm:$0xff]
    %v4099 = vld [vmem:[#allocation7 + $0x378] sm:$0xff]
    %v4100 = vld [vmem:[#allocation7 + $0x380] sm:$0xff]
    %v4101 = vld [vmem:[#allocation7 + $0x388] sm:$0xff]
    %v4102 = vld [vmem:[#allocation7 + $0x390] sm:$0xff]
    %v4103 = vld [vmem:[#allocation7 + $0x398] sm:$0xff]
    %v4104 = vld [vmem:[#allocation7 + $0x3a0] sm:$0xff]
    %v4105 = vld [vmem:[#allocation7 + $0x3a8] sm:$0xff]
    %v4106 = vld [vmem:[#allocation7 + $0x3b0] sm:$0xff]
    %v4107 = vld [vmem:[#allocation7 + $0x3b8] sm:$0xff]
    %v4108 = vld [vmem:[#allocation7 + $0x3c0] sm:$0xff]
    %v4109 = vld [vmem:[#allocation7 + $0x3c8] sm:$0xff]
    %v4110 = vld [vmem:[#allocation7 + $0x3d0] sm:$0xff]
    %v4111 = vld [vmem:[#allocation7 + $0x3d8] sm:$0xff]
    %v4112 = vld [vmem:[#allocation7 + $0x3e0] sm:$0xff]
    %v4113 = vld [vmem:[#allocation7 + $0x3e8] sm:$0xff]
    %v4114 = vld [vmem:[#allocation7 + $0x3f0] sm:$0xff]
    %v4115 = vld [vmem:[#allocation7 + $0x3f8] sm:$0xff]
    %v4116 = vld [vmem:[#allocation7 + $0x400] sm:$0xff]
    %v4117 = vld [vmem:[#allocation7 + $0x408] sm:$0xff]
    %v4118 = vld [vmem:[#allocation7 + $0x410] sm:$0xff]
    %v4119 = vld [vmem:[#allocation7 + $0x418] sm:$0xff]
    %v4120 = vld [vmem:[#allocation7 + $0x420] sm:$0xff]
    %v4121 = vld [vmem:[#allocation7 + $0x428] sm:$0xff]
    %v4122 = vld [vmem:[#allocation7 + $0x430] sm:$0xff]
    %v4123 = vld [vmem:[#allocation7 + $0x438] sm:$0xff]
    %v4124 = vld [vmem:[#allocation7 + $0x440] sm:$0xff]
    %v4125 = vld [vmem:[#allocation7 + $0x448] sm:$0xff]
    %v4126 = vld [vmem:[#allocation7 + $0x450] sm:$0xff]
    %v4127 = vld [vmem:[#allocation7 + $0x458] sm:$0xff]
    %v4128 = vld [vmem:[#allocation7 + $0x460] sm:$0xff]
    %v4129 = vld [vmem:[#allocation7 + $0x468] sm:$0xff]
    %v4130 = vld [vmem:[#allocation7 + $0x470] sm:$0xff]
    %v4131 = vld [vmem:[#allocation7 + $0x478] sm:$0xff]
    %v4132 = vld [vmem:[#allocation7 + $0x480] sm:$0xff]
    %v4133 = vld [vmem:[#allocation7 + $0x488] sm:$0xff]
    %v4134 = vld [vmem:[#allocation7 + $0x490] sm:$0xff]
    %v4135 = vld [vmem:[#allocation7 + $0x498] sm:$0xff]
    %v4136 = vld [vmem:[#allocation7 + $0x4a0] sm:$0xff]
    %v4137 = vld [vmem:[#allocation7 + $0x4a8] sm:$0xff]
    %v4138 = vld [vmem:[#allocation7 + $0x4b0] sm:$0xff]
    %v4139 = vld [vmem:[#allocation7 + $0x4b8] sm:$0xff]
    %v4140 = vld [vmem:[#allocation7 + $0x4c0] sm:$0xff]
    %v4141 = vld [vmem:[#allocation7 + $0x4c8] sm:$0xff]
    %v4142 = vld [vmem:[#allocation7 + $0x4d0] sm:$0xff]
    %v4143 = vld [vmem:[#allocation7 + $0x4d8] sm:$0xff]
    %v4144 = vld [vmem:[#allocation7 + $0x4e0] sm:$0xff]
    %v4145 = vld [vmem:[#allocation7 + $0x4e8] sm:$0xff]
    %v4146 = vld [vmem:[#allocation7 + $0x4f0] sm:$0xff]
    %v4147 = vld [vmem:[#allocation7 + $0x4f8] sm:$0xff]
    %v4148 = vld [vmem:[#allocation7 + $0x500] sm:$0xff]
    %v4149 = vld [vmem:[#allocation7 + $0x508] sm:$0xff]
    %v4150 = vld [vmem:[#allocation7 + $0x510] sm:$0xff]
    %v4151 = vld [vmem:[#allocation7 + $0x518] sm:$0xff]
    %v4152 = vld [vmem:[#allocation7 + $0x520] sm:$0xff]
    %v4153 = vld [vmem:[#allocation7 + $0x528] sm:$0xff]
    %v4154 = vld [vmem:[#allocation7 + $0x530] sm:$0xff]
    %v4155 = vld [vmem:[#allocation7 + $0x538] sm:$0xff]
    %v4156 = vld [vmem:[#allocation7 + $0x540] sm:$0xff]
    %v4157 = vld [vmem:[#allocation7 + $0x548] sm:$0xff]
    %v4158 = vld [vmem:[#allocation7 + $0x550] sm:$0xff]
    %v4159 = vld [vmem:[#allocation7 + $0x558] sm:$0xff]
    %v4160 = vld [vmem:[#allocation7 + $0x560] sm:$0xff]
    %v4161 = vld [vmem:[#allocation7 + $0x568] sm:$0xff]
    %v4162 = vld [vmem:[#allocation7 + $0x570] sm:$0xff]
    %v4163 = vld [vmem:[#allocation7 + $0x578] sm:$0xff]
    %v4164 = vld [vmem:[#allocation7 + $0x580] sm:$0xff]
    %v4165 = vld [vmem:[#allocation7 + $0x588] sm:$0xff]
    %v4166 = vld [vmem:[#allocation7 + $0x590] sm:$0xff]
    %v4167 = vld [vmem:[#allocation7 + $0x598] sm:$0xff]
    %v4168 = vld [vmem:[#allocation7 + $0x5a0] sm:$0xff]
    %v4169 = vld [vmem:[#allocation7 + $0x5a8] sm:$0xff]
    %v4170 = vld [vmem:[#allocation7 + $0x5b0] sm:$0xff]
    %v4171 = vld [vmem:[#allocation7 + $0x5b8] sm:$0xff]
    %v4172 = vld [vmem:[#allocation7 + $0x5c0] sm:$0xff]
    %v4173 = vld [vmem:[#allocation7 + $0x5c8] sm:$0xff]
    %v4174 = vld [vmem:[#allocation7 + $0x5d0] sm:$0xff]
    %v4175 = vld [vmem:[#allocation7 + $0x5d8] sm:$0xff]
    %v4176 = vld [vmem:[#allocation7 + $0x5e0] sm:$0xff]
    %v4177 = vld [vmem:[#allocation7 + $0x5e8] sm:$0xff]
    %v4178 = vld [vmem:[#allocation7 + $0x5f0] sm:$0xff]
    %v4179 = vld [vmem:[#allocation7 + $0x5f8] sm:$0xff]
    %v4180 = vld [vmem:[#allocation7 + $0x600] sm:$0xff]
    %v4181 = vld [vmem:[#allocation7 + $0x608] sm:$0xff]
    %v4182 = vld [vmem:[#allocation7 + $0x610] sm:$0xff]
    %v4183 = vld [vmem:[#allocation7 + $0x618] sm:$0xff]
    %v4184 = vld [vmem:[#allocation7 + $0x620] sm:$0xff]
    %v4185 = vld [vmem:[#allocation7 + $0x628] sm:$0xff]
    %v4186 = vld [vmem:[#allocation7 + $0x630] sm:$0xff]
    %v4187 = vld [vmem:[#allocation7 + $0x638] sm:$0xff]
    %v4188 = vld [vmem:[#allocation7 + $0x640] sm:$0xff]
    %v4189 = vld [vmem:[#allocation7 + $0x648] sm:$0xff]
    %v4190 = vld [vmem:[#allocation7 + $0x650] sm:$0xff]
    %v4191 = vld [vmem:[#allocation7 + $0x658] sm:$0xff]
    %v4192 = vld [vmem:[#allocation7 + $0x660] sm:$0xff]
    %v4193 = vld [vmem:[#allocation7 + $0x668] sm:$0xff]
    %v4194 = vld [vmem:[#allocation7 + $0x670] sm:$0xff]
    %v4195 = vld [vmem:[#allocation7 + $0x678] sm:$0xff]
    %v4196 = vld [vmem:[#allocation7 + $0x680] sm:$0xff]
    %v4197 = vld [vmem:[#allocation7 + $0x688] sm:$0xff]
    %v4198 = vld [vmem:[#allocation7 + $0x690] sm:$0xff]
    %v4199 = vld [vmem:[#allocation7 + $0x698] sm:$0xff]
    %v4200 = vld [vmem:[#allocation7 + $0x6a0] sm:$0xff]
    %v4201 = vld [vmem:[#allocation7 + $0x6a8] sm:$0xff]
    %v4202 = vld [vmem:[#allocation7 + $0x6b0] sm:$0xff]
    %v4203 = vld [vmem:[#allocation7 + $0x6b8] sm:$0xff]
    %v4204 = vld [vmem:[#allocation7 + $0x6c0] sm:$0xff]
    %v4205 = vld [vmem:[#allocation7 + $0x6c8] sm:$0xff]
    %v4206 = vld [vmem:[#allocation7 + $0x6d0] sm:$0xff]
    %v4207 = vld [vmem:[#allocation7 + $0x6d8] sm:$0xff]
    %v4208 = vld [vmem:[#allocation7 + $0x6e0] sm:$0xff]
    %v4209 = vld [vmem:[#allocation7 + $0x6e8] sm:$0xff]
    %v4210 = vld [vmem:[#allocation7 + $0x6f0] sm:$0xff]
    %v4211 = vld [vmem:[#allocation7 + $0x6f8] sm:$0xff]
    %v4212 = vld [vmem:[#allocation7 + $0x700] sm:$0xff]
    %v4213 = vld [vmem:[#allocation7 + $0x708] sm:$0xff]
    %v4214 = vld [vmem:[#allocation7 + $0x710] sm:$0xff]
    %v4215 = vld [vmem:[#allocation7 + $0x718] sm:$0xff]
    %v4216 = vld [vmem:[#allocation7 + $0x720] sm:$0xff]
    %v4217 = vld [vmem:[#allocation7 + $0x728] sm:$0xff]
    %v4218 = vld [vmem:[#allocation7 + $0x730] sm:$0xff]
    %v4219 = vld [vmem:[#allocation7 + $0x738] sm:$0xff]
    %v4220 = vld [vmem:[#allocation7 + $0x740] sm:$0xff]
    %v4221 = vld [vmem:[#allocation7 + $0x748] sm:$0xff]
    %v4222 = vld [vmem:[#allocation7 + $0x750] sm:$0xff]
    %v4223 = vld [vmem:[#allocation7 + $0x758] sm:$0xff]
    %v4224 = vld [vmem:[#allocation7 + $0x760] sm:$0xff]
    %v4225 = vld [vmem:[#allocation7 + $0x768] sm:$0xff]
    %v4226 = vld [vmem:[#allocation7 + $0x770] sm:$0xff]
    %v4227 = vld [vmem:[#allocation7 + $0x778] sm:$0xff]
    %v4228 = vld [vmem:[#allocation7 + $0x780] sm:$0xff]
    %v4229 = vld [vmem:[#allocation7 + $0x788] sm:$0xff]
    %v4230 = vld [vmem:[#allocation7 + $0x790] sm:$0xff]
    %v4231 = vld [vmem:[#allocation7 + $0x798] sm:$0xff]
    %v4232 = vld [vmem:[#allocation7 + $0x7a0] sm:$0xff]
    %v4233 = vld [vmem:[#allocation7 + $0x7a8] sm:$0xff]
    %v4234 = vld [vmem:[#allocation7 + $0x7b0] sm:$0xff]
    %v4235 = vld [vmem:[#allocation7 + $0x7b8] sm:$0xff]
    %v4236 = vld [vmem:[#allocation7 + $0x7c0] sm:$0xff]
    %v4237 = vld [vmem:[#allocation7 + $0x7c8] sm:$0xff]
    %v4238 = vld [vmem:[#allocation7 + $0x7d0] sm:$0xff]
    %v4239 = vld [vmem:[#allocation7 + $0x7d8] sm:$0xff]
    %v4240 = vld [vmem:[#allocation7 + $0x7e0] sm:$0xff]
    %v4241 = vld [vmem:[#allocation7 + $0x7e8] sm:$0xff]
    %v4242 = vld [vmem:[#allocation7 + $0x7f0] sm:$0xff]
    %v4243 = vld [vmem:[#allocation7 + $0x7f8] sm:$0xff]
    %v4244 = vld [vmem:[#allocation7 + $0x800] sm:$0xff]
    %v4245 = vld [vmem:[#allocation7 + $0x808] sm:$0xff]
    %v4246 = vld [vmem:[#allocation7 + $0x810] sm:$0xff]
    %v4247 = vld [vmem:[#allocation7 + $0x818] sm:$0xff]
    %v4248 = vld [vmem:[#allocation7 + $0x820] sm:$0xff]
    %v4249 = vld [vmem:[#allocation7 + $0x828] sm:$0xff]
    %v4250 = vld [vmem:[#allocation7 + $0x830] sm:$0xff]
    %v4251 = vld [vmem:[#allocation7 + $0x838] sm:$0xff]
    %v4252 = vld [vmem:[#allocation7 + $0x840] sm:$0xff]
    %v4253 = vld [vmem:[#allocation7 + $0x848] sm:$0xff]
    %v4254 = vld [vmem:[#allocation7 + $0x850] sm:$0xff]
    %v4255 = vld [vmem:[#allocation7 + $0x858] sm:$0xff]
    %v4256 = vld [vmem:[#allocation7 + $0x860] sm:$0xff]
    %v4257 = vld [vmem:[#allocation7 + $0x868] sm:$0xff]
    %v4258 = vld [vmem:[#allocation7 + $0x870] sm:$0xff]
    %v4259 = vld [vmem:[#allocation7 + $0x878] sm:$0xff]
    %v4260 = vld [vmem:[#allocation7 + $0x880] sm:$0xff]
    %v4261 = vld [vmem:[#allocation7 + $0x888] sm:$0xff]
    %v4262 = vld [vmem:[#allocation7 + $0x890] sm:$0xff]
    %v4263 = vld [vmem:[#allocation7 + $0x898] sm:$0xff]
    %v4264 = vld [vmem:[#allocation7 + $0x8a0] sm:$0xff]
    %v4265 = vld [vmem:[#allocation7 + $0x8a8] sm:$0xff]
    %v4266 = vld [vmem:[#allocation7 + $0x8b0] sm:$0xff]
    %v4267 = vld [vmem:[#allocation7 + $0x8b8] sm:$0xff]
    %v4268 = vld [vmem:[#allocation7 + $0x8c0] sm:$0xff]
    %v4269 = vld [vmem:[#allocation7 + $0x8c8] sm:$0xff]
    %v4270 = vld [vmem:[#allocation7 + $0x8d0] sm:$0xff]
    %v4271 = vld [vmem:[#allocation7 + $0x8d8] sm:$0xff]
    %v4272 = vld [vmem:[#allocation7 + $0x8e0] sm:$0xff]
    %v4273 = vld [vmem:[#allocation7 + $0x8e8] sm:$0xff]
    %v4274 = vld [vmem:[#allocation7 + $0x8f0] sm:$0xff]
    %v4275 = vld [vmem:[#allocation7 + $0x8f8] sm:$0xff]
    %v4276 = vld [vmem:[#allocation7 + $0x900] sm:$0xff]
    %v4277 = vld [vmem:[#allocation7 + $0x908] sm:$0xff]
    %v4278 = vld [vmem:[#allocation7 + $0x910] sm:$0xff]
    %v4279 = vld [vmem:[#allocation7 + $0x918] sm:$0xff]
    %v4280 = vld [vmem:[#allocation7 + $0x920] sm:$0xff]
    %v4281 = vld [vmem:[#allocation7 + $0x928] sm:$0xff]
    %v4282 = vld [vmem:[#allocation7 + $0x930] sm:$0xff]
    %v4283 = vld [vmem:[#allocation7 + $0x938] sm:$0xff]
    %v4284 = vld [vmem:[#allocation7 + $0x940] sm:$0xff]
    %v4285 = vld [vmem:[#allocation7 + $0x948] sm:$0xff]
    %v4286 = vld [vmem:[#allocation7 + $0x950] sm:$0xff]
    %v4287 = vld [vmem:[#allocation7 + $0x958] sm:$0xff]
    %v4288 = vld [vmem:[#allocation7 + $0x960] sm:$0xff]
    %v4289 = vld [vmem:[#allocation7 + $0x968] sm:$0xff]
    %v4290 = vld [vmem:[#allocation7 + $0x970] sm:$0xff]
    %v4291 = vld [vmem:[#allocation7 + $0x978] sm:$0xff]
    %v4292 = vld [vmem:[#allocation7 + $0x980] sm:$0xff]
    %v4293 = vld [vmem:[#allocation7 + $0x988] sm:$0xff]
    %v4294 = vld [vmem:[#allocation7 + $0x990] sm:$0xff]
    %v4295 = vld [vmem:[#allocation7 + $0x998] sm:$0xff]
    %v4296 = vld [vmem:[#allocation7 + $0x9a0] sm:$0xff]
    %v4297 = vld [vmem:[#allocation7 + $0x9a8] sm:$0xff]
    %v4298 = vld [vmem:[#allocation7 + $0x9b0] sm:$0xff]
    %v4299 = vld [vmem:[#allocation7 + $0x9b8] sm:$0xff]
    %v4300 = vld [vmem:[#allocation7 + $0x9c0] sm:$0xff]
    %v4301 = vld [vmem:[#allocation7 + $0x9c8] sm:$0xff]
    %v4302 = vld [vmem:[#allocation7 + $0x9d0] sm:$0xff]
    %v4303 = vld [vmem:[#allocation7 + $0x9d8] sm:$0xff]
    %v4304 = vld [vmem:[#allocation7 + $0x9e0] sm:$0xff]
    %v4305 = vld [vmem:[#allocation7 + $0x9e8] sm:$0xff]
    %v4306 = vld [vmem:[#allocation7 + $0x9f0] sm:$0xff]
    %v4307 = vld [vmem:[#allocation7 + $0x9f8] sm:$0xff]
    %v4308 = vld [vmem:[#allocation7 + $0xa00] sm:$0xff]
    %v4309 = vld [vmem:[#allocation7 + $0xa08] sm:$0xff]
    %v4310 = vld [vmem:[#allocation7 + $0xa10] sm:$0xff]
    %v4311 = vld [vmem:[#allocation7 + $0xa18] sm:$0xff]
    %v4312 = vld [vmem:[#allocation7 + $0xa20] sm:$0xff]
    %v4313 = vld [vmem:[#allocation7 + $0xa28] sm:$0xff]
    %v4314 = vld [vmem:[#allocation7 + $0xa30] sm:$0xff]
    %v4315 = vld [vmem:[#allocation7 + $0xa38] sm:$0xff]
    %v4316 = vld [vmem:[#allocation7 + $0xa40] sm:$0xff]
    %v4317 = vld [vmem:[#allocation7 + $0xa48] sm:$0xff]
    %v4318 = vld [vmem:[#allocation7 + $0xa50] sm:$0xff]
    %v4319 = vld [vmem:[#allocation7 + $0xa58] sm:$0xff]
    %v4320 = vld [vmem:[#allocation7 + $0xa60] sm:$0xff]
    %v4321 = vld [vmem:[#allocation7 + $0xa68] sm:$0xff]
    %v4322 = vld [vmem:[#allocation7 + $0xa70] sm:$0xff]
    %v4323 = vld [vmem:[#allocation7 + $0xa78] sm:$0xff]
    %v4324 = vld [vmem:[#allocation7 + $0xa80] sm:$0xff]
    %v4325 = vld [vmem:[#allocation7 + $0xa88] sm:$0xff]
    %v4326 = vld [vmem:[#allocation7 + $0xa90] sm:$0xff]
    %v4327 = vld [vmem:[#allocation7 + $0xa98] sm:$0xff]
    %v4328 = vld [vmem:[#allocation7 + $0xaa0] sm:$0xff]
    %v4329 = vld [vmem:[#allocation7 + $0xaa8] sm:$0xff]
    %v4330 = vld [vmem:[#allocation7 + $0xab0] sm:$0xff]
    %v4331 = vld [vmem:[#allocation7 + $0xab8] sm:$0xff]
    %v4332 = vld [vmem:[#allocation7 + $0xac0] sm:$0xff]
    %v4333 = vld [vmem:[#allocation7 + $0xac8] sm:$0xff]
    %v4334 = vld [vmem:[#allocation7 + $0xad0] sm:$0xff]
    %v4335 = vld [vmem:[#allocation7 + $0xad8] sm:$0xff]
    %v4336 = vld [vmem:[#allocation7 + $0xae0] sm:$0xff]
    %v4337 = vld [vmem:[#allocation7 + $0xae8] sm:$0xff]
    %v4338 = vld [vmem:[#allocation7 + $0xaf0] sm:$0xff]
    %v4339 = vld [vmem:[#allocation7 + $0xaf8] sm:$0xff]
    %v4340 = vld [vmem:[#allocation7 + $0xb00] sm:$0xff]
    %v4341 = vld [vmem:[#allocation7 + $0xb08] sm:$0xff]
    %v4342 = vld [vmem:[#allocation7 + $0xb10] sm:$0xff]
    %v4343 = vld [vmem:[#allocation7 + $0xb18] sm:$0xff]
    %v4344 = vld [vmem:[#allocation7 + $0xb20] sm:$0xff]
    %v4345 = vld [vmem:[#allocation7 + $0xb28] sm:$0xff]
    %v4346 = vld [vmem:[#allocation7 + $0xb30] sm:$0xff]
    %v4347 = vld [vmem:[#allocation7 + $0xb38] sm:$0xff]
    %v4348 = vld [vmem:[#allocation7 + $0xb40] sm:$0xff]
    %v4349 = vld [vmem:[#allocation7 + $0xb48] sm:$0xff]
    %v4350 = vld [vmem:[#allocation7 + $0xb50] sm:$0xff]
    %v4351 = vld [vmem:[#allocation7 + $0xb58] sm:$0xff]
    %v4352 = vld [vmem:[#allocation7 + $0xb60] sm:$0xff]
    %v4353 = vld [vmem:[#allocation7 + $0xb68] sm:$0xff]
    %v4354 = vld [vmem:[#allocation7 + $0xb70] sm:$0xff]
    %v4355 = vld [vmem:[#allocation7 + $0xb78] sm:$0xff]
    %v4356 = vld [vmem:[#allocation7 + $0xb80] sm:$0xff]
    %v4357 = vld [vmem:[#allocation7 + $0xb88] sm:$0xff]
    %v4358 = vld [vmem:[#allocation7 + $0xb90] sm:$0xff]
    %v4359 = vld [vmem:[#allocation7 + $0xb98] sm:$0xff]
    %v4360 = vld [vmem:[#allocation7 + $0xba0] sm:$0xff]
    %v4361 = vld [vmem:[#allocation7 + $0xba8] sm:$0xff]
    %v4362 = vld [vmem:[#allocation7 + $0xbb0] sm:$0xff]
    %v4363 = vld [vmem:[#allocation7 + $0xbb8] sm:$0xff]
    %v4364 = vld [vmem:[#allocation7 + $0xbc0] sm:$0xff]
    %v4365 = vld [vmem:[#allocation7 + $0xbc8] sm:$0xff]
    %v4366 = vld [vmem:[#allocation7 + $0xbd0] sm:$0xff]
    %v4367 = vld [vmem:[#allocation7 + $0xbd8] sm:$0xff]
    %v4368 = vld [vmem:[#allocation7 + $0xbe0] sm:$0xff]
    %v4369 = vld [vmem:[#allocation7 + $0xbe8] sm:$0xff]
    %v4370 = vld [vmem:[#allocation7 + $0xbf0] sm:$0xff]
    %v4371 = vld [vmem:[#allocation7 + $0xbf8] sm:$0xff]
    %v4372 = vld [vmem:[#allocation7 + $0xc00] sm:$0xff]
    %v4373 = vld [vmem:[#allocation7 + $0xc08] sm:$0xff]
    %v4374 = vld [vmem:[#allocation7 + $0xc10] sm:$0xff]
    %v4375 = vld [vmem:[#allocation7 + $0xc18] sm:$0xff]
    %v4376 = vld [vmem:[#allocation7 + $0xc20] sm:$0xff]
    %v4377 = vld [vmem:[#allocation7 + $0xc28] sm:$0xff]
    %v4378 = vld [vmem:[#allocation7 + $0xc30] sm:$0xff]
    %v4379 = vld [vmem:[#allocation7 + $0xc38] sm:$0xff]
    %v4380 = vld [vmem:[#allocation7 + $0xc40] sm:$0xff]
    %v4381 = vld [vmem:[#allocation7 + $0xc48] sm:$0xff]
    %v4382 = vld [vmem:[#allocation7 + $0xc50] sm:$0xff]
    %v4383 = vld [vmem:[#allocation7 + $0xc58] sm:$0xff]
    %v4384 = vld [vmem:[#allocation7 + $0xc60] sm:$0xff]
    %v4385 = vld [vmem:[#allocation7 + $0xc68] sm:$0xff]
    %v4386 = vld [vmem:[#allocation7 + $0xc70] sm:$0xff]
    %v4387 = vld [vmem:[#allocation7 + $0xc78] sm:$0xff]
    %v4388 = vld [vmem:[#allocation7 + $0xc80] sm:$0xff]
    %v4389 = vld [vmem:[#allocation7 + $0xc88] sm:$0xff]
    %v4390 = vld [vmem:[#allocation7 + $0xc90] sm:$0xff]
    %v4391 = vld [vmem:[#allocation7 + $0xc98] sm:$0xff]
    %v4392 = vld [vmem:[#allocation7 + $0xca0] sm:$0xff]
    %v4393 = vld [vmem:[#allocation7 + $0xca8] sm:$0xff]
    %v4394 = vld [vmem:[#allocation7 + $0xcb0] sm:$0xff]
    %v4395 = vld [vmem:[#allocation7 + $0xcb8] sm:$0xff]
    %v4396 = vld [vmem:[#allocation7 + $0xcc0] sm:$0xff]
    %v4397 = vld [vmem:[#allocation7 + $0xcc8] sm:$0xff]
    %v4398 = vld [vmem:[#allocation7 + $0xcd0] sm:$0xff]
    %v4399 = vld [vmem:[#allocation7 + $0xcd8] sm:$0xff]
    %v4400 = vld [vmem:[#allocation7 + $0xce0] sm:$0xff]
    %v4401 = vld [vmem:[#allocation7 + $0xce8] sm:$0xff]
    %v4402 = vld [vmem:[#allocation7 + $0xcf0] sm:$0xff]
    %v4403 = vld [vmem:[#allocation7 + $0xcf8] sm:$0xff]
    %v4404 = vld [vmem:[#allocation7 + $0xd00] sm:$0xff]
    %v4405 = vld [vmem:[#allocation7 + $0xd08] sm:$0xff]
    %v4406 = vld [vmem:[#allocation7 + $0xd10] sm:$0xff]
    %v4407 = vld [vmem:[#allocation7 + $0xd18] sm:$0xff]
    %v4408 = vld [vmem:[#allocation7 + $0xd20] sm:$0xff]
    %v4409 = vld [vmem:[#allocation7 + $0xd28] sm:$0xff]
    %v4410 = vld [vmem:[#allocation7 + $0xd30] sm:$0xff]
    %v4411 = vld [vmem:[#allocation7 + $0xd38] sm:$0xff]
    %v4412 = vld [vmem:[#allocation7 + $0xd40] sm:$0xff]
    %v4413 = vld [vmem:[#allocation7 + $0xd48] sm:$0xff]
    %v4414 = vld [vmem:[#allocation7 + $0xd50] sm:$0xff]
    %v4415 = vld [vmem:[#allocation7 + $0xd58] sm:$0xff]
    %v4416 = vld [vmem:[#allocation7 + $0xd60] sm:$0xff]
    %v4417 = vld [vmem:[#allocation7 + $0xd68] sm:$0xff]
    %v4418 = vld [vmem:[#allocation7 + $0xd70] sm:$0xff]
    %v4419 = vld [vmem:[#allocation7 + $0xd78] sm:$0xff]
    %v4420 = vld [vmem:[#allocation7 + $0xd80] sm:$0xff]
    %v4421 = vld [vmem:[#allocation7 + $0xd88] sm:$0xff]
    %v4422 = vld [vmem:[#allocation7 + $0xd90] sm:$0xff]
    %v4423 = vld [vmem:[#allocation7 + $0xd98] sm:$0xff]
    %v4424 = vld [vmem:[#allocation7 + $0xda0] sm:$0xff]
    %v4425 = vld [vmem:[#allocation7 + $0xda8] sm:$0xff]
    %v4426 = vld [vmem:[#allocation7 + $0xdb0] sm:$0xff]
    %v4427 = vld [vmem:[#allocation7 + $0xdb8] sm:$0xff]
    %v4428 = vld [vmem:[#allocation7 + $0xdc0] sm:$0xff]
    %v4429 = vld [vmem:[#allocation7 + $0xdc8] sm:$0xff]
    %v4430 = vld [vmem:[#allocation7 + $0xdd0] sm:$0xff]
    %v4431 = vld [vmem:[#allocation7 + $0xdd8] sm:$0xff]
    %v4432 = vld [vmem:[#allocation7 + $0xde0] sm:$0xff]
    %v4433 = vld [vmem:[#allocation7 + $0xde8] sm:$0xff]
    %v4434 = vld [vmem:[#allocation7 + $0xdf0] sm:$0xff]
    %v4435 = vld [vmem:[#allocation7 + $0xdf8] sm:$0xff]
    %v4436 = vld [vmem:[#allocation7 + $0xe00] sm:$0xff]
    %v4437 = vld [vmem:[#allocation7 + $0xe08] sm:$0xff]
    %v4438 = vld [vmem:[#allocation7 + $0xe10] sm:$0xff]
    %v4439 = vld [vmem:[#allocation7 + $0xe18] sm:$0xff]
    %v4440 = vld [vmem:[#allocation7 + $0xe20] sm:$0xff]
    %v4441 = vld [vmem:[#allocation7 + $0xe28] sm:$0xff]
    %v4442 = vld [vmem:[#allocation7 + $0xe30] sm:$0xff]
    %v4443 = vld [vmem:[#allocation7 + $0xe38] sm:$0xff]
    %v4444 = vld [vmem:[#allocation7 + $0xe40] sm:$0xff]
    %v4445 = vld [vmem:[#allocation7 + $0xe48] sm:$0xff]
    %v4446 = vld [vmem:[#allocation7 + $0xe50] sm:$0xff]
    %v4447 = vld [vmem:[#allocation7 + $0xe58] sm:$0xff]
    %v4448 = vld [vmem:[#allocation7 + $0xe60] sm:$0xff]
    %v4449 = vld [vmem:[#allocation7 + $0xe68] sm:$0xff]
    %v4450 = vld [vmem:[#allocation7 + $0xe70] sm:$0xff]
    %v4451 = vld [vmem:[#allocation7 + $0xe78] sm:$0xff]
    %v4452 = vld [vmem:[#allocation7 + $0xe80] sm:$0xff]
    %v4453 = vld [vmem:[#allocation7 + $0xe88] sm:$0xff]
    %v4454 = vld [vmem:[#allocation7 + $0xe90] sm:$0xff]
    %v4455 = vld [vmem:[#allocation7 + $0xe98] sm:$0xff]
    %v4456 = vld [vmem:[#allocation7 + $0xea0] sm:$0xff]
    %v4457 = vld [vmem:[#allocation7 + $0xea8] sm:$0xff]
    %v4458 = vld [vmem:[#allocation7 + $0xeb0] sm:$0xff]
    %v4459 = vld [vmem:[#allocation7 + $0xeb8] sm:$0xff]
    %v4460 = vld [vmem:[#allocation7 + $0xec0] sm:$0xff]
    %v4461 = vld [vmem:[#allocation7 + $0xec8] sm:$0xff]
    %v4462 = vld [vmem:[#allocation7 + $0xed0] sm:$0xff]
    %v4463 = vld [vmem:[#allocation7 + $0xed8] sm:$0xff]
    %v4464 = vld [vmem:[#allocation7 + $0xee0] sm:$0xff]
    %v4465 = vld [vmem:[#allocation7 + $0xee8] sm:$0xff]
    %v4466 = vld [vmem:[#allocation7 + $0xef0] sm:$0xff]
    %v4467 = vld [vmem:[#allocation7 + $0xef8] sm:$0xff]
    %v4468 = vld [vmem:[#allocation7 + $0xf00] sm:$0xff]
    %v4469 = vld [vmem:[#allocation7 + $0xf08] sm:$0xff]
    %v4470 = vld [vmem:[#allocation7 + $0xf10] sm:$0xff]
    %v4471 = vld [vmem:[#allocation7 + $0xf18] sm:$0xff]
    %v4472 = vld [vmem:[#allocation7 + $0xf20] sm:$0xff]
    %v4473 = vld [vmem:[#allocation7 + $0xf28] sm:$0xff]
    %v4474 = vld [vmem:[#allocation7 + $0xf30] sm:$0xff]
    %v4475 = vld [vmem:[#allocation7 + $0xf38] sm:$0xff]
    %v4476 = vld [vmem:[#allocation7 + $0xf40] sm:$0xff]
    %v4477 = vld [vmem:[#allocation7 + $0xf48] sm:$0xff]
    %v4478 = vld [vmem:[#allocation7 + $0xf50] sm:$0xff]
    %v4479 = vld [vmem:[#allocation7 + $0xf58] sm:$0xff]
    %v4480 = vld [vmem:[#allocation7 + $0xf60] sm:$0xff]
    %v4481 = vld [vmem:[#allocation7 + $0xf68] sm:$0xff]
    %v4482 = vld [vmem:[#allocation7 + $0xf70] sm:$0xff]
    %v4483 = vld [vmem:[#allocation7 + $0xf78] sm:$0xff]
    %v4484 = vld [vmem:[#allocation7 + $0xf80] sm:$0xff]
    %v4485 = vld [vmem:[#allocation7 + $0xf88] sm:$0xff]
    %v4486 = vld [vmem:[#allocation7 + $0xf90] sm:$0xff]
    %v4487 = vld [vmem:[#allocation7 + $0xf98] sm:$0xff]
    %v4488 = vld [vmem:[#allocation7 + $0xfa0] sm:$0xff]
    %v4489 = vld [vmem:[#allocation7 + $0xfa8] sm:$0xff]
    %v4490 = vld [vmem:[#allocation7 + $0xfb0] sm:$0xff]
    %v4491 = vld [vmem:[#allocation7 + $0xfb8] sm:$0xff]
    %v4492 = vld [vmem:[#allocation7 + $0xfc0] sm:$0xff]
    %v4493 = vld [vmem:[#allocation7 + $0xfc8] sm:$0xff]
    %v4494 = vld [vmem:[#allocation7 + $0xfd0] sm:$0xff]
    %v4495 = vld [vmem:[#allocation7 + $0xfd8] sm:$0xff]
    %v4496 = vld [vmem:[#allocation7 + $0xfe0] sm:$0xff]
    %v4497 = vld [vmem:[#allocation7 + $0xfe8] sm:$0xff]
    %v4498 = vld [vmem:[#allocation7 + $0xff0] sm:$0xff]
    %v4499 = vld [vmem:[#allocation7 + $0xff8] sm:$0xff]
    %v4500 = vld [vmem:[#allocation8] sm:$0xf]
    %v4502 = vlaneseq
    %v4503 = vshrl.u32 %v4502, 7
    %v4504 = vsub.s32 0, %v4503
    %v4505 = vrot.slane %v4500, %v4504
    %v4506 = vlaneseq
    %v4507 = vshrl.u32 %v4506, 7
    %v4508 = vsub.s32 1, %v4507
    %v4509 = vrot.slane %v4500, %v4508
    %v4510 = vlaneseq
    %v4511 = vshrl.u32 %v4510, 7
    %v4512 = vsub.s32 2, %v4511
    %v4513 = vrot.slane %v4500, %v4512
    %v4514 = vlaneseq
    %v4515 = vshrl.u32 %v4514, 7
    %v4516 = vsub.s32 3, %v4515
    %v4517 = vrot.slane %v4500, %v4516
    %v5034 = vunpack.c.l.b16 %v3988
    %v5035 = vunpack.c.h.b16 %v3988
    %v5036 = vunpack.c.l.b16 %v3989
    %v5037 = vunpack.c.h.b16 %v3989
    %v5038 = vunpack.c.l.b16 %v3990
    %v5039 = vunpack.c.h.b16 %v3990
    %v5040 = vunpack.c.l.b16 %v3991
    %v5041 = vunpack.c.h.b16 %v3991
    %v5042 = vunpack.c.l.b16 %v3992
    %v5043 = vunpack.c.h.b16 %v3992
    %v5044 = vunpack.c.l.b16 %v3993
    %v5045 = vunpack.c.h.b16 %v3993
    %v5046 = vunpack.c.l.b16 %v3994
    %v5047 = vunpack.c.h.b16 %v3994
    %v5048 = vunpack.c.l.b16 %v3995
    %v5049 = vunpack.c.h.b16 %v3995
    %v5050 = vunpack.c.l.b16 %v3996
    %v5051 = vunpack.c.h.b16 %v3996
    %v5052 = vunpack.c.l.b16 %v3997
    %v5053 = vunpack.c.h.b16 %v3997
    %v5054 = vunpack.c.l.b16 %v3998
    %v5055 = vunpack.c.h.b16 %v3998
    %v5056 = vunpack.c.l.b16 %v3999
    %v5057 = vunpack.c.h.b16 %v3999
    %v5058 = vunpack.c.l.b16 %v4000
    %v5059 = vunpack.c.h.b16 %v4000
    %v5060 = vunpack.c.l.b16 %v4001
    %v5061 = vunpack.c.h.b16 %v4001
    %v5062 = vunpack.c.l.b16 %v4002
    %v5063 = vunpack.c.h.b16 %v4002
    %v5064 = vunpack.c.l.b16 %v4003
    %v5065 = vunpack.c.h.b16 %v4003
    %v5066 = vunpack.c.l.b16 %v4004
    %v5067 = vunpack.c.h.b16 %v4004
    %v5068 = vunpack.c.l.b16 %v4005
    %v5069 = vunpack.c.h.b16 %v4005
    %v5070 = vunpack.c.l.b16 %v4006
    %v5071 = vunpack.c.h.b16 %v4006
    %v5072 = vunpack.c.l.b16 %v4007
    %v5073 = vunpack.c.h.b16 %v4007
    %v5074 = vunpack.c.l.b16 %v4008
    %v5075 = vunpack.c.h.b16 %v4008
    %v5076 = vunpack.c.l.b16 %v4009
    %v5077 = vunpack.c.h.b16 %v4009
    %v5078 = vunpack.c.l.b16 %v4010
    %v5079 = vunpack.c.h.b16 %v4010
    %v5080 = vunpack.c.l.b16 %v4011
    %v5081 = vunpack.c.h.b16 %v4011
    %v5082 = vunpack.c.l.b16 %v4012
    %v5083 = vunpack.c.h.b16 %v4012
    %v5084 = vunpack.c.l.b16 %v4013
    %v5085 = vunpack.c.h.b16 %v4013
    %v5086 = vunpack.c.l.b16 %v4014
    %v5087 = vunpack.c.h.b16 %v4014
    %v5088 = vunpack.c.l.b16 %v4015
    %v5089 = vunpack.c.h.b16 %v4015
    %v5090 = vunpack.c.l.b16 %v4016
    %v5091 = vunpack.c.h.b16 %v4016
    %v5092 = vunpack.c.l.b16 %v4017
    %v5093 = vunpack.c.h.b16 %v4017
    %v5094 = vunpack.c.l.b16 %v4018
    %v5095 = vunpack.c.h.b16 %v4018
    %v5096 = vunpack.c.l.b16 %v4019
    %v5097 = vunpack.c.h.b16 %v4019
    %v5098 = vunpack.c.l.b16 %v4020
    %v5099 = vunpack.c.h.b16 %v4020
    %v5100 = vunpack.c.l.b16 %v4021
    %v5101 = vunpack.c.h.b16 %v4021
    %v5102 = vunpack.c.l.b16 %v4022
    %v5103 = vunpack.c.h.b16 %v4022
    %v5104 = vunpack.c.l.b16 %v4023
    %v5105 = vunpack.c.h.b16 %v4023
    %v5106 = vunpack.c.l.b16 %v4024
    %v5107 = vunpack.c.h.b16 %v4024
    %v5108 = vunpack.c.l.b16 %v4025
    %v5109 = vunpack.c.h.b16 %v4025
    %v5110 = vunpack.c.l.b16 %v4026
    %v5111 = vunpack.c.h.b16 %v4026
    %v5112 = vunpack.c.l.b16 %v4027
    %v5113 = vunpack.c.h.b16 %v4027
    %v5114 = vunpack.c.l.b16 %v4028
    %v5115 = vunpack.c.h.b16 %v4028
    %v5116 = vunpack.c.l.b16 %v4029
    %v5117 = vunpack.c.h.b16 %v4029
    %v5118 = vunpack.c.l.b16 %v4030
    %v5119 = vunpack.c.h.b16 %v4030
    %v5120 = vunpack.c.l.b16 %v4031
    %v5121 = vunpack.c.h.b16 %v4031
    %v5122 = vunpack.c.l.b16 %v4032
    %v5123 = vunpack.c.h.b16 %v4032
    %v5124 = vunpack.c.l.b16 %v4033
    %v5125 = vunpack.c.h.b16 %v4033
    %v5126 = vunpack.c.l.b16 %v4034
    %v5127 = vunpack.c.h.b16 %v4034
    %v5128 = vunpack.c.l.b16 %v4035
    %v5129 = vunpack.c.h.b16 %v4035
    %v5130 = vunpack.c.l.b16 %v4036
    %v5131 = vunpack.c.h.b16 %v4036
    %v5132 = vunpack.c.l.b16 %v4037
    %v5133 = vunpack.c.h.b16 %v4037
    %v5134 = vunpack.c.l.b16 %v4038
    %v5135 = vunpack.c.h.b16 %v4038
    %v5136 = vunpack.c.l.b16 %v4039
    %v5137 = vunpack.c.h.b16 %v4039
    %v5138 = vunpack.c.l.b16 %v4040
    %v5139 = vunpack.c.h.b16 %v4040
    %v5140 = vunpack.c.l.b16 %v4041
    %v5141 = vunpack.c.h.b16 %v4041
    %v5142 = vunpack.c.l.b16 %v4042
    %v5143 = vunpack.c.h.b16 %v4042
    %v5144 = vunpack.c.l.b16 %v4043
    %v5145 = vunpack.c.h.b16 %v4043
    %v5146 = vunpack.c.l.b16 %v4044
    %v5147 = vunpack.c.h.b16 %v4044
    %v5148 = vunpack.c.l.b16 %v4045
    %v5149 = vunpack.c.h.b16 %v4045
    %v5150 = vunpack.c.l.b16 %v4046
    %v5151 = vunpack.c.h.b16 %v4046
    %v5152 = vunpack.c.l.b16 %v4047
    %v5153 = vunpack.c.h.b16 %v4047
    %v5154 = vunpack.c.l.b16 %v4048
    %v5155 = vunpack.c.h.b16 %v4048
    %v5156 = vunpack.c.l.b16 %v4049
    %v5157 = vunpack.c.h.b16 %v4049
    %v5158 = vunpack.c.l.b16 %v4050
    %v5159 = vunpack.c.h.b16 %v4050
    %v5160 = vunpack.c.l.b16 %v4051
    %v5161 = vunpack.c.h.b16 %v4051
    %v5162 = vunpack.c.l.b16 %v4052
    %v5163 = vunpack.c.h.b16 %v4052
    %v5164 = vunpack.c.l.b16 %v4053
    %v5165 = vunpack.c.h.b16 %v4053
    %v5166 = vunpack.c.l.b16 %v4054
    %v5167 = vunpack.c.h.b16 %v4054
    %v5168 = vunpack.c.l.b16 %v4055
    %v5169 = vunpack.c.h.b16 %v4055
    %v5170 = vunpack.c.l.b16 %v4056
    %v5171 = vunpack.c.h.b16 %v4056
    %v5172 = vunpack.c.l.b16 %v4057
    %v5173 = vunpack.c.h.b16 %v4057
    %v5174 = vunpack.c.l.b16 %v4058
    %v5175 = vunpack.c.h.b16 %v4058
    %v5176 = vunpack.c.l.b16 %v4059
    %v5177 = vunpack.c.h.b16 %v4059
    %v5178 = vunpack.c.l.b16 %v4060
    %v5179 = vunpack.c.h.b16 %v4060
    %v5180 = vunpack.c.l.b16 %v4061
    %v5181 = vunpack.c.h.b16 %v4061
    %v5182 = vunpack.c.l.b16 %v4062
    %v5183 = vunpack.c.h.b16 %v4062
    %v5184 = vunpack.c.l.b16 %v4063
    %v5185 = vunpack.c.h.b16 %v4063
    %v5186 = vunpack.c.l.b16 %v4064
    %v5187 = vunpack.c.h.b16 %v4064
    %v5188 = vunpack.c.l.b16 %v4065
    %v5189 = vunpack.c.h.b16 %v4065
    %v5190 = vunpack.c.l.b16 %v4066
    %v5191 = vunpack.c.h.b16 %v4066
    %v5192 = vunpack.c.l.b16 %v4067
    %v5193 = vunpack.c.h.b16 %v4067
    %v5194 = vunpack.c.l.b16 %v4068
    %v5195 = vunpack.c.h.b16 %v4068
    %v5196 = vunpack.c.l.b16 %v4069
    %v5197 = vunpack.c.h.b16 %v4069
    %v5198 = vunpack.c.l.b16 %v4070
    %v5199 = vunpack.c.h.b16 %v4070
    %v5200 = vunpack.c.l.b16 %v4071
    %v5201 = vunpack.c.h.b16 %v4071
    %v5202 = vunpack.c.l.b16 %v4072
    %v5203 = vunpack.c.h.b16 %v4072
    %v5204 = vunpack.c.l.b16 %v4073
    %v5205 = vunpack.c.h.b16 %v4073
    %v5206 = vunpack.c.l.b16 %v4074
    %v5207 = vunpack.c.h.b16 %v4074
    %v5208 = vunpack.c.l.b16 %v4075
    %v5209 = vunpack.c.h.b16 %v4075
    %v5210 = vunpack.c.l.b16 %v4076
    %v5211 = vunpack.c.h.b16 %v4076
    %v5212 = vunpack.c.l.b16 %v4077
    %v5213 = vunpack.c.h.b16 %v4077
    %v5214 = vunpack.c.l.b16 %v4078
    %v5215 = vunpack.c.h.b16 %v4078
    %v5216 = vunpack.c.l.b16 %v4079
    %v5217 = vunpack.c.h.b16 %v4079
    %v5218 = vunpack.c.l.b16 %v4080
    %v5219 = vunpack.c.h.b16 %v4080
    %v5220 = vunpack.c.l.b16 %v4081
    %v5221 = vunpack.c.h.b16 %v4081
    %v5222 = vunpack.c.l.b16 %v4082
    %v5223 = vunpack.c.h.b16 %v4082
    %v5224 = vunpack.c.l.b16 %v4083
    %v5225 = vunpack.c.h.b16 %v4083
    %v5226 = vunpack.c.l.b16 %v4084
    %v5227 = vunpack.c.h.b16 %v4084
    %v5228 = vunpack.c.l.b16 %v4085
    %v5229 = vunpack.c.h.b16 %v4085
    %v5230 = vunpack.c.l.b16 %v4086
    %v5231 = vunpack.c.h.b16 %v4086
    %v5232 = vunpack.c.l.b16 %v4087
    %v5233 = vunpack.c.h.b16 %v4087
    %v5234 = vunpack.c.l.b16 %v4088
    %v5235 = vunpack.c.h.b16 %v4088
    %v5236 = vunpack.c.l.b16 %v4089
    %v5237 = vunpack.c.h.b16 %v4089
    %v5238 = vunpack.c.l.b16 %v4090
    %v5239 = vunpack.c.h.b16 %v4090
    %v5240 = vunpack.c.l.b16 %v4091
    %v5241 = vunpack.c.h.b16 %v4091
    %v5242 = vunpack.c.l.b16 %v4092
    %v5243 = vunpack.c.h.b16 %v4092
    %v5244 = vunpack.c.l.b16 %v4093
    %v5245 = vunpack.c.h.b16 %v4093
    %v5246 = vunpack.c.l.b16 %v4094
    %v5247 = vunpack.c.h.b16 %v4094
    %v5248 = vunpack.c.l.b16 %v4095
    %v5249 = vunpack.c.h.b16 %v4095
    %v5250 = vunpack.c.l.b16 %v4096
    %v5251 = vunpack.c.h.b16 %v4096
    %v5252 = vunpack.c.l.b16 %v4097
    %v5253 = vunpack.c.h.b16 %v4097
    %v5254 = vunpack.c.l.b16 %v4098
    %v5255 = vunpack.c.h.b16 %v4098
    %v5256 = vunpack.c.l.b16 %v4099
    %v5257 = vunpack.c.h.b16 %v4099
    %v5258 = vunpack.c.l.b16 %v4100
    %v5259 = vunpack.c.h.b16 %v4100
    %v5260 = vunpack.c.l.b16 %v4101
    %v5261 = vunpack.c.h.b16 %v4101
    %v5262 = vunpack.c.l.b16 %v4102
    %v5263 = vunpack.c.h.b16 %v4102
    %v5264 = vunpack.c.l.b16 %v4103
    %v5265 = vunpack.c.h.b16 %v4103
    %v5266 = vunpack.c.l.b16 %v4104
    %v5267 = vunpack.c.h.b16 %v4104
    %v5268 = vunpack.c.l.b16 %v4105
    %v5269 = vunpack.c.h.b16 %v4105
    %v5270 = vunpack.c.l.b16 %v4106
    %v5271 = vunpack.c.h.b16 %v4106
    %v5272 = vunpack.c.l.b16 %v4107
    %v5273 = vunpack.c.h.b16 %v4107
    %v5274 = vunpack.c.l.b16 %v4108
    %v5275 = vunpack.c.h.b16 %v4108
    %v5276 = vunpack.c.l.b16 %v4109
    %v5277 = vunpack.c.h.b16 %v4109
    %v5278 = vunpack.c.l.b16 %v4110
    %v5279 = vunpack.c.h.b16 %v4110
    %v5280 = vunpack.c.l.b16 %v4111
    %v5281 = vunpack.c.h.b16 %v4111
    %v5282 = vunpack.c.l.b16 %v4112
    %v5283 = vunpack.c.h.b16 %v4112
    %v5284 = vunpack.c.l.b16 %v4113
    %v5285 = vunpack.c.h.b16 %v4113
    %v5286 = vunpack.c.l.b16 %v4114
    %v5287 = vunpack.c.h.b16 %v4114
    %v5288 = vunpack.c.l.b16 %v4115
    %v5289 = vunpack.c.h.b16 %v4115
    %v5290 = vunpack.c.l.b16 %v4116
    %v5291 = vunpack.c.h.b16 %v4116
    %v5292 = vunpack.c.l.b16 %v4117
    %v5293 = vunpack.c.h.b16 %v4117
    %v5294 = vunpack.c.l.b16 %v4118
    %v5295 = vunpack.c.h.b16 %v4118
    %v5296 = vunpack.c.l.b16 %v4119
    %v5297 = vunpack.c.h.b16 %v4119
    %v5298 = vunpack.c.l.b16 %v4120
    %v5299 = vunpack.c.h.b16 %v4120
    %v5300 = vunpack.c.l.b16 %v4121
    %v5301 = vunpack.c.h.b16 %v4121
    %v5302 = vunpack.c.l.b16 %v4122
    %v5303 = vunpack.c.h.b16 %v4122
    %v5304 = vunpack.c.l.b16 %v4123
    %v5305 = vunpack.c.h.b16 %v4123
    %v5306 = vunpack.c.l.b16 %v4124
    %v5307 = vunpack.c.h.b16 %v4124
    %v5308 = vunpack.c.l.b16 %v4125
    %v5309 = vunpack.c.h.b16 %v4125
    %v5310 = vunpack.c.l.b16 %v4126
    %v5311 = vunpack.c.h.b16 %v4126
    %v5312 = vunpack.c.l.b16 %v4127
    %v5313 = vunpack.c.h.b16 %v4127
    %v5314 = vunpack.c.l.b16 %v4128
    %v5315 = vunpack.c.h.b16 %v4128
    %v5316 = vunpack.c.l.b16 %v4129
    %v5317 = vunpack.c.h.b16 %v4129
    %v5318 = vunpack.c.l.b16 %v4130
    %v5319 = vunpack.c.h.b16 %v4130
    %v5320 = vunpack.c.l.b16 %v4131
    %v5321 = vunpack.c.h.b16 %v4131
    %v5322 = vunpack.c.l.b16 %v4132
    %v5323 = vunpack.c.h.b16 %v4132
    %v5324 = vunpack.c.l.b16 %v4133
    %v5325 = vunpack.c.h.b16 %v4133
    %v5326 = vunpack.c.l.b16 %v4134
    %v5327 = vunpack.c.h.b16 %v4134
    %v5328 = vunpack.c.l.b16 %v4135
    %v5329 = vunpack.c.h.b16 %v4135
    %v5330 = vunpack.c.l.b16 %v4136
    %v5331 = vunpack.c.h.b16 %v4136
    %v5332 = vunpack.c.l.b16 %v4137
    %v5333 = vunpack.c.h.b16 %v4137
    %v5334 = vunpack.c.l.b16 %v4138
    %v5335 = vunpack.c.h.b16 %v4138
    %v5336 = vunpack.c.l.b16 %v4139
    %v5337 = vunpack.c.h.b16 %v4139
    %v5338 = vunpack.c.l.b16 %v4140
    %v5339 = vunpack.c.h.b16 %v4140
    %v5340 = vunpack.c.l.b16 %v4141
    %v5341 = vunpack.c.h.b16 %v4141
    %v5342 = vunpack.c.l.b16 %v4142
    %v5343 = vunpack.c.h.b16 %v4142
    %v5344 = vunpack.c.l.b16 %v4143
    %v5345 = vunpack.c.h.b16 %v4143
    %v5346 = vunpack.c.l.b16 %v4144
    %v5347 = vunpack.c.h.b16 %v4144
    %v5348 = vunpack.c.l.b16 %v4145
    %v5349 = vunpack.c.h.b16 %v4145
    %v5350 = vunpack.c.l.b16 %v4146
    %v5351 = vunpack.c.h.b16 %v4146
    %v5352 = vunpack.c.l.b16 %v4147
    %v5353 = vunpack.c.h.b16 %v4147
    %v5354 = vunpack.c.l.b16 %v4148
    %v5355 = vunpack.c.h.b16 %v4148
    %v5356 = vunpack.c.l.b16 %v4149
    %v5357 = vunpack.c.h.b16 %v4149
    %v5358 = vunpack.c.l.b16 %v4150
    %v5359 = vunpack.c.h.b16 %v4150
    %v5360 = vunpack.c.l.b16 %v4151
    %v5361 = vunpack.c.h.b16 %v4151
    %v5362 = vunpack.c.l.b16 %v4152
    %v5363 = vunpack.c.h.b16 %v4152
    %v5364 = vunpack.c.l.b16 %v4153
    %v5365 = vunpack.c.h.b16 %v4153
    %v5366 = vunpack.c.l.b16 %v4154
    %v5367 = vunpack.c.h.b16 %v4154
    %v5368 = vunpack.c.l.b16 %v4155
    %v5369 = vunpack.c.h.b16 %v4155
    %v5370 = vunpack.c.l.b16 %v4156
    %v5371 = vunpack.c.h.b16 %v4156
    %v5372 = vunpack.c.l.b16 %v4157
    %v5373 = vunpack.c.h.b16 %v4157
    %v5374 = vunpack.c.l.b16 %v4158
    %v5375 = vunpack.c.h.b16 %v4158
    %v5376 = vunpack.c.l.b16 %v4159
    %v5377 = vunpack.c.h.b16 %v4159
    %v5378 = vunpack.c.l.b16 %v4160
    %v5379 = vunpack.c.h.b16 %v4160
    %v5380 = vunpack.c.l.b16 %v4161
    %v5381 = vunpack.c.h.b16 %v4161
    %v5382 = vunpack.c.l.b16 %v4162
    %v5383 = vunpack.c.h.b16 %v4162
    %v5384 = vunpack.c.l.b16 %v4163
    %v5385 = vunpack.c.h.b16 %v4163
    %v5386 = vunpack.c.l.b16 %v4164
    %v5387 = vunpack.c.h.b16 %v4164
    %v5388 = vunpack.c.l.b16 %v4165
    %v5389 = vunpack.c.h.b16 %v4165
    %v5390 = vunpack.c.l.b16 %v4166
    %v5391 = vunpack.c.h.b16 %v4166
    %v5392 = vunpack.c.l.b16 %v4167
    %v5393 = vunpack.c.h.b16 %v4167
    %v5394 = vunpack.c.l.b16 %v4168
    %v5395 = vunpack.c.h.b16 %v4168
    %v5396 = vunpack.c.l.b16 %v4169
    %v5397 = vunpack.c.h.b16 %v4169
    %v5398 = vunpack.c.l.b16 %v4170
    %v5399 = vunpack.c.h.b16 %v4170
    %v5400 = vunpack.c.l.b16 %v4171
    %v5401 = vunpack.c.h.b16 %v4171
    %v5402 = vunpack.c.l.b16 %v4172
    %v5403 = vunpack.c.h.b16 %v4172
    %v5404 = vunpack.c.l.b16 %v4173
    %v5405 = vunpack.c.h.b16 %v4173
    %v5406 = vunpack.c.l.b16 %v4174
    %v5407 = vunpack.c.h.b16 %v4174
    %v5408 = vunpack.c.l.b16 %v4175
    %v5409 = vunpack.c.h.b16 %v4175
    %v5410 = vunpack.c.l.b16 %v4176
    %v5411 = vunpack.c.h.b16 %v4176
    %v5412 = vunpack.c.l.b16 %v4177
    %v5413 = vunpack.c.h.b16 %v4177
    %v5414 = vunpack.c.l.b16 %v4178
    %v5415 = vunpack.c.h.b16 %v4178
    %v5416 = vunpack.c.l.b16 %v4179
    %v5417 = vunpack.c.h.b16 %v4179
    %v5418 = vunpack.c.l.b16 %v4180
    %v5419 = vunpack.c.h.b16 %v4180
    %v5420 = vunpack.c.l.b16 %v4181
    %v5421 = vunpack.c.h.b16 %v4181
    %v5422 = vunpack.c.l.b16 %v4182
    %v5423 = vunpack.c.h.b16 %v4182
    %v5424 = vunpack.c.l.b16 %v4183
    %v5425 = vunpack.c.h.b16 %v4183
    %v5426 = vunpack.c.l.b16 %v4184
    %v5427 = vunpack.c.h.b16 %v4184
    %v5428 = vunpack.c.l.b16 %v4185
    %v5429 = vunpack.c.h.b16 %v4185
    %v5430 = vunpack.c.l.b16 %v4186
    %v5431 = vunpack.c.h.b16 %v4186
    %v5432 = vunpack.c.l.b16 %v4187
    %v5433 = vunpack.c.h.b16 %v4187
    %v5434 = vunpack.c.l.b16 %v4188
    %v5435 = vunpack.c.h.b16 %v4188
    %v5436 = vunpack.c.l.b16 %v4189
    %v5437 = vunpack.c.h.b16 %v4189
    %v5438 = vunpack.c.l.b16 %v4190
    %v5439 = vunpack.c.h.b16 %v4190
    %v5440 = vunpack.c.l.b16 %v4191
    %v5441 = vunpack.c.h.b16 %v4191
    %v5442 = vunpack.c.l.b16 %v4192
    %v5443 = vunpack.c.h.b16 %v4192
    %v5444 = vunpack.c.l.b16 %v4193
    %v5445 = vunpack.c.h.b16 %v4193
    %v5446 = vunpack.c.l.b16 %v4194
    %v5447 = vunpack.c.h.b16 %v4194
    %v5448 = vunpack.c.l.b16 %v4195
    %v5449 = vunpack.c.h.b16 %v4195
    %v5450 = vunpack.c.l.b16 %v4196
    %v5451 = vunpack.c.h.b16 %v4196
    %v5452 = vunpack.c.l.b16 %v4197
    %v5453 = vunpack.c.h.b16 %v4197
    %v5454 = vunpack.c.l.b16 %v4198
    %v5455 = vunpack.c.h.b16 %v4198
    %v5456 = vunpack.c.l.b16 %v4199
    %v5457 = vunpack.c.h.b16 %v4199
    %v5458 = vunpack.c.l.b16 %v4200
    %v5459 = vunpack.c.h.b16 %v4200
    %v5460 = vunpack.c.l.b16 %v4201
    %v5461 = vunpack.c.h.b16 %v4201
    %v5462 = vunpack.c.l.b16 %v4202
    %v5463 = vunpack.c.h.b16 %v4202
    %v5464 = vunpack.c.l.b16 %v4203
    %v5465 = vunpack.c.h.b16 %v4203
    %v5466 = vunpack.c.l.b16 %v4204
    %v5467 = vunpack.c.h.b16 %v4204
    %v5468 = vunpack.c.l.b16 %v4205
    %v5469 = vunpack.c.h.b16 %v4205
    %v5470 = vunpack.c.l.b16 %v4206
    %v5471 = vunpack.c.h.b16 %v4206
    %v5472 = vunpack.c.l.b16 %v4207
    %v5473 = vunpack.c.h.b16 %v4207
    %v5474 = vunpack.c.l.b16 %v4208
    %v5475 = vunpack.c.h.b16 %v4208
    %v5476 = vunpack.c.l.b16 %v4209
    %v5477 = vunpack.c.h.b16 %v4209
    %v5478 = vunpack.c.l.b16 %v4210
    %v5479 = vunpack.c.h.b16 %v4210
    %v5480 = vunpack.c.l.b16 %v4211
    %v5481 = vunpack.c.h.b16 %v4211
    %v5482 = vunpack.c.l.b16 %v4212
    %v5483 = vunpack.c.h.b16 %v4212
    %v5484 = vunpack.c.l.b16 %v4213
    %v5485 = vunpack.c.h.b16 %v4213
    %v5486 = vunpack.c.l.b16 %v4214
    %v5487 = vunpack.c.h.b16 %v4214
    %v5488 = vunpack.c.l.b16 %v4215
    %v5489 = vunpack.c.h.b16 %v4215
    %v5490 = vunpack.c.l.b16 %v4216
    %v5491 = vunpack.c.h.b16 %v4216
    %v5492 = vunpack.c.l.b16 %v4217
    %v5493 = vunpack.c.h.b16 %v4217
    %v5494 = vunpack.c.l.b16 %v4218
    %v5495 = vunpack.c.h.b16 %v4218
    %v5496 = vunpack.c.l.b16 %v4219
    %v5497 = vunpack.c.h.b16 %v4219
    %v5498 = vunpack.c.l.b16 %v4220
    %v5499 = vunpack.c.h.b16 %v4220
    %v5500 = vunpack.c.l.b16 %v4221
    %v5501 = vunpack.c.h.b16 %v4221
    %v5502 = vunpack.c.l.b16 %v4222
    %v5503 = vunpack.c.h.b16 %v4222
    %v5504 = vunpack.c.l.b16 %v4223
    %v5505 = vunpack.c.h.b16 %v4223
    %v5506 = vunpack.c.l.b16 %v4224
    %v5507 = vunpack.c.h.b16 %v4224
    %v5508 = vunpack.c.l.b16 %v4225
    %v5509 = vunpack.c.h.b16 %v4225
    %v5510 = vunpack.c.l.b16 %v4226
    %v5511 = vunpack.c.h.b16 %v4226
    %v5512 = vunpack.c.l.b16 %v4227
    %v5513 = vunpack.c.h.b16 %v4227
    %v5514 = vunpack.c.l.b16 %v4228
    %v5515 = vunpack.c.h.b16 %v4228
    %v5516 = vunpack.c.l.b16 %v4229
    %v5517 = vunpack.c.h.b16 %v4229
    %v5518 = vunpack.c.l.b16 %v4230
    %v5519 = vunpack.c.h.b16 %v4230
    %v5520 = vunpack.c.l.b16 %v4231
    %v5521 = vunpack.c.h.b16 %v4231
    %v5522 = vunpack.c.l.b16 %v4232
    %v5523 = vunpack.c.h.b16 %v4232
    %v5524 = vunpack.c.l.b16 %v4233
    %v5525 = vunpack.c.h.b16 %v4233
    %v5526 = vunpack.c.l.b16 %v4234
    %v5527 = vunpack.c.h.b16 %v4234
    %v5528 = vunpack.c.l.b16 %v4235
    %v5529 = vunpack.c.h.b16 %v4235
    %v5530 = vunpack.c.l.b16 %v4236
    %v5531 = vunpack.c.h.b16 %v4236
    %v5532 = vunpack.c.l.b16 %v4237
    %v5533 = vunpack.c.h.b16 %v4237
    %v5534 = vunpack.c.l.b16 %v4238
    %v5535 = vunpack.c.h.b16 %v4238
    %v5536 = vunpack.c.l.b16 %v4239
    %v5537 = vunpack.c.h.b16 %v4239
    %v5538 = vunpack.c.l.b16 %v4240
    %v5539 = vunpack.c.h.b16 %v4240
    %v5540 = vunpack.c.l.b16 %v4241
    %v5541 = vunpack.c.h.b16 %v4241
    %v5542 = vunpack.c.l.b16 %v4242
    %v5543 = vunpack.c.h.b16 %v4242
    %v5544 = vunpack.c.l.b16 %v4243
    %v5545 = vunpack.c.h.b16 %v4243
    %v5546 = vunpack.c.l.b16 %v4244
    %v5547 = vunpack.c.h.b16 %v4244
    %v5548 = vunpack.c.l.b16 %v4245
    %v5549 = vunpack.c.h.b16 %v4245
    %v5550 = vunpack.c.l.b16 %v4246
    %v5551 = vunpack.c.h.b16 %v4246
    %v5552 = vunpack.c.l.b16 %v4247
    %v5553 = vunpack.c.h.b16 %v4247
    %v5554 = vunpack.c.l.b16 %v4248
    %v5555 = vunpack.c.h.b16 %v4248
    %v5556 = vunpack.c.l.b16 %v4249
    %v5557 = vunpack.c.h.b16 %v4249
    %v5558 = vunpack.c.l.b16 %v4250
    %v5559 = vunpack.c.h.b16 %v4250
    %v5560 = vunpack.c.l.b16 %v4251
    %v5561 = vunpack.c.h.b16 %v4251
    %v5562 = vunpack.c.l.b16 %v4252
    %v5563 = vunpack.c.h.b16 %v4252
    %v5564 = vunpack.c.l.b16 %v4253
    %v5565 = vunpack.c.h.b16 %v4253
    %v5566 = vunpack.c.l.b16 %v4254
    %v5567 = vunpack.c.h.b16 %v4254
    %v5568 = vunpack.c.l.b16 %v4255
    %v5569 = vunpack.c.h.b16 %v4255
    %v5570 = vunpack.c.l.b16 %v4256
    %v5571 = vunpack.c.h.b16 %v4256
    %v5572 = vunpack.c.l.b16 %v4257
    %v5573 = vunpack.c.h.b16 %v4257
    %v5574 = vunpack.c.l.b16 %v4258
    %v5575 = vunpack.c.h.b16 %v4258
    %v5576 = vunpack.c.l.b16 %v4259
    %v5577 = vunpack.c.h.b16 %v4259
    %v5578 = vunpack.c.l.b16 %v4260
    %v5579 = vunpack.c.h.b16 %v4260
    %v5580 = vunpack.c.l.b16 %v4261
    %v5581 = vunpack.c.h.b16 %v4261
    %v5582 = vunpack.c.l.b16 %v4262
    %v5583 = vunpack.c.h.b16 %v4262
    %v5584 = vunpack.c.l.b16 %v4263
    %v5585 = vunpack.c.h.b16 %v4263
    %v5586 = vunpack.c.l.b16 %v4264
    %v5587 = vunpack.c.h.b16 %v4264
    %v5588 = vunpack.c.l.b16 %v4265
    %v5589 = vunpack.c.h.b16 %v4265
    %v5590 = vunpack.c.l.b16 %v4266
    %v5591 = vunpack.c.h.b16 %v4266
    %v5592 = vunpack.c.l.b16 %v4267
    %v5593 = vunpack.c.h.b16 %v4267
    %v5594 = vunpack.c.l.b16 %v4268
    %v5595 = vunpack.c.h.b16 %v4268
    %v5596 = vunpack.c.l.b16 %v4269
    %v5597 = vunpack.c.h.b16 %v4269
    %v5598 = vunpack.c.l.b16 %v4270
    %v5599 = vunpack.c.h.b16 %v4270
    %v5600 = vunpack.c.l.b16 %v4271
    %v5601 = vunpack.c.h.b16 %v4271
    %v5602 = vunpack.c.l.b16 %v4272
    %v5603 = vunpack.c.h.b16 %v4272
    %v5604 = vunpack.c.l.b16 %v4273
    %v5605 = vunpack.c.h.b16 %v4273
    %v5606 = vunpack.c.l.b16 %v4274
    %v5607 = vunpack.c.h.b16 %v4274
    %v5608 = vunpack.c.l.b16 %v4275
    %v5609 = vunpack.c.h.b16 %v4275
    %v5610 = vunpack.c.l.b16 %v4276
    %v5611 = vunpack.c.h.b16 %v4276
    %v5612 = vunpack.c.l.b16 %v4277
    %v5613 = vunpack.c.h.b16 %v4277
    %v5614 = vunpack.c.l.b16 %v4278
    %v5615 = vunpack.c.h.b16 %v4278
    %v5616 = vunpack.c.l.b16 %v4279
    %v5617 = vunpack.c.h.b16 %v4279
    %v5618 = vunpack.c.l.b16 %v4280
    %v5619 = vunpack.c.h.b16 %v4280
    %v5620 = vunpack.c.l.b16 %v4281
    %v5621 = vunpack.c.h.b16 %v4281
    %v5622 = vunpack.c.l.b16 %v4282
    %v5623 = vunpack.c.h.b16 %v4282
    %v5624 = vunpack.c.l.b16 %v4283
    %v5625 = vunpack.c.h.b16 %v4283
    %v5626 = vunpack.c.l.b16 %v4284
    %v5627 = vunpack.c.h.b16 %v4284
    %v5628 = vunpack.c.l.b16 %v4285
    %v5629 = vunpack.c.h.b16 %v4285
    %v5630 = vunpack.c.l.b16 %v4286
    %v5631 = vunpack.c.h.b16 %v4286
    %v5632 = vunpack.c.l.b16 %v4287
    %v5633 = vunpack.c.h.b16 %v4287
    %v5634 = vunpack.c.l.b16 %v4288
    %v5635 = vunpack.c.h.b16 %v4288
    %v5636 = vunpack.c.l.b16 %v4289
    %v5637 = vunpack.c.h.b16 %v4289
    %v5638 = vunpack.c.l.b16 %v4290
    %v5639 = vunpack.c.h.b16 %v4290
    %v5640 = vunpack.c.l.b16 %v4291
    %v5641 = vunpack.c.h.b16 %v4291
    %v5642 = vunpack.c.l.b16 %v4292
    %v5643 = vunpack.c.h.b16 %v4292
    %v5644 = vunpack.c.l.b16 %v4293
    %v5645 = vunpack.c.h.b16 %v4293
    %v5646 = vunpack.c.l.b16 %v4294
    %v5647 = vunpack.c.h.b16 %v4294
    %v5648 = vunpack.c.l.b16 %v4295
    %v5649 = vunpack.c.h.b16 %v4295
    %v5650 = vunpack.c.l.b16 %v4296
    %v5651 = vunpack.c.h.b16 %v4296
    %v5652 = vunpack.c.l.b16 %v4297
    %v5653 = vunpack.c.h.b16 %v4297
    %v5654 = vunpack.c.l.b16 %v4298
    %v5655 = vunpack.c.h.b16 %v4298
    %v5656 = vunpack.c.l.b16 %v4299
    %v5657 = vunpack.c.h.b16 %v4299
    %v5658 = vunpack.c.l.b16 %v4300
    %v5659 = vunpack.c.h.b16 %v4300
    %v5660 = vunpack.c.l.b16 %v4301
    %v5661 = vunpack.c.h.b16 %v4301
    %v5662 = vunpack.c.l.b16 %v4302
    %v5663 = vunpack.c.h.b16 %v4302
    %v5664 = vunpack.c.l.b16 %v4303
    %v5665 = vunpack.c.h.b16 %v4303
    %v5666 = vunpack.c.l.b16 %v4304
    %v5667 = vunpack.c.h.b16 %v4304
    %v5668 = vunpack.c.l.b16 %v4305
    %v5669 = vunpack.c.h.b16 %v4305
    %v5670 = vunpack.c.l.b16 %v4306
    %v5671 = vunpack.c.h.b16 %v4306
    %v5672 = vunpack.c.l.b16 %v4307
    %v5673 = vunpack.c.h.b16 %v4307
    %v5674 = vunpack.c.l.b16 %v4308
    %v5675 = vunpack.c.h.b16 %v4308
    %v5676 = vunpack.c.l.b16 %v4309
    %v5677 = vunpack.c.h.b16 %v4309
    %v5678 = vunpack.c.l.b16 %v4310
    %v5679 = vunpack.c.h.b16 %v4310
    %v5680 = vunpack.c.l.b16 %v4311
    %v5681 = vunpack.c.h.b16 %v4311
    %v5682 = vunpack.c.l.b16 %v4312
    %v5683 = vunpack.c.h.b16 %v4312
    %v5684 = vunpack.c.l.b16 %v4313
    %v5685 = vunpack.c.h.b16 %v4313
    %v5686 = vunpack.c.l.b16 %v4314
    %v5687 = vunpack.c.h.b16 %v4314
    %v5688 = vunpack.c.l.b16 %v4315
    %v5689 = vunpack.c.h.b16 %v4315
    %v5690 = vunpack.c.l.b16 %v4316
    %v5691 = vunpack.c.h.b16 %v4316
    %v5692 = vunpack.c.l.b16 %v4317
    %v5693 = vunpack.c.h.b16 %v4317
    %v5694 = vunpack.c.l.b16 %v4318
    %v5695 = vunpack.c.h.b16 %v4318
    %v5696 = vunpack.c.l.b16 %v4319
    %v5697 = vunpack.c.h.b16 %v4319
    %v5698 = vunpack.c.l.b16 %v4320
    %v5699 = vunpack.c.h.b16 %v4320
    %v5700 = vunpack.c.l.b16 %v4321
    %v5701 = vunpack.c.h.b16 %v4321
    %v5702 = vunpack.c.l.b16 %v4322
    %v5703 = vunpack.c.h.b16 %v4322
    %v5704 = vunpack.c.l.b16 %v4323
    %v5705 = vunpack.c.h.b16 %v4323
    %v5706 = vunpack.c.l.b16 %v4324
    %v5707 = vunpack.c.h.b16 %v4324
    %v5708 = vunpack.c.l.b16 %v4325
    %v5709 = vunpack.c.h.b16 %v4325
    %v5710 = vunpack.c.l.b16 %v4326
    %v5711 = vunpack.c.h.b16 %v4326
    %v5712 = vunpack.c.l.b16 %v4327
    %v5713 = vunpack.c.h.b16 %v4327
    %v5714 = vunpack.c.l.b16 %v4328
    %v5715 = vunpack.c.h.b16 %v4328
    %v5716 = vunpack.c.l.b16 %v4329
    %v5717 = vunpack.c.h.b16 %v4329
    %v5718 = vunpack.c.l.b16 %v4330
    %v5719 = vunpack.c.h.b16 %v4330
    %v5720 = vunpack.c.l.b16 %v4331
    %v5721 = vunpack.c.h.b16 %v4331
    %v5722 = vunpack.c.l.b16 %v4332
    %v5723 = vunpack.c.h.b16 %v4332
    %v5724 = vunpack.c.l.b16 %v4333
    %v5725 = vunpack.c.h.b16 %v4333
    %v5726 = vunpack.c.l.b16 %v4334
    %v5727 = vunpack.c.h.b16 %v4334
    %v5728 = vunpack.c.l.b16 %v4335
    %v5729 = vunpack.c.h.b16 %v4335
    %v5730 = vunpack.c.l.b16 %v4336
    %v5731 = vunpack.c.h.b16 %v4336
    %v5732 = vunpack.c.l.b16 %v4337
    %v5733 = vunpack.c.h.b16 %v4337
    %v5734 = vunpack.c.l.b16 %v4338
    %v5735 = vunpack.c.h.b16 %v4338
    %v5736 = vunpack.c.l.b16 %v4339
    %v5737 = vunpack.c.h.b16 %v4339
    %v5738 = vunpack.c.l.b16 %v4340
    %v5739 = vunpack.c.h.b16 %v4340
    %v5740 = vunpack.c.l.b16 %v4341
    %v5741 = vunpack.c.h.b16 %v4341
    %v5742 = vunpack.c.l.b16 %v4342
    %v5743 = vunpack.c.h.b16 %v4342
    %v5744 = vunpack.c.l.b16 %v4343
    %v5745 = vunpack.c.h.b16 %v4343
    %v5746 = vunpack.c.l.b16 %v4344
    %v5747 = vunpack.c.h.b16 %v4344
    %v5748 = vunpack.c.l.b16 %v4345
    %v5749 = vunpack.c.h.b16 %v4345
    %v5750 = vunpack.c.l.b16 %v4346
    %v5751 = vunpack.c.h.b16 %v4346
    %v5752 = vunpack.c.l.b16 %v4347
    %v5753 = vunpack.c.h.b16 %v4347
    %v5754 = vunpack.c.l.b16 %v4348
    %v5755 = vunpack.c.h.b16 %v4348
    %v5756 = vunpack.c.l.b16 %v4349
    %v5757 = vunpack.c.h.b16 %v4349
    %v5758 = vunpack.c.l.b16 %v4350
    %v5759 = vunpack.c.h.b16 %v4350
    %v5760 = vunpack.c.l.b16 %v4351
    %v5761 = vunpack.c.h.b16 %v4351
    %v5762 = vunpack.c.l.b16 %v4352
    %v5763 = vunpack.c.h.b16 %v4352
    %v5764 = vunpack.c.l.b16 %v4353
    %v5765 = vunpack.c.h.b16 %v4353
    %v5766 = vunpack.c.l.b16 %v4354
    %v5767 = vunpack.c.h.b16 %v4354
    %v5768 = vunpack.c.l.b16 %v4355
    %v5769 = vunpack.c.h.b16 %v4355
    %v5770 = vunpack.c.l.b16 %v4356
    %v5771 = vunpack.c.h.b16 %v4356
    %v5772 = vunpack.c.l.b16 %v4357
    %v5773 = vunpack.c.h.b16 %v4357
    %v5774 = vunpack.c.l.b16 %v4358
    %v5775 = vunpack.c.h.b16 %v4358
    %v5776 = vunpack.c.l.b16 %v4359
    %v5777 = vunpack.c.h.b16 %v4359
    %v5778 = vunpack.c.l.b16 %v4360
    %v5779 = vunpack.c.h.b16 %v4360
    %v5780 = vunpack.c.l.b16 %v4361
    %v5781 = vunpack.c.h.b16 %v4361
    %v5782 = vunpack.c.l.b16 %v4362
    %v5783 = vunpack.c.h.b16 %v4362
    %v5784 = vunpack.c.l.b16 %v4363
    %v5785 = vunpack.c.h.b16 %v4363
    %v5786 = vunpack.c.l.b16 %v4364
    %v5787 = vunpack.c.h.b16 %v4364
    %v5788 = vunpack.c.l.b16 %v4365
    %v5789 = vunpack.c.h.b16 %v4365
    %v5790 = vunpack.c.l.b16 %v4366
    %v5791 = vunpack.c.h.b16 %v4366
    %v5792 = vunpack.c.l.b16 %v4367
    %v5793 = vunpack.c.h.b16 %v4367
    %v5794 = vunpack.c.l.b16 %v4368
    %v5795 = vunpack.c.h.b16 %v4368
    %v5796 = vunpack.c.l.b16 %v4369
    %v5797 = vunpack.c.h.b16 %v4369
    %v5798 = vunpack.c.l.b16 %v4370
    %v5799 = vunpack.c.h.b16 %v4370
    %v5800 = vunpack.c.l.b16 %v4371
    %v5801 = vunpack.c.h.b16 %v4371
    %v5802 = vunpack.c.l.b16 %v4372
    %v5803 = vunpack.c.h.b16 %v4372
    %v5804 = vunpack.c.l.b16 %v4373
    %v5805 = vunpack.c.h.b16 %v4373
    %v5806 = vunpack.c.l.b16 %v4374
    %v5807 = vunpack.c.h.b16 %v4374
    %v5808 = vunpack.c.l.b16 %v4375
    %v5809 = vunpack.c.h.b16 %v4375
    %v5810 = vunpack.c.l.b16 %v4376
    %v5811 = vunpack.c.h.b16 %v4376
    %v5812 = vunpack.c.l.b16 %v4377
    %v5813 = vunpack.c.h.b16 %v4377
    %v5814 = vunpack.c.l.b16 %v4378
    %v5815 = vunpack.c.h.b16 %v4378
    %v5816 = vunpack.c.l.b16 %v4379
    %v5817 = vunpack.c.h.b16 %v4379
    %v5818 = vunpack.c.l.b16 %v4380
    %v5819 = vunpack.c.h.b16 %v4380
    %v5820 = vunpack.c.l.b16 %v4381
    %v5821 = vunpack.c.h.b16 %v4381
    %v5822 = vunpack.c.l.b16 %v4382
    %v5823 = vunpack.c.h.b16 %v4382
    %v5824 = vunpack.c.l.b16 %v4383
    %v5825 = vunpack.c.h.b16 %v4383
    %v5826 = vunpack.c.l.b16 %v4384
    %v5827 = vunpack.c.h.b16 %v4384
    %v5828 = vunpack.c.l.b16 %v4385
    %v5829 = vunpack.c.h.b16 %v4385
    %v5830 = vunpack.c.l.b16 %v4386
    %v5831 = vunpack.c.h.b16 %v4386
    %v5832 = vunpack.c.l.b16 %v4387
    %v5833 = vunpack.c.h.b16 %v4387
    %v5834 = vunpack.c.l.b16 %v4388
    %v5835 = vunpack.c.h.b16 %v4388
    %v5836 = vunpack.c.l.b16 %v4389
    %v5837 = vunpack.c.h.b16 %v4389
    %v5838 = vunpack.c.l.b16 %v4390
    %v5839 = vunpack.c.h.b16 %v4390
    %v5840 = vunpack.c.l.b16 %v4391
    %v5841 = vunpack.c.h.b16 %v4391
    %v5842 = vunpack.c.l.b16 %v4392
    %v5843 = vunpack.c.h.b16 %v4392
    %v5844 = vunpack.c.l.b16 %v4393
    %v5845 = vunpack.c.h.b16 %v4393
    %v5846 = vunpack.c.l.b16 %v4394
    %v5847 = vunpack.c.h.b16 %v4394
    %v5848 = vunpack.c.l.b16 %v4395
    %v5849 = vunpack.c.h.b16 %v4395
    %v5850 = vunpack.c.l.b16 %v4396
    %v5851 = vunpack.c.h.b16 %v4396
    %v5852 = vunpack.c.l.b16 %v4397
    %v5853 = vunpack.c.h.b16 %v4397
    %v5854 = vunpack.c.l.b16 %v4398
    %v5855 = vunpack.c.h.b16 %v4398
    %v5856 = vunpack.c.l.b16 %v4399
    %v5857 = vunpack.c.h.b16 %v4399
    %v5858 = vunpack.c.l.b16 %v4400
    %v5859 = vunpack.c.h.b16 %v4400
    %v5860 = vunpack.c.l.b16 %v4401
    %v5861 = vunpack.c.h.b16 %v4401
    %v5862 = vunpack.c.l.b16 %v4402
    %v5863 = vunpack.c.h.b16 %v4402
    %v5864 = vunpack.c.l.b16 %v4403
    %v5865 = vunpack.c.h.b16 %v4403
    %v5866 = vunpack.c.l.b16 %v4404
    %v5867 = vunpack.c.h.b16 %v4404
    %v5868 = vunpack.c.l.b16 %v4405
    %v5869 = vunpack.c.h.b16 %v4405
    %v5870 = vunpack.c.l.b16 %v4406
    %v5871 = vunpack.c.h.b16 %v4406
    %v5872 = vunpack.c.l.b16 %v4407
    %v5873 = vunpack.c.h.b16 %v4407
    %v5874 = vunpack.c.l.b16 %v4408
    %v5875 = vunpack.c.h.b16 %v4408
    %v5876 = vunpack.c.l.b16 %v4409
    %v5877 = vunpack.c.h.b16 %v4409
    %v5878 = vunpack.c.l.b16 %v4410
    %v5879 = vunpack.c.h.b16 %v4410
    %v5880 = vunpack.c.l.b16 %v4411
    %v5881 = vunpack.c.h.b16 %v4411
    %v5882 = vunpack.c.l.b16 %v4412
    %v5883 = vunpack.c.h.b16 %v4412
    %v5884 = vunpack.c.l.b16 %v4413
    %v5885 = vunpack.c.h.b16 %v4413
    %v5886 = vunpack.c.l.b16 %v4414
    %v5887 = vunpack.c.h.b16 %v4414
    %v5888 = vunpack.c.l.b16 %v4415
    %v5889 = vunpack.c.h.b16 %v4415
    %v5890 = vunpack.c.l.b16 %v4416
    %v5891 = vunpack.c.h.b16 %v4416
    %v5892 = vunpack.c.l.b16 %v4417
    %v5893 = vunpack.c.h.b16 %v4417
    %v5894 = vunpack.c.l.b16 %v4418
    %v5895 = vunpack.c.h.b16 %v4418
    %v5896 = vunpack.c.l.b16 %v4419
    %v5897 = vunpack.c.h.b16 %v4419
    %v5898 = vunpack.c.l.b16 %v4420
    %v5899 = vunpack.c.h.b16 %v4420
    %v5900 = vunpack.c.l.b16 %v4421
    %v5901 = vunpack.c.h.b16 %v4421
    %v5902 = vunpack.c.l.b16 %v4422
    %v5903 = vunpack.c.h.b16 %v4422
    %v5904 = vunpack.c.l.b16 %v4423
    %v5905 = vunpack.c.h.b16 %v4423
    %v5906 = vunpack.c.l.b16 %v4424
    %v5907 = vunpack.c.h.b16 %v4424
    %v5908 = vunpack.c.l.b16 %v4425
    %v5909 = vunpack.c.h.b16 %v4425
    %v5910 = vunpack.c.l.b16 %v4426
    %v5911 = vunpack.c.h.b16 %v4426
    %v5912 = vunpack.c.l.b16 %v4427
    %v5913 = vunpack.c.h.b16 %v4427
    %v5914 = vunpack.c.l.b16 %v4428
    %v5915 = vunpack.c.h.b16 %v4428
    %v5916 = vunpack.c.l.b16 %v4429
    %v5917 = vunpack.c.h.b16 %v4429
    %v5918 = vunpack.c.l.b16 %v4430
    %v5919 = vunpack.c.h.b16 %v4430
    %v5920 = vunpack.c.l.b16 %v4431
    %v5921 = vunpack.c.h.b16 %v4431
    %v5922 = vunpack.c.l.b16 %v4432
    %v5923 = vunpack.c.h.b16 %v4432
    %v5924 = vunpack.c.l.b16 %v4433
    %v5925 = vunpack.c.h.b16 %v4433
    %v5926 = vunpack.c.l.b16 %v4434
    %v5927 = vunpack.c.h.b16 %v4434
    %v5928 = vunpack.c.l.b16 %v4435
    %v5929 = vunpack.c.h.b16 %v4435
    %v5930 = vunpack.c.l.b16 %v4436
    %v5931 = vunpack.c.h.b16 %v4436
    %v5932 = vunpack.c.l.b16 %v4437
    %v5933 = vunpack.c.h.b16 %v4437
    %v5934 = vunpack.c.l.b16 %v4438
    %v5935 = vunpack.c.h.b16 %v4438
    %v5936 = vunpack.c.l.b16 %v4439
    %v5937 = vunpack.c.h.b16 %v4439
    %v5938 = vunpack.c.l.b16 %v4440
    %v5939 = vunpack.c.h.b16 %v4440
    %v5940 = vunpack.c.l.b16 %v4441
    %v5941 = vunpack.c.h.b16 %v4441
    %v5942 = vunpack.c.l.b16 %v4442
    %v5943 = vunpack.c.h.b16 %v4442
    %v5944 = vunpack.c.l.b16 %v4443
    %v5945 = vunpack.c.h.b16 %v4443
    %v5946 = vunpack.c.l.b16 %v4444
    %v5947 = vunpack.c.h.b16 %v4444
    %v5948 = vunpack.c.l.b16 %v4445
    %v5949 = vunpack.c.h.b16 %v4445
    %v5950 = vunpack.c.l.b16 %v4446
    %v5951 = vunpack.c.h.b16 %v4446
    %v5952 = vunpack.c.l.b16 %v4447
    %v5953 = vunpack.c.h.b16 %v4447
    %v5954 = vunpack.c.l.b16 %v4448
    %v5955 = vunpack.c.h.b16 %v4448
    %v5956 = vunpack.c.l.b16 %v4449
    %v5957 = vunpack.c.h.b16 %v4449
    %v5958 = vunpack.c.l.b16 %v4450
    %v5959 = vunpack.c.h.b16 %v4450
    %v5960 = vunpack.c.l.b16 %v4451
    %v5961 = vunpack.c.h.b16 %v4451
    %v5962 = vunpack.c.l.b16 %v4452
    %v5963 = vunpack.c.h.b16 %v4452
    %v5964 = vunpack.c.l.b16 %v4453
    %v5965 = vunpack.c.h.b16 %v4453
    %v5966 = vunpack.c.l.b16 %v4454
    %v5967 = vunpack.c.h.b16 %v4454
    %v5968 = vunpack.c.l.b16 %v4455
    %v5969 = vunpack.c.h.b16 %v4455
    %v5970 = vunpack.c.l.b16 %v4456
    %v5971 = vunpack.c.h.b16 %v4456
    %v5972 = vunpack.c.l.b16 %v4457
    %v5973 = vunpack.c.h.b16 %v4457
    %v5974 = vunpack.c.l.b16 %v4458
    %v5975 = vunpack.c.h.b16 %v4458
    %v5976 = vunpack.c.l.b16 %v4459
    %v5977 = vunpack.c.h.b16 %v4459
    %v5978 = vunpack.c.l.b16 %v4460
    %v5979 = vunpack.c.h.b16 %v4460
    %v5980 = vunpack.c.l.b16 %v4461
    %v5981 = vunpack.c.h.b16 %v4461
    %v5982 = vunpack.c.l.b16 %v4462
    %v5983 = vunpack.c.h.b16 %v4462
    %v5984 = vunpack.c.l.b16 %v4463
    %v5985 = vunpack.c.h.b16 %v4463
    %v5986 = vunpack.c.l.b16 %v4464
    %v5987 = vunpack.c.h.b16 %v4464
    %v5988 = vunpack.c.l.b16 %v4465
    %v5989 = vunpack.c.h.b16 %v4465
    %v5990 = vunpack.c.l.b16 %v4466
    %v5991 = vunpack.c.h.b16 %v4466
    %v5992 = vunpack.c.l.b16 %v4467
    %v5993 = vunpack.c.h.b16 %v4467
    %v5994 = vunpack.c.l.b16 %v4468
    %v5995 = vunpack.c.h.b16 %v4468
    %v5996 = vunpack.c.l.b16 %v4469
    %v5997 = vunpack.c.h.b16 %v4469
    %v5998 = vunpack.c.l.b16 %v4470
    %v5999 = vunpack.c.h.b16 %v4470
    %v6000 = vunpack.c.l.b16 %v4471
    %v6001 = vunpack.c.h.b16 %v4471
    %v6002 = vunpack.c.l.b16 %v4472
    %v6003 = vunpack.c.h.b16 %v4472
    %v6004 = vunpack.c.l.b16 %v4473
    %v6005 = vunpack.c.h.b16 %v4473
    %v6006 = vunpack.c.l.b16 %v4474
    %v6007 = vunpack.c.h.b16 %v4474
    %v6008 = vunpack.c.l.b16 %v4475
    %v6009 = vunpack.c.h.b16 %v4475
    %v6010 = vunpack.c.l.b16 %v4476
    %v6011 = vunpack.c.h.b16 %v4476
    %v6012 = vunpack.c.l.b16 %v4477
    %v6013 = vunpack.c.h.b16 %v4477
    %v6014 = vunpack.c.l.b16 %v4478
    %v6015 = vunpack.c.h.b16 %v4478
    %v6016 = vunpack.c.l.b16 %v4479
    %v6017 = vunpack.c.h.b16 %v4479
    %v6018 = vunpack.c.l.b16 %v4480
    %v6019 = vunpack.c.h.b16 %v4480
    %v6020 = vunpack.c.l.b16 %v4481
    %v6021 = vunpack.c.h.b16 %v4481
    %v6022 = vunpack.c.l.b16 %v4482
    %v6023 = vunpack.c.h.b16 %v4482
    %v6024 = vunpack.c.l.b16 %v4483
    %v6025 = vunpack.c.h.b16 %v4483
    %v6026 = vunpack.c.l.b16 %v4484
    %v6027 = vunpack.c.h.b16 %v4484
    %v6028 = vunpack.c.l.b16 %v4485
    %v6029 = vunpack.c.h.b16 %v4485
    %v6030 = vunpack.c.l.b16 %v4486
    %v6031 = vunpack.c.h.b16 %v4486
    %v6032 = vunpack.c.l.b16 %v4487
    %v6033 = vunpack.c.h.b16 %v4487
    %v6034 = vunpack.c.l.b16 %v4488
    %v6035 = vunpack.c.h.b16 %v4488
    %v6036 = vunpack.c.l.b16 %v4489
    %v6037 = vunpack.c.h.b16 %v4489
    %v6038 = vunpack.c.l.b16 %v4490
    %v6039 = vunpack.c.h.b16 %v4490
    %v6040 = vunpack.c.l.b16 %v4491
    %v6041 = vunpack.c.h.b16 %v4491
    %v6042 = vunpack.c.l.b16 %v4492
    %v6043 = vunpack.c.h.b16 %v4492
    %v6044 = vunpack.c.l.b16 %v4493
    %v6045 = vunpack.c.h.b16 %v4493
    %v6046 = vunpack.c.l.b16 %v4494
    %v6047 = vunpack.c.h.b16 %v4494
    %v6048 = vunpack.c.l.b16 %v4495
    %v6049 = vunpack.c.h.b16 %v4495
    %v6050 = vunpack.c.l.b16 %v4496
    %v6051 = vunpack.c.h.b16 %v4496
    %v6052 = vunpack.c.l.b16 %v4497
    %v6053 = vunpack.c.h.b16 %v4497
    %v6054 = vunpack.c.l.b16 %v4498
    %v6055 = vunpack.c.h.b16 %v4498
    %v6056 = vunpack.c.l.b16 %v4499
    %v6057 = vunpack.c.h.b16 %v4499
    %v6058 = vpack.c.b16 %v5038, %v5034
    %v6059 = vpack.c.b16 %v5039, %v5035
    %v6060 = vpack.c.b16 %v5040, %v5036
    %v6061 = vpack.c.b16 %v5041, %v5037
    %v6062 = vpack.c.b16 %v5046, %v5042
    %v6063 = vpack.c.b16 %v5047, %v5043
    %v6064 = vpack.c.b16 %v5048, %v5044
    %v6065 = vpack.c.b16 %v5049, %v5045
    %v6066 = vpack.c.b16 %v5054, %v5050
    %v6067 = vpack.c.b16 %v5055, %v5051
    %v6068 = vpack.c.b16 %v5056, %v5052
    %v6069 = vpack.c.b16 %v5057, %v5053
    %v6070 = vpack.c.b16 %v5062, %v5058
    %v6071 = vpack.c.b16 %v5063, %v5059
    %v6072 = vpack.c.b16 %v5064, %v5060
    %v6073 = vpack.c.b16 %v5065, %v5061
    %v6074 = vpack.c.b16 %v5070, %v5066
    %v6075 = vpack.c.b16 %v5071, %v5067
    %v6076 = vpack.c.b16 %v5072, %v5068
    %v6077 = vpack.c.b16 %v5073, %v5069
    %v6078 = vpack.c.b16 %v5078, %v5074
    %v6079 = vpack.c.b16 %v5079, %v5075
    %v6080 = vpack.c.b16 %v5080, %v5076
    %v6081 = vpack.c.b16 %v5081, %v5077
    %v6082 = vpack.c.b16 %v5086, %v5082
    %v6083 = vpack.c.b16 %v5087, %v5083
    %v6084 = vpack.c.b16 %v5088, %v5084
    %v6085 = vpack.c.b16 %v5089, %v5085
    %v6086 = vpack.c.b16 %v5094, %v5090
    %v6087 = vpack.c.b16 %v5095, %v5091
    %v6088 = vpack.c.b16 %v5096, %v5092
    %v6089 = vpack.c.b16 %v5097, %v5093
    %v6090 = vpack.c.b16 %v5102, %v5098
    %v6091 = vpack.c.b16 %v5103, %v5099
    %v6092 = vpack.c.b16 %v5104, %v5100
    %v6093 = vpack.c.b16 %v5105, %v5101
    %v6094 = vpack.c.b16 %v5110, %v5106
    %v6095 = vpack.c.b16 %v5111, %v5107
    %v6096 = vpack.c.b16 %v5112, %v5108
    %v6097 = vpack.c.b16 %v5113, %v5109
    %v6098 = vpack.c.b16 %v5118, %v5114
    %v6099 = vpack.c.b16 %v5119, %v5115
    %v6100 = vpack.c.b16 %v5120, %v5116
    %v6101 = vpack.c.b16 %v5121, %v5117
    %v6102 = vpack.c.b16 %v5126, %v5122
    %v6103 = vpack.c.b16 %v5127, %v5123
    %v6104 = vpack.c.b16 %v5128, %v5124
    %v6105 = vpack.c.b16 %v5129, %v5125
    %v6106 = vpack.c.b16 %v5134, %v5130
    %v6107 = vpack.c.b16 %v5135, %v5131
    %v6108 = vpack.c.b16 %v5136, %v5132
    %v6109 = vpack.c.b16 %v5137, %v5133
    %v6110 = vpack.c.b16 %v5142, %v5138
    %v6111 = vpack.c.b16 %v5143, %v5139
    %v6112 = vpack.c.b16 %v5144, %v5140
    %v6113 = vpack.c.b16 %v5145, %v5141
    %v6114 = vpack.c.b16 %v5150, %v5146
    %v6115 = vpack.c.b16 %v5151, %v5147
    %v6116 = vpack.c.b16 %v5152, %v5148
    %v6117 = vpack.c.b16 %v5153, %v5149
    %v6118 = vpack.c.b16 %v5158, %v5154
    %v6119 = vpack.c.b16 %v5159, %v5155
    %v6120 = vpack.c.b16 %v5160, %v5156
    %v6121 = vpack.c.b16 %v5161, %v5157
    %v6122 = vpack.c.b16 %v5166, %v5162
    %v6123 = vpack.c.b16 %v5167, %v5163
    %v6124 = vpack.c.b16 %v5168, %v5164
    %v6125 = vpack.c.b16 %v5169, %v5165
    %v6126 = vpack.c.b16 %v5174, %v5170
    %v6127 = vpack.c.b16 %v5175, %v5171
    %v6128 = vpack.c.b16 %v5176, %v5172
    %v6129 = vpack.c.b16 %v5177, %v5173
    %v6130 = vpack.c.b16 %v5182, %v5178
    %v6131 = vpack.c.b16 %v5183, %v5179
    %v6132 = vpack.c.b16 %v5184, %v5180
    %v6133 = vpack.c.b16 %v5185, %v5181
    %v6134 = vpack.c.b16 %v5190, %v5186
    %v6135 = vpack.c.b16 %v5191, %v5187
    %v6136 = vpack.c.b16 %v5192, %v5188
    %v6137 = vpack.c.b16 %v5193, %v5189
    %v6138 = vpack.c.b16 %v5198, %v5194
    %v6139 = vpack.c.b16 %v5199, %v5195
    %v6140 = vpack.c.b16 %v5200, %v5196
    %v6141 = vpack.c.b16 %v5201, %v5197
    %v6142 = vpack.c.b16 %v5206, %v5202
    %v6143 = vpack.c.b16 %v5207, %v5203
    %v6144 = vpack.c.b16 %v5208, %v5204
    %v6145 = vpack.c.b16 %v5209, %v5205
    %v6146 = vpack.c.b16 %v5214, %v5210
    %v6147 = vpack.c.b16 %v5215, %v5211
    %v6148 = vpack.c.b16 %v5216, %v5212
    %v6149 = vpack.c.b16 %v5217, %v5213
    %v6150 = vpack.c.b16 %v5222, %v5218
    %v6151 = vpack.c.b16 %v5223, %v5219
    %v6152 = vpack.c.b16 %v5224, %v5220
    %v6153 = vpack.c.b16 %v5225, %v5221
    %v6154 = vpack.c.b16 %v5230, %v5226
    %v6155 = vpack.c.b16 %v5231, %v5227
    %v6156 = vpack.c.b16 %v5232, %v5228
    %v6157 = vpack.c.b16 %v5233, %v5229
    %v6158 = vpack.c.b16 %v5238, %v5234
    %v6159 = vpack.c.b16 %v5239, %v5235
    %v6160 = vpack.c.b16 %v5240, %v5236
    %v6161 = vpack.c.b16 %v5241, %v5237
    %v6162 = vpack.c.b16 %v5246, %v5242
    %v6163 = vpack.c.b16 %v5247, %v5243
    %v6164 = vpack.c.b16 %v5248, %v5244
    %v6165 = vpack.c.b16 %v5249, %v5245
    %v6166 = vpack.c.b16 %v5254, %v5250
    %v6167 = vpack.c.b16 %v5255, %v5251
    %v6168 = vpack.c.b16 %v5256, %v5252
    %v6169 = vpack.c.b16 %v5257, %v5253
    %v6170 = vpack.c.b16 %v5262, %v5258
    %v6171 = vpack.c.b16 %v5263, %v5259
    %v6172 = vpack.c.b16 %v5264, %v5260
    %v6173 = vpack.c.b16 %v5265, %v5261
    %v6174 = vpack.c.b16 %v5270, %v5266
    %v6175 = vpack.c.b16 %v5271, %v5267
    %v6176 = vpack.c.b16 %v5272, %v5268
    %v6177 = vpack.c.b16 %v5273, %v5269
    %v6178 = vpack.c.b16 %v5278, %v5274
    %v6179 = vpack.c.b16 %v5279, %v5275
    %v6180 = vpack.c.b16 %v5280, %v5276
    %v6181 = vpack.c.b16 %v5281, %v5277
    %v6182 = vpack.c.b16 %v5286, %v5282
    %v6183 = vpack.c.b16 %v5287, %v5283
    %v6184 = vpack.c.b16 %v5288, %v5284
    %v6185 = vpack.c.b16 %v5289, %v5285
    %v6186 = vpack.c.b16 %v5294, %v5290
    %v6187 = vpack.c.b16 %v5295, %v5291
    %v6188 = vpack.c.b16 %v5296, %v5292
    %v6189 = vpack.c.b16 %v5297, %v5293
    %v6190 = vpack.c.b16 %v5302, %v5298
    %v6191 = vpack.c.b16 %v5303, %v5299
    %v6192 = vpack.c.b16 %v5304, %v5300
    %v6193 = vpack.c.b16 %v5305, %v5301
    %v6194 = vpack.c.b16 %v5310, %v5306
    %v6195 = vpack.c.b16 %v5311, %v5307
    %v6196 = vpack.c.b16 %v5312, %v5308
    %v6197 = vpack.c.b16 %v5313, %v5309
    %v6198 = vpack.c.b16 %v5318, %v5314
    %v6199 = vpack.c.b16 %v5319, %v5315
    %v6200 = vpack.c.b16 %v5320, %v5316
    %v6201 = vpack.c.b16 %v5321, %v5317
    %v6202 = vpack.c.b16 %v5326, %v5322
    %v6203 = vpack.c.b16 %v5327, %v5323
    %v6204 = vpack.c.b16 %v5328, %v5324
    %v6205 = vpack.c.b16 %v5329, %v5325
    %v6206 = vpack.c.b16 %v5334, %v5330
    %v6207 = vpack.c.b16 %v5335, %v5331
    %v6208 = vpack.c.b16 %v5336, %v5332
    %v6209 = vpack.c.b16 %v5337, %v5333
    %v6210 = vpack.c.b16 %v5342, %v5338
    %v6211 = vpack.c.b16 %v5343, %v5339
    %v6212 = vpack.c.b16 %v5344, %v5340
    %v6213 = vpack.c.b16 %v5345, %v5341
    %v6214 = vpack.c.b16 %v5350, %v5346
    %v6215 = vpack.c.b16 %v5351, %v5347
    %v6216 = vpack.c.b16 %v5352, %v5348
    %v6217 = vpack.c.b16 %v5353, %v5349
    %v6218 = vpack.c.b16 %v5358, %v5354
    %v6219 = vpack.c.b16 %v5359, %v5355
    %v6220 = vpack.c.b16 %v5360, %v5356
    %v6221 = vpack.c.b16 %v5361, %v5357
    %v6222 = vpack.c.b16 %v5366, %v5362
    %v6223 = vpack.c.b16 %v5367, %v5363
    %v6224 = vpack.c.b16 %v5368, %v5364
    %v6225 = vpack.c.b16 %v5369, %v5365
    %v6226 = vpack.c.b16 %v5374, %v5370
    %v6227 = vpack.c.b16 %v5375, %v5371
    %v6228 = vpack.c.b16 %v5376, %v5372
    %v6229 = vpack.c.b16 %v5377, %v5373
    %v6230 = vpack.c.b16 %v5382, %v5378
    %v6231 = vpack.c.b16 %v5383, %v5379
    %v6232 = vpack.c.b16 %v5384, %v5380
    %v6233 = vpack.c.b16 %v5385, %v5381
    %v6234 = vpack.c.b16 %v5390, %v5386
    %v6235 = vpack.c.b16 %v5391, %v5387
    %v6236 = vpack.c.b16 %v5392, %v5388
    %v6237 = vpack.c.b16 %v5393, %v5389
    %v6238 = vpack.c.b16 %v5398, %v5394
    %v6239 = vpack.c.b16 %v5399, %v5395
    %v6240 = vpack.c.b16 %v5400, %v5396
    %v6241 = vpack.c.b16 %v5401, %v5397
    %v6242 = vpack.c.b16 %v5406, %v5402
    %v6243 = vpack.c.b16 %v5407, %v5403
    %v6244 = vpack.c.b16 %v5408, %v5404
    %v6245 = vpack.c.b16 %v5409, %v5405
    %v6246 = vpack.c.b16 %v5414, %v5410
    %v6247 = vpack.c.b16 %v5415, %v5411
    %v6248 = vpack.c.b16 %v5416, %v5412
    %v6249 = vpack.c.b16 %v5417, %v5413
    %v6250 = vpack.c.b16 %v5422, %v5418
    %v6251 = vpack.c.b16 %v5423, %v5419
    %v6252 = vpack.c.b16 %v5424, %v5420
    %v6253 = vpack.c.b16 %v5425, %v5421
    %v6254 = vpack.c.b16 %v5430, %v5426
    %v6255 = vpack.c.b16 %v5431, %v5427
    %v6256 = vpack.c.b16 %v5432, %v5428
    %v6257 = vpack.c.b16 %v5433, %v5429
    %v6258 = vpack.c.b16 %v5438, %v5434
    %v6259 = vpack.c.b16 %v5439, %v5435
    %v6260 = vpack.c.b16 %v5440, %v5436
    %v6261 = vpack.c.b16 %v5441, %v5437
    %v6262 = vpack.c.b16 %v5446, %v5442
    %v6263 = vpack.c.b16 %v5447, %v5443
    %v6264 = vpack.c.b16 %v5448, %v5444
    %v6265 = vpack.c.b16 %v5449, %v5445
    %v6266 = vpack.c.b16 %v5454, %v5450
    %v6267 = vpack.c.b16 %v5455, %v5451
    %v6268 = vpack.c.b16 %v5456, %v5452
    %v6269 = vpack.c.b16 %v5457, %v5453
    %v6270 = vpack.c.b16 %v5462, %v5458
    %v6271 = vpack.c.b16 %v5463, %v5459
    %v6272 = vpack.c.b16 %v5464, %v5460
    %v6273 = vpack.c.b16 %v5465, %v5461
    %v6274 = vpack.c.b16 %v5470, %v5466
    %v6275 = vpack.c.b16 %v5471, %v5467
    %v6276 = vpack.c.b16 %v5472, %v5468
    %v6277 = vpack.c.b16 %v5473, %v5469
    %v6278 = vpack.c.b16 %v5478, %v5474
    %v6279 = vpack.c.b16 %v5479, %v5475
    %v6280 = vpack.c.b16 %v5480, %v5476
    %v6281 = vpack.c.b16 %v5481, %v5477
    %v6282 = vpack.c.b16 %v5486, %v5482
    %v6283 = vpack.c.b16 %v5487, %v5483
    %v6284 = vpack.c.b16 %v5488, %v5484
    %v6285 = vpack.c.b16 %v5489, %v5485
    %v6286 = vpack.c.b16 %v5494, %v5490
    %v6287 = vpack.c.b16 %v5495, %v5491
    %v6288 = vpack.c.b16 %v5496, %v5492
    %v6289 = vpack.c.b16 %v5497, %v5493
    %v6290 = vpack.c.b16 %v5502, %v5498
    %v6291 = vpack.c.b16 %v5503, %v5499
    %v6292 = vpack.c.b16 %v5504, %v5500
    %v6293 = vpack.c.b16 %v5505, %v5501
    %v6294 = vpack.c.b16 %v5510, %v5506
    %v6295 = vpack.c.b16 %v5511, %v5507
    %v6296 = vpack.c.b16 %v5512, %v5508
    %v6297 = vpack.c.b16 %v5513, %v5509
    %v6298 = vpack.c.b16 %v5518, %v5514
    %v6299 = vpack.c.b16 %v5519, %v5515
    %v6300 = vpack.c.b16 %v5520, %v5516
    %v6301 = vpack.c.b16 %v5521, %v5517
    %v6302 = vpack.c.b16 %v5526, %v5522
    %v6303 = vpack.c.b16 %v5527, %v5523
    %v6304 = vpack.c.b16 %v5528, %v5524
    %v6305 = vpack.c.b16 %v5529, %v5525
    %v6306 = vpack.c.b16 %v5534, %v5530
    %v6307 = vpack.c.b16 %v5535, %v5531
    %v6308 = vpack.c.b16 %v5536, %v5532
    %v6309 = vpack.c.b16 %v5537, %v5533
    %v6310 = vpack.c.b16 %v5542, %v5538
    %v6311 = vpack.c.b16 %v5543, %v5539
    %v6312 = vpack.c.b16 %v5544, %v5540
    %v6313 = vpack.c.b16 %v5545, %v5541
    %v6314 = vpack.c.b16 %v5550, %v5546
    %v6315 = vpack.c.b16 %v5551, %v5547
    %v6316 = vpack.c.b16 %v5552, %v5548
    %v6317 = vpack.c.b16 %v5553, %v5549
    %v6318 = vpack.c.b16 %v5558, %v5554
    %v6319 = vpack.c.b16 %v5559, %v5555
    %v6320 = vpack.c.b16 %v5560, %v5556
    %v6321 = vpack.c.b16 %v5561, %v5557
    %v6322 = vpack.c.b16 %v5566, %v5562
    %v6323 = vpack.c.b16 %v5567, %v5563
    %v6324 = vpack.c.b16 %v5568, %v5564
    %v6325 = vpack.c.b16 %v5569, %v5565
    %v6326 = vpack.c.b16 %v5574, %v5570
    %v6327 = vpack.c.b16 %v5575, %v5571
    %v6328 = vpack.c.b16 %v5576, %v5572
    %v6329 = vpack.c.b16 %v5577, %v5573
    %v6330 = vpack.c.b16 %v5582, %v5578
    %v6331 = vpack.c.b16 %v5583, %v5579
    %v6332 = vpack.c.b16 %v5584, %v5580
    %v6333 = vpack.c.b16 %v5585, %v5581
    %v6334 = vpack.c.b16 %v5590, %v5586
    %v6335 = vpack.c.b16 %v5591, %v5587
    %v6336 = vpack.c.b16 %v5592, %v5588
    %v6337 = vpack.c.b16 %v5593, %v5589
    %v6338 = vpack.c.b16 %v5598, %v5594
    %v6339 = vpack.c.b16 %v5599, %v5595
    %v6340 = vpack.c.b16 %v5600, %v5596
    %v6341 = vpack.c.b16 %v5601, %v5597
    %v6342 = vpack.c.b16 %v5606, %v5602
    %v6343 = vpack.c.b16 %v5607, %v5603
    %v6344 = vpack.c.b16 %v5608, %v5604
    %v6345 = vpack.c.b16 %v5609, %v5605
    %v6346 = vpack.c.b16 %v5614, %v5610
    %v6347 = vpack.c.b16 %v5615, %v5611
    %v6348 = vpack.c.b16 %v5616, %v5612
    %v6349 = vpack.c.b16 %v5617, %v5613
    %v6350 = vpack.c.b16 %v5622, %v5618
    %v6351 = vpack.c.b16 %v5623, %v5619
    %v6352 = vpack.c.b16 %v5624, %v5620
    %v6353 = vpack.c.b16 %v5625, %v5621
    %v6354 = vpack.c.b16 %v5630, %v5626
    %v6355 = vpack.c.b16 %v5631, %v5627
    %v6356 = vpack.c.b16 %v5632, %v5628
    %v6357 = vpack.c.b16 %v5633, %v5629
    %v6358 = vpack.c.b16 %v5638, %v5634
    %v6359 = vpack.c.b16 %v5639, %v5635
    %v6360 = vpack.c.b16 %v5640, %v5636
    %v6361 = vpack.c.b16 %v5641, %v5637
    %v6362 = vpack.c.b16 %v5646, %v5642
    %v6363 = vpack.c.b16 %v5647, %v5643
    %v6364 = vpack.c.b16 %v5648, %v5644
    %v6365 = vpack.c.b16 %v5649, %v5645
    %v6366 = vpack.c.b16 %v5654, %v5650
    %v6367 = vpack.c.b16 %v5655, %v5651
    %v6368 = vpack.c.b16 %v5656, %v5652
    %v6369 = vpack.c.b16 %v5657, %v5653
    %v6370 = vpack.c.b16 %v5662, %v5658
    %v6371 = vpack.c.b16 %v5663, %v5659
    %v6372 = vpack.c.b16 %v5664, %v5660
    %v6373 = vpack.c.b16 %v5665, %v5661
    %v6374 = vpack.c.b16 %v5670, %v5666
    %v6375 = vpack.c.b16 %v5671, %v5667
    %v6376 = vpack.c.b16 %v5672, %v5668
    %v6377 = vpack.c.b16 %v5673, %v5669
    %v6378 = vpack.c.b16 %v5678, %v5674
    %v6379 = vpack.c.b16 %v5679, %v5675
    %v6380 = vpack.c.b16 %v5680, %v5676
    %v6381 = vpack.c.b16 %v5681, %v5677
    %v6382 = vpack.c.b16 %v5686, %v5682
    %v6383 = vpack.c.b16 %v5687, %v5683
    %v6384 = vpack.c.b16 %v5688, %v5684
    %v6385 = vpack.c.b16 %v5689, %v5685
    %v6386 = vpack.c.b16 %v5694, %v5690
    %v6387 = vpack.c.b16 %v5695, %v5691
    %v6388 = vpack.c.b16 %v5696, %v5692
    %v6389 = vpack.c.b16 %v5697, %v5693
    %v6390 = vpack.c.b16 %v5702, %v5698
    %v6391 = vpack.c.b16 %v5703, %v5699
    %v6392 = vpack.c.b16 %v5704, %v5700
    %v6393 = vpack.c.b16 %v5705, %v5701
    %v6394 = vpack.c.b16 %v5710, %v5706
    %v6395 = vpack.c.b16 %v5711, %v5707
    %v6396 = vpack.c.b16 %v5712, %v5708
    %v6397 = vpack.c.b16 %v5713, %v5709
    %v6398 = vpack.c.b16 %v5718, %v5714
    %v6399 = vpack.c.b16 %v5719, %v5715
    %v6400 = vpack.c.b16 %v5720, %v5716
    %v6401 = vpack.c.b16 %v5721, %v5717
    %v6402 = vpack.c.b16 %v5726, %v5722
    %v6403 = vpack.c.b16 %v5727, %v5723
    %v6404 = vpack.c.b16 %v5728, %v5724
    %v6405 = vpack.c.b16 %v5729, %v5725
    %v6406 = vpack.c.b16 %v5734, %v5730
    %v6407 = vpack.c.b16 %v5735, %v5731
    %v6408 = vpack.c.b16 %v5736, %v5732
    %v6409 = vpack.c.b16 %v5737, %v5733
    %v6410 = vpack.c.b16 %v5742, %v5738
    %v6411 = vpack.c.b16 %v5743, %v5739
    %v6412 = vpack.c.b16 %v5744, %v5740
    %v6413 = vpack.c.b16 %v5745, %v5741
    %v6414 = vpack.c.b16 %v5750, %v5746
    %v6415 = vpack.c.b16 %v5751, %v5747
    %v6416 = vpack.c.b16 %v5752, %v5748
    %v6417 = vpack.c.b16 %v5753, %v5749
    %v6418 = vpack.c.b16 %v5758, %v5754
    %v6419 = vpack.c.b16 %v5759, %v5755
    %v6420 = vpack.c.b16 %v5760, %v5756
    %v6421 = vpack.c.b16 %v5761, %v5757
    %v6422 = vpack.c.b16 %v5766, %v5762
    %v6423 = vpack.c.b16 %v5767, %v5763
    %v6424 = vpack.c.b16 %v5768, %v5764
    %v6425 = vpack.c.b16 %v5769, %v5765
    %v6426 = vpack.c.b16 %v5774, %v5770
    %v6427 = vpack.c.b16 %v5775, %v5771
    %v6428 = vpack.c.b16 %v5776, %v5772
    %v6429 = vpack.c.b16 %v5777, %v5773
    %v6430 = vpack.c.b16 %v5782, %v5778
    %v6431 = vpack.c.b16 %v5783, %v5779
    %v6432 = vpack.c.b16 %v5784, %v5780
    %v6433 = vpack.c.b16 %v5785, %v5781
    %v6434 = vpack.c.b16 %v5790, %v5786
    %v6435 = vpack.c.b16 %v5791, %v5787
    %v6436 = vpack.c.b16 %v5792, %v5788
    %v6437 = vpack.c.b16 %v5793, %v5789
    %v6438 = vpack.c.b16 %v5798, %v5794
    %v6439 = vpack.c.b16 %v5799, %v5795
    %v6440 = vpack.c.b16 %v5800, %v5796
    %v6441 = vpack.c.b16 %v5801, %v5797
    %v6442 = vpack.c.b16 %v5806, %v5802
    %v6443 = vpack.c.b16 %v5807, %v5803
    %v6444 = vpack.c.b16 %v5808, %v5804
    %v6445 = vpack.c.b16 %v5809, %v5805
    %v6446 = vpack.c.b16 %v5814, %v5810
    %v6447 = vpack.c.b16 %v5815, %v5811
    %v6448 = vpack.c.b16 %v5816, %v5812
    %v6449 = vpack.c.b16 %v5817, %v5813
    %v6450 = vpack.c.b16 %v5822, %v5818
    %v6451 = vpack.c.b16 %v5823, %v5819
    %v6452 = vpack.c.b16 %v5824, %v5820
    %v6453 = vpack.c.b16 %v5825, %v5821
    %v6454 = vpack.c.b16 %v5830, %v5826
    %v6455 = vpack.c.b16 %v5831, %v5827
    %v6456 = vpack.c.b16 %v5832, %v5828
    %v6457 = vpack.c.b16 %v5833, %v5829
    %v6458 = vpack.c.b16 %v5838, %v5834
    %v6459 = vpack.c.b16 %v5839, %v5835
    %v6460 = vpack.c.b16 %v5840, %v5836
    %v6461 = vpack.c.b16 %v5841, %v5837
    %v6462 = vpack.c.b16 %v5846, %v5842
    %v6463 = vpack.c.b16 %v5847, %v5843
    %v6464 = vpack.c.b16 %v5848, %v5844
    %v6465 = vpack.c.b16 %v5849, %v5845
    %v6466 = vpack.c.b16 %v5854, %v5850
    %v6467 = vpack.c.b16 %v5855, %v5851
    %v6468 = vpack.c.b16 %v5856, %v5852
    %v6469 = vpack.c.b16 %v5857, %v5853
    %v6470 = vpack.c.b16 %v5862, %v5858
    %v6471 = vpack.c.b16 %v5863, %v5859
    %v6472 = vpack.c.b16 %v5864, %v5860
    %v6473 = vpack.c.b16 %v5865, %v5861
    %v6474 = vpack.c.b16 %v5870, %v5866
    %v6475 = vpack.c.b16 %v5871, %v5867
    %v6476 = vpack.c.b16 %v5872, %v5868
    %v6477 = vpack.c.b16 %v5873, %v5869
    %v6478 = vpack.c.b16 %v5878, %v5874
    %v6479 = vpack.c.b16 %v5879, %v5875
    %v6480 = vpack.c.b16 %v5880, %v5876
    %v6481 = vpack.c.b16 %v5881, %v5877
    %v6482 = vpack.c.b16 %v5886, %v5882
    %v6483 = vpack.c.b16 %v5887, %v5883
    %v6484 = vpack.c.b16 %v5888, %v5884
    %v6485 = vpack.c.b16 %v5889, %v5885
    %v6486 = vpack.c.b16 %v5894, %v5890
    %v6487 = vpack.c.b16 %v5895, %v5891
    %v6488 = vpack.c.b16 %v5896, %v5892
    %v6489 = vpack.c.b16 %v5897, %v5893
    %v6490 = vpack.c.b16 %v5902, %v5898
    %v6491 = vpack.c.b16 %v5903, %v5899
    %v6492 = vpack.c.b16 %v5904, %v5900
    %v6493 = vpack.c.b16 %v5905, %v5901
    %v6494 = vpack.c.b16 %v5910, %v5906
    %v6495 = vpack.c.b16 %v5911, %v5907
    %v6496 = vpack.c.b16 %v5912, %v5908
    %v6497 = vpack.c.b16 %v5913, %v5909
    %v6498 = vpack.c.b16 %v5918, %v5914
    %v6499 = vpack.c.b16 %v5919, %v5915
    %v6500 = vpack.c.b16 %v5920, %v5916
    %v6501 = vpack.c.b16 %v5921, %v5917
    %v6502 = vpack.c.b16 %v5926, %v5922
    %v6503 = vpack.c.b16 %v5927, %v5923
    %v6504 = vpack.c.b16 %v5928, %v5924
    %v6505 = vpack.c.b16 %v5929, %v5925
    %v6506 = vpack.c.b16 %v5934, %v5930
    %v6507 = vpack.c.b16 %v5935, %v5931
    %v6508 = vpack.c.b16 %v5936, %v5932
    %v6509 = vpack.c.b16 %v5937, %v5933
    %v6510 = vpack.c.b16 %v5942, %v5938
    %v6511 = vpack.c.b16 %v5943, %v5939
    %v6512 = vpack.c.b16 %v5944, %v5940
    %v6513 = vpack.c.b16 %v5945, %v5941
    %v6514 = vpack.c.b16 %v5950, %v5946
    %v6515 = vpack.c.b16 %v5951, %v5947
    %v6516 = vpack.c.b16 %v5952, %v5948
    %v6517 = vpack.c.b16 %v5953, %v5949
    %v6518 = vpack.c.b16 %v5958, %v5954
    %v6519 = vpack.c.b16 %v5959, %v5955
    %v6520 = vpack.c.b16 %v5960, %v5956
    %v6521 = vpack.c.b16 %v5961, %v5957
    %v6522 = vpack.c.b16 %v5966, %v5962
    %v6523 = vpack.c.b16 %v5967, %v5963
    %v6524 = vpack.c.b16 %v5968, %v5964
    %v6525 = vpack.c.b16 %v5969, %v5965
    %v6526 = vpack.c.b16 %v5974, %v5970
    %v6527 = vpack.c.b16 %v5975, %v5971
    %v6528 = vpack.c.b16 %v5976, %v5972
    %v6529 = vpack.c.b16 %v5977, %v5973
    %v6530 = vpack.c.b16 %v5982, %v5978
    %v6531 = vpack.c.b16 %v5983, %v5979
    %v6532 = vpack.c.b16 %v5984, %v5980
    %v6533 = vpack.c.b16 %v5985, %v5981
    %v6534 = vpack.c.b16 %v5990, %v5986
    %v6535 = vpack.c.b16 %v5991, %v5987
    %v6536 = vpack.c.b16 %v5992, %v5988
    %v6537 = vpack.c.b16 %v5993, %v5989
    %v6538 = vpack.c.b16 %v5998, %v5994
    %v6539 = vpack.c.b16 %v5999, %v5995
    %v6540 = vpack.c.b16 %v6000, %v5996
    %v6541 = vpack.c.b16 %v6001, %v5997
    %v6542 = vpack.c.b16 %v6006, %v6002
    %v6543 = vpack.c.b16 %v6007, %v6003
    %v6544 = vpack.c.b16 %v6008, %v6004
    %v6545 = vpack.c.b16 %v6009, %v6005
    %v6546 = vpack.c.b16 %v6014, %v6010
    %v6547 = vpack.c.b16 %v6015, %v6011
    %v6548 = vpack.c.b16 %v6016, %v6012
    %v6549 = vpack.c.b16 %v6017, %v6013
    %v6550 = vpack.c.b16 %v6022, %v6018
    %v6551 = vpack.c.b16 %v6023, %v6019
    %v6552 = vpack.c.b16 %v6024, %v6020
    %v6553 = vpack.c.b16 %v6025, %v6021
    %v6554 = vpack.c.b16 %v6030, %v6026
    %v6555 = vpack.c.b16 %v6031, %v6027
    %v6556 = vpack.c.b16 %v6032, %v6028
    %v6557 = vpack.c.b16 %v6033, %v6029
    %v6558 = vpack.c.b16 %v6038, %v6034
    %v6559 = vpack.c.b16 %v6039, %v6035
    %v6560 = vpack.c.b16 %v6040, %v6036
    %v6561 = vpack.c.b16 %v6041, %v6037
    %v6562 = vpack.c.b16 %v6046, %v6042
    %v6563 = vpack.c.b16 %v6047, %v6043
    %v6564 = vpack.c.b16 %v6048, %v6044
    %v6565 = vpack.c.b16 %v6049, %v6045
    %v6566 = vpack.c.b16 %v6054, %v6050
    %v6567 = vpack.c.b16 %v6055, %v6051
    %v6568 = vpack.c.b16 %v6056, %v6052
    %v6569 = vpack.c.b16 %v6057, %v6053
    %7082 = vmatprep.subr.bf16.mxu0 %v6087
    %7083 = vmatpush1.bf16.msra.mxu0 %v6086
    %7084 = vmatprep.subr.bf16.mxu0 %v6083
    %7085 = vmatpush1.bf16.msra.mxu0 %v6082
    %7086 = vmatprep.subr.bf16.mxu0 %v6079
    %7087 = vmatpush1.bf16.msra.mxu0 %v6078
    %7088 = vmatprep.subr.bf16.mxu0 %v6075
    %7089 = vmatpush1.bf16.msra.mxu0 %v6074
    %7090 = vmatprep.subr.bf16.mxu0 %v6071
    %7091 = vmatpush1.bf16.msra.mxu0 %v6070
    %7092 = vmatprep.subr.bf16.mxu0 %v6067
    %7093 = vmatpush1.bf16.msra.mxu0 %v6066
    %7094 = vmatprep.subr.bf16.mxu0 %v6063
    %7095 = vmatpush1.bf16.msra.mxu0 %v6062
    %7096 = vmatprep.subr.bf16.mxu0 %v6059
    %7097 = vmatpush1.bf16.msra.mxu0 %v6058
    %7098 = vmatprep.subr.bf16.mxu0 %v6119
    %7099 = vmatpush2.bf16.msra.mxu0 %v6118
    %7100 = vmatprep.subr.bf16.mxu0 %v6115
    %7101 = vmatpush2.bf16.msra.mxu0 %v6114
    %7102 = vmatprep.subr.bf16.mxu0 %v6111
    %7103 = vmatpush2.bf16.msra.mxu0 %v6110
    %7104 = vmatprep.subr.bf16.mxu0 %v6107
    %7105 = vmatpush2.bf16.msra.mxu0 %v6106
    %7106 = vmatprep.subr.bf16.mxu0 %v6103
    %7107 = vmatpush2.bf16.msra.mxu0 %v6102
    %7108 = vmatprep.subr.bf16.mxu0 %v6099
    %7109 = vmatpush2.bf16.msra.mxu0 %v6098
    %7110 = vmatprep.subr.bf16.mxu0 %v6095
    %7111 = vmatpush2.bf16.msra.mxu0 %v6094
    %7112 = vmatprep.subr.bf16.mxu0 %v6091
    %7113 = vmatpush2.bf16.msra.mxu0 %v6090
    %7114 = vmatprep.mubr.bf16.mxu0 %v3973
    %7115 = vmatmul.mubr.bf16.gmra.mxu0 %v3972
    %v7116 = vpop.f32.mrf.mxu0
    %v7117 = vadd.f32 %v4505, %v7116
    %v7118 = vpop.f32.mrf.mxu0
    %v7119 = vadd.f32 %v4509, %v7118
    %v7120 = vpop.f32.mrf.mxu0
    %v7121 = vadd.f32 %v4505, %v7120
    %v7122 = vpop.f32.mrf.mxu0
    %v7123 = vadd.f32 %v4509, %v7122
    %7124 = vdwg.mxu0
    %7125 = vmatprep.subr.bf16.mxu0 %v6151
    %7126 = vmatpush1.bf16.msra.mxu0 %v6150
    %7127 = vmatprep.subr.bf16.mxu0 %v6147
    %7128 = vmatpush1.bf16.msra.mxu0 %v6146
    %7129 = vmatprep.subr.bf16.mxu0 %v6143
    %7130 = vmatpush1.bf16.msra.mxu0 %v6142
    %7131 = vmatprep.subr.bf16.mxu0 %v6139
    %7132 = vmatpush1.bf16.msra.mxu0 %v6138
    %7133 = vmatprep.subr.bf16.mxu0 %v6135
    %7134 = vmatpush1.bf16.msra.mxu0 %v6134
    %7135 = vmatprep.subr.bf16.mxu0 %v6131
    %7136 = vmatpush1.bf16.msra.mxu0 %v6130
    %7137 = vmatprep.subr.bf16.mxu0 %v6127
    %7138 = vmatpush1.bf16.msra.mxu0 %v6126
    %7139 = vmatprep.subr.bf16.mxu0 %v6123
    %7140 = vmatpush1.bf16.msra.mxu0 %v6122
    %7141 = vmatprep.subr.bf16.mxu0 %v6183
    %7142 = vmatpush2.bf16.msra.mxu0 %v6182
    %7143 = vmatprep.subr.bf16.mxu0 %v6179
    %7144 = vmatpush2.bf16.msra.mxu0 %v6178
    %7145 = vmatprep.subr.bf16.mxu0 %v6175
    %7146 = vmatpush2.bf16.msra.mxu0 %v6174
    %7147 = vmatprep.subr.bf16.mxu0 %v6171
    %7148 = vmatpush2.bf16.msra.mxu0 %v6170
    %7149 = vmatprep.subr.bf16.mxu0 %v6167
    %7150 = vmatpush2.bf16.msra.mxu0 %v6166
    %7151 = vmatprep.subr.bf16.mxu0 %v6163
    %7152 = vmatpush2.bf16.msra.mxu0 %v6162
    %7153 = vmatprep.subr.bf16.mxu0 %v6159
    %7154 = vmatpush2.bf16.msra.mxu0 %v6158
    %7155 = vmatprep.subr.bf16.mxu0 %v6155
    %7156 = vmatpush2.bf16.msra.mxu0 %v6154
    %7157 = vmatprep.mubr.bf16.mxu0 %v3975
    %7158 = vmatmul.mubr.bf16.gmra.mxu0 %v3974
    %v7159 = vpop.f32.mrf.mxu0
    %v7160 = vadd.f32 %v7117, %v7159
    %v7161 = vpop.f32.mrf.mxu0
    %v7162 = vadd.f32 %v7119, %v7161
    %v7163 = vpop.f32.mrf.mxu0
    %v7164 = vadd.f32 %v7121, %v7163
    %v7165 = vpop.f32.mrf.mxu0
    %v7166 = vadd.f32 %v7123, %v7165
    %7167 = vdwg.mxu0
    %7168 = vmatprep.subr.bf16.mxu0 %v6215
    %7169 = vmatpush1.bf16.msra.mxu0 %v6214
    %7170 = vmatprep.subr.bf16.mxu0 %v6211
    %7171 = vmatpush1.bf16.msra.mxu0 %v6210
    %7172 = vmatprep.subr.bf16.mxu0 %v6207
    %7173 = vmatpush1.bf16.msra.mxu0 %v6206
    %7174 = vmatprep.subr.bf16.mxu0 %v6203
    %7175 = vmatpush1.bf16.msra.mxu0 %v6202
    %7176 = vmatprep.subr.bf16.mxu0 %v6199
    %7177 = vmatpush1.bf16.msra.mxu0 %v6198
    %7178 = vmatprep.subr.bf16.mxu0 %v6195
    %7179 = vmatpush1.bf16.msra.mxu0 %v6194
    %7180 = vmatprep.subr.bf16.mxu0 %v6191
    %7181 = vmatpush1.bf16.msra.mxu0 %v6190
    %7182 = vmatprep.subr.bf16.mxu0 %v6187
    %7183 = vmatpush1.bf16.msra.mxu0 %v6186
    %7184 = vmatprep.subr.bf16.mxu0 %v6247
    %7185 = vmatpush2.bf16.msra.mxu0 %v6246
    %7186 = vmatprep.subr.bf16.mxu0 %v6243
    %7187 = vmatpush2.bf16.msra.mxu0 %v6242
    %7188 = vmatprep.subr.bf16.mxu0 %v6239
    %7189 = vmatpush2.bf16.msra.mxu0 %v6238
    %7190 = vmatprep.subr.bf16.mxu0 %v6235
    %7191 = vmatpush2.bf16.msra.mxu0 %v6234
    %7192 = vmatprep.subr.bf16.mxu0 %v6231
    %7193 = vmatpush2.bf16.msra.mxu0 %v6230
    %7194 = vmatprep.subr.bf16.mxu0 %v6227
    %7195 = vmatpush2.bf16.msra.mxu0 %v6226
    %7196 = vmatprep.subr.bf16.mxu0 %v6223
    %7197 = vmatpush2.bf16.msra.mxu0 %v6222
    %7198 = vmatprep.subr.bf16.mxu0 %v6219
    %7199 = vmatpush2.bf16.msra.mxu0 %v6218
    %7200 = vmatprep.mubr.bf16.mxu0 %v3977
    %7201 = vmatmul.mubr.bf16.gmra.mxu0 %v3976
    %v7202 = vpop.f32.mrf.mxu0
    %v7203 = vadd.f32 %v7160, %v7202
    %v7204 = vpop.f32.mrf.mxu0
    %v7205 = vadd.f32 %v7162, %v7204
    %v7206 = vpop.f32.mrf.mxu0
    %v7207 = vadd.f32 %v7164, %v7206
    %v7208 = vpop.f32.mrf.mxu0
    %v7209 = vadd.f32 %v7166, %v7208
    %7210 = vdwg.mxu0
    %7211 = vmatprep.subr.bf16.mxu0 %v6279
    %7212 = vmatpush1.bf16.msra.mxu0 %v6278
    %7213 = vmatprep.subr.bf16.mxu0 %v6275
    %7214 = vmatpush1.bf16.msra.mxu0 %v6274
    %7215 = vmatprep.subr.bf16.mxu0 %v6271
    %7216 = vmatpush1.bf16.msra.mxu0 %v6270
    %7217 = vmatprep.subr.bf16.mxu0 %v6267
    %7218 = vmatpush1.bf16.msra.mxu0 %v6266
    %7219 = vmatprep.subr.bf16.mxu0 %v6263
    %7220 = vmatpush1.bf16.msra.mxu0 %v6262
    %7221 = vmatprep.subr.bf16.mxu0 %v6259
    %7222 = vmatpush1.bf16.msra.mxu0 %v6258
    %7223 = vmatprep.subr.bf16.mxu0 %v6255
    %7224 = vmatpush1.bf16.msra.mxu0 %v6254
    %7225 = vmatprep.subr.bf16.mxu0 %v6251
    %7226 = vmatpush1.bf16.msra.mxu0 %v6250
    %7227 = vmatprep.subr.bf16.mxu0 %v6311
    %7228 = vmatpush2.bf16.msra.mxu0 %v6310
    %7229 = vmatprep.subr.bf16.mxu0 %v6307
    %7230 = vmatpush2.bf16.msra.mxu0 %v6306
    %7231 = vmatprep.subr.bf16.mxu0 %v6303
    %7232 = vmatpush2.bf16.msra.mxu0 %v6302
    %7233 = vmatprep.subr.bf16.mxu0 %v6299
    %7234 = vmatpush2.bf16.msra.mxu0 %v6298
    %7235 = vmatprep.subr.bf16.mxu0 %v6295
    %7236 = vmatpush2.bf16.msra.mxu0 %v6294
    %7237 = vmatprep.subr.bf16.mxu0 %v6291
    %7238 = vmatpush2.bf16.msra.mxu0 %v6290
    %7239 = vmatprep.subr.bf16.mxu0 %v6287
    %7240 = vmatpush2.bf16.msra.mxu0 %v6286
    %7241 = vmatprep.subr.bf16.mxu0 %v6283
    %7242 = vmatpush2.bf16.msra.mxu0 %v6282
    %7243 = vmatprep.mubr.bf16.mxu0 %v3979
    %7244 = vmatmul.mubr.bf16.gmra.mxu0 %v3978
    %v7245 = vpop.f32.mrf.mxu0
    %v7246 = vadd.f32 %v7203, %v7245
    %v7247 = vpop.f32.mrf.mxu0
    %v7248 = vadd.f32 %v7205, %v7247
    %v7249 = vpop.f32.mrf.mxu0
    %v7250 = vadd.f32 %v7207, %v7249
    %v7251 = vpop.f32.mrf.mxu0
    %v7252 = vadd.f32 %v7209, %v7251
    %7253 = vdwg.mxu0
    %7254 = vmatprep.subr.bf16.mxu0 %v6343
    %7255 = vmatpush1.bf16.msra.mxu0 %v6342
    %7256 = vmatprep.subr.bf16.mxu0 %v6339
    %7257 = vmatpush1.bf16.msra.mxu0 %v6338
    %7258 = vmatprep.subr.bf16.mxu0 %v6335
    %7259 = vmatpush1.bf16.msra.mxu0 %v6334
    %7260 = vmatprep.subr.bf16.mxu0 %v6331
    %7261 = vmatpush1.bf16.msra.mxu0 %v6330
    %7262 = vmatprep.subr.bf16.mxu0 %v6327
    %7263 = vmatpush1.bf16.msra.mxu0 %v6326
    %7264 = vmatprep.subr.bf16.mxu0 %v6323
    %7265 = vmatpush1.bf16.msra.mxu0 %v6322
    %7266 = vmatprep.subr.bf16.mxu0 %v6319
    %7267 = vmatpush1.bf16.msra.mxu0 %v6318
    %7268 = vmatprep.subr.bf16.mxu0 %v6315
    %7269 = vmatpush1.bf16.msra.mxu0 %v6314
    %7270 = vmatprep.subr.bf16.mxu0 %v6375
    %7271 = vmatpush2.bf16.msra.mxu0 %v6374
    %7272 = vmatprep.subr.bf16.mxu0 %v6371
    %7273 = vmatpush2.bf16.msra.mxu0 %v6370
    %7274 = vmatprep.subr.bf16.mxu0 %v6367
    %7275 = vmatpush2.bf16.msra.mxu0 %v6366
    %7276 = vmatprep.subr.bf16.mxu0 %v6363
    %7277 = vmatpush2.bf16.msra.mxu0 %v6362
    %7278 = vmatprep.subr.bf16.mxu0 %v6359
    %7279 = vmatpush2.bf16.msra.mxu0 %v6358
    %7280 = vmatprep.subr.bf16.mxu0 %v6355
    %7281 = vmatpush2.bf16.msra.mxu0 %v6354
    %7282 = vmatprep.subr.bf16.mxu0 %v6351
    %7283 = vmatpush2.bf16.msra.mxu0 %v6350
    %7284 = vmatprep.subr.bf16.mxu0 %v6347
    %7285 = vmatpush2.bf16.msra.mxu0 %v6346
    %7286 = vmatprep.mubr.bf16.mxu0 %v3981
    %7287 = vmatmul.mubr.bf16.gmra.mxu0 %v3980
    %v7288 = vpop.f32.mrf.mxu0
    %v7289 = vadd.f32 %v7246, %v7288
    %v7290 = vpop.f32.mrf.mxu0
    %v7291 = vadd.f32 %v7248, %v7290
    %v7292 = vpop.f32.mrf.mxu0
    %v7293 = vadd.f32 %v7250, %v7292
    %v7294 = vpop.f32.mrf.mxu0
    %v7295 = vadd.f32 %v7252, %v7294
    %7296 = vdwg.mxu0
    %7297 = vmatprep.subr.bf16.mxu0 %v6407
    %7298 = vmatpush1.bf16.msra.mxu0 %v6406
    %7299 = vmatprep.subr.bf16.mxu0 %v6403
    %7300 = vmatpush1.bf16.msra.mxu0 %v6402
    %7301 = vmatprep.subr.bf16.mxu0 %v6399
    %7302 = vmatpush1.bf16.msra.mxu0 %v6398
    %7303 = vmatprep.subr.bf16.mxu0 %v6395
    %7304 = vmatpush1.bf16.msra.mxu0 %v6394
    %7305 = vmatprep.subr.bf16.mxu0 %v6391
    %7306 = vmatpush1.bf16.msra.mxu0 %v6390
    %7307 = vmatprep.subr.bf16.mxu0 %v6387
    %7308 = vmatpush1.bf16.msra.mxu0 %v6386
    %7309 = vmatprep.subr.bf16.mxu0 %v6383
    %7310 = vmatpush1.bf16.msra.mxu0 %v6382
    %7311 = vmatprep.subr.bf16.mxu0 %v6379
    %7312 = vmatpush1.bf16.msra.mxu0 %v6378
    %7313 = vmatprep.subr.bf16.mxu0 %v6439
    %7314 = vmatpush2.bf16.msra.mxu0 %v6438
    %7315 = vmatprep.subr.bf16.mxu0 %v6435
    %7316 = vmatpush2.bf16.msra.mxu0 %v6434
    %7317 = vmatprep.subr.bf16.mxu0 %v6431
    %7318 = vmatpush2.bf16.msra.mxu0 %v6430
    %7319 = vmatprep.subr.bf16.mxu0 %v6427
    %7320 = vmatpush2.bf16.msra.mxu0 %v6426
    %7321 = vmatprep.subr.bf16.mxu0 %v6423
    %7322 = vmatpush2.bf16.msra.mxu0 %v6422
    %7323 = vmatprep.subr.bf16.mxu0 %v6419
    %7324 = vmatpush2.bf16.msra.mxu0 %v6418
    %7325 = vmatprep.subr.bf16.mxu0 %v6415
    %7326 = vmatpush2.bf16.msra.mxu0 %v6414
    %7327 = vmatprep.subr.bf16.mxu0 %v6411
    %7328 = vmatpush2.bf16.msra.mxu0 %v6410
    %7329 = vmatprep.mubr.bf16.mxu0 %v3983
    %7330 = vmatmul.mubr.bf16.gmra.mxu0 %v3982
    %v7331 = vpop.f32.mrf.mxu0
    %v7332 = vadd.f32 %v7289, %v7331
    %v7333 = vpop.f32.mrf.mxu0
    %v7334 = vadd.f32 %v7291, %v7333
    %v7335 = vpop.f32.mrf.mxu0
    %v7336 = vadd.f32 %v7293, %v7335
    %v7337 = vpop.f32.mrf.mxu0
    %v7338 = vadd.f32 %v7295, %v7337
    %7339 = vdwg.mxu0
    %7340 = vmatprep.subr.bf16.mxu0 %v6471
    %7341 = vmatpush1.bf16.msra.mxu0 %v6470
    %7342 = vmatprep.subr.bf16.mxu0 %v6467
    %7343 = vmatpush1.bf16.msra.mxu0 %v6466
    %7344 = vmatprep.subr.bf16.mxu0 %v6463
    %7345 = vmatpush1.bf16.msra.mxu0 %v6462
    %7346 = vmatprep.subr.bf16.mxu0 %v6459
    %7347 = vmatpush1.bf16.msra.mxu0 %v6458
    %7348 = vmatprep.subr.bf16.mxu0 %v6455
    %7349 = vmatpush1.bf16.msra.mxu0 %v6454
    %7350 = vmatprep.subr.bf16.mxu0 %v6451
    %7351 = vmatpush1.bf16.msra.mxu0 %v6450
    %7352 = vmatprep.subr.bf16.mxu0 %v6447
    %7353 = vmatpush1.bf16.msra.mxu0 %v6446
    %7354 = vmatprep.subr.bf16.mxu0 %v6443
    %7355 = vmatpush1.bf16.msra.mxu0 %v6442
    %7356 = vmatprep.subr.bf16.mxu0 %v6503
    %7357 = vmatpush2.bf16.msra.mxu0 %v6502
    %7358 = vmatprep.subr.bf16.mxu0 %v6499
    %7359 = vmatpush2.bf16.msra.mxu0 %v6498
    %7360 = vmatprep.subr.bf16.mxu0 %v6495
    %7361 = vmatpush2.bf16.msra.mxu0 %v6494
    %7362 = vmatprep.subr.bf16.mxu0 %v6491
    %7363 = vmatpush2.bf16.msra.mxu0 %v6490
    %7364 = vmatprep.subr.bf16.mxu0 %v6487
    %7365 = vmatpush2.bf16.msra.mxu0 %v6486
    %7366 = vmatprep.subr.bf16.mxu0 %v6483
    %7367 = vmatpush2.bf16.msra.mxu0 %v6482
    %7368 = vmatprep.subr.bf16.mxu0 %v6479
    %7369 = vmatpush2.bf16.msra.mxu0 %v6478
    %7370 = vmatprep.subr.bf16.mxu0 %v6475
    %7371 = vmatpush2.bf16.msra.mxu0 %v6474
    %7372 = vmatprep.mubr.bf16.mxu0 %v3985
    %7373 = vmatmul.mubr.bf16.gmra.mxu0 %v3984
    %v7374 = vpop.f32.mrf.mxu0
    %v7375 = vadd.f32 %v7332, %v7374
    %v7376 = vpop.f32.mrf.mxu0
    %v7377 = vadd.f32 %v7334, %v7376
    %v7378 = vpop.f32.mrf.mxu0
    %v7379 = vadd.f32 %v7336, %v7378
    %v7380 = vpop.f32.mrf.mxu0
    %v7381 = vadd.f32 %v7338, %v7380
    %7382 = vdwg.mxu0
    %7383 = vmatprep.subr.bf16.mxu0 %v6535
    %7384 = vmatpush1.bf16.msra.mxu0 %v6534
    %7385 = vmatprep.subr.bf16.mxu0 %v6531
    %7386 = vmatpush1.bf16.msra.mxu0 %v6530
    %7387 = vmatprep.subr.bf16.mxu0 %v6527
    %7388 = vmatpush1.bf16.msra.mxu0 %v6526
    %7389 = vmatprep.subr.bf16.mxu0 %v6523
    %7390 = vmatpush1.bf16.msra.mxu0 %v6522
    %7391 = vmatprep.subr.bf16.mxu0 %v6519
    %7392 = vmatpush1.bf16.msra.mxu0 %v6518
    %7393 = vmatprep.subr.bf16.mxu0 %v6515
    %7394 = vmatpush1.bf16.msra.mxu0 %v6514
    %7395 = vmatprep.subr.bf16.mxu0 %v6511
    %7396 = vmatpush1.bf16.msra.mxu0 %v6510
    %7397 = vmatprep.subr.bf16.mxu0 %v6507
    %7398 = vmatpush1.bf16.msra.mxu0 %v6506
    %7399 = vmatprep.subr.bf16.mxu0 %v6567
    %7400 = vmatpush2.bf16.msra.mxu0 %v6566
    %7401 = vmatprep.subr.bf16.mxu0 %v6563
    %7402 = vmatpush2.bf16.msra.mxu0 %v6562
    %7403 = vmatprep.subr.bf16.mxu0 %v6559
    %7404 = vmatpush2.bf16.msra.mxu0 %v6558
    %7405 = vmatprep.subr.bf16.mxu0 %v6555
    %7406 = vmatpush2.bf16.msra.mxu0 %v6554
    %7407 = vmatprep.subr.bf16.mxu0 %v6551
    %7408 = vmatpush2.bf16.msra.mxu0 %v6550
    %7409 = vmatprep.subr.bf16.mxu0 %v6547
    %7410 = vmatpush2.bf16.msra.mxu0 %v6546
    %7411 = vmatprep.subr.bf16.mxu0 %v6543
    %7412 = vmatpush2.bf16.msra.mxu0 %v6542
    %7413 = vmatprep.subr.bf16.mxu0 %v6539
    %7414 = vmatpush2.bf16.msra.mxu0 %v6538
    %7415 = vmatprep.mubr.bf16.mxu0 %v3987
    %7416 = vmatmul.mubr.bf16.gmra.mxu0 %v3986
    %v7417 = vpop.f32.mrf.mxu0
    %v7418 = vadd.f32 %v7375, %v7417
    %v7419 = vpop.f32.mrf.mxu0
    %v7420 = vadd.f32 %v7377, %v7419
    %v7421 = vpop.f32.mrf.mxu0
    %v7422 = vadd.f32 %v7379, %v7421
    %v7423 = vpop.f32.mrf.mxu0
    %v7424 = vadd.f32 %v7381, %v7423
    %7425 = vdwg.mxu0
    %7426 = vmatprep.subr.bf16.mxu0 %v6089
    %7427 = vmatpush1.bf16.msra.mxu0 %v6088
    %7428 = vmatprep.subr.bf16.mxu0 %v6085
    %7429 = vmatpush1.bf16.msra.mxu0 %v6084
    %7430 = vmatprep.subr.bf16.mxu0 %v6081
    %7431 = vmatpush1.bf16.msra.mxu0 %v6080
    %7432 = vmatprep.subr.bf16.mxu0 %v6077
    %7433 = vmatpush1.bf16.msra.mxu0 %v6076
    %7434 = vmatprep.subr.bf16.mxu0 %v6073
    %7435 = vmatpush1.bf16.msra.mxu0 %v6072
    %7436 = vmatprep.subr.bf16.mxu0 %v6069
    %7437 = vmatpush1.bf16.msra.mxu0 %v6068
    %7438 = vmatprep.subr.bf16.mxu0 %v6065
    %7439 = vmatpush1.bf16.msra.mxu0 %v6064
    %7440 = vmatprep.subr.bf16.mxu0 %v6061
    %7441 = vmatpush1.bf16.msra.mxu0 %v6060
    %7442 = vmatprep.subr.bf16.mxu0 %v6121
    %7443 = vmatpush2.bf16.msra.mxu0 %v6120
    %7444 = vmatprep.subr.bf16.mxu0 %v6117
    %7445 = vmatpush2.bf16.msra.mxu0 %v6116
    %7446 = vmatprep.subr.bf16.mxu0 %v6113
    %7447 = vmatpush2.bf16.msra.mxu0 %v6112
    %7448 = vmatprep.subr.bf16.mxu0 %v6109
    %7449 = vmatpush2.bf16.msra.mxu0 %v6108
    %7450 = vmatprep.subr.bf16.mxu0 %v6105
    %7451 = vmatpush2.bf16.msra.mxu0 %v6104
    %7452 = vmatprep.subr.bf16.mxu0 %v6101
    %7453 = vmatpush2.bf16.msra.mxu0 %v6100
    %7454 = vmatprep.subr.bf16.mxu0 %v6097
    %7455 = vmatpush2.bf16.msra.mxu0 %v6096
    %7456 = vmatprep.subr.bf16.mxu0 %v6093
    %7457 = vmatpush2.bf16.msra.mxu0 %v6092
    %7458 = vmatprep.mubr.bf16.mxu0 %v3973
    %7459 = vmatmul.mubr.bf16.gmra.mxu0 %v3972
    %v7460 = vpop.f32.mrf.mxu0
    %v7461 = vadd.f32 %v4513, %v7460
    %v7462 = vpop.f32.mrf.mxu0
    %v7463 = vadd.f32 %v4517, %v7462
    %v7464 = vpop.f32.mrf.mxu0
    %v7465 = vadd.f32 %v4513, %v7464
    %v7466 = vpop.f32.mrf.mxu0
    %v7467 = vadd.f32 %v4517, %v7466
    %7468 = vdwg.mxu0
    %7469 = vmatprep.subr.bf16.mxu0 %v6153
    %7470 = vmatpush1.bf16.msra.mxu0 %v6152
    %7471 = vmatprep.subr.bf16.mxu0 %v6149
    %7472 = vmatpush1.bf16.msra.mxu0 %v6148
    %7473 = vmatprep.subr.bf16.mxu0 %v6145
    %7474 = vmatpush1.bf16.msra.mxu0 %v6144
    %7475 = vmatprep.subr.bf16.mxu0 %v6141
    %7476 = vmatpush1.bf16.msra.mxu0 %v6140
    %7477 = vmatprep.subr.bf16.mxu0 %v6137
    %7478 = vmatpush1.bf16.msra.mxu0 %v6136
    %7479 = vmatprep.subr.bf16.mxu0 %v6133
    %7480 = vmatpush1.bf16.msra.mxu0 %v6132
    %7481 = vmatprep.subr.bf16.mxu0 %v6129
    %7482 = vmatpush1.bf16.msra.mxu0 %v6128
    %7483 = vmatprep.subr.bf16.mxu0 %v6125
    %7484 = vmatpush1.bf16.msra.mxu0 %v6124
    %7485 = vmatprep.subr.bf16.mxu0 %v6185
    %7486 = vmatpush2.bf16.msra.mxu0 %v6184
    %7487 = vmatprep.subr.bf16.mxu0 %v6181
    %7488 = vmatpush2.bf16.msra.mxu0 %v6180
    %7489 = vmatprep.subr.bf16.mxu0 %v6177
    %7490 = vmatpush2.bf16.msra.mxu0 %v6176
    %7491 = vmatprep.subr.bf16.mxu0 %v6173
    %7492 = vmatpush2.bf16.msra.mxu0 %v6172
    %7493 = vmatprep.subr.bf16.mxu0 %v6169
    %7494 = vmatpush2.bf16.msra.mxu0 %v6168
    %7495 = vmatprep.subr.bf16.mxu0 %v6165
    %7496 = vmatpush2.bf16.msra.mxu0 %v6164
    %7497 = vmatprep.subr.bf16.mxu0 %v6161
    %7498 = vmatpush2.bf16.msra.mxu0 %v6160
    %7499 = vmatprep.subr.bf16.mxu0 %v6157
    %7500 = vmatpush2.bf16.msra.mxu0 %v6156
    %7501 = vmatprep.mubr.bf16.mxu0 %v3975
    %7502 = vmatmul.mubr.bf16.gmra.mxu0 %v3974
    %v7503 = vpop.f32.mrf.mxu0
    %v7504 = vadd.f32 %v7461, %v7503
    %v7505 = vpop.f32.mrf.mxu0
    %v7506 = vadd.f32 %v7463, %v7505
    %v7507 = vpop.f32.mrf.mxu0
    %v7508 = vadd.f32 %v7465, %v7507
    %v7509 = vpop.f32.mrf.mxu0
    %v7510 = vadd.f32 %v7467, %v7509
    %7511 = vdwg.mxu0
    %7512 = vmatprep.subr.bf16.mxu0 %v6217
    %7513 = vmatpush1.bf16.msra.mxu0 %v6216
    %7514 = vmatprep.subr.bf16.mxu0 %v6213
    %7515 = vmatpush1.bf16.msra.mxu0 %v6212
    %7516 = vmatprep.subr.bf16.mxu0 %v6209
    %7517 = vmatpush1.bf16.msra.mxu0 %v6208
    %7518 = vmatprep.subr.bf16.mxu0 %v6205
    %7519 = vmatpush1.bf16.msra.mxu0 %v6204
    %7520 = vmatprep.subr.bf16.mxu0 %v6201
    %7521 = vmatpush1.bf16.msra.mxu0 %v6200
    %7522 = vmatprep.subr.bf16.mxu0 %v6197
    %7523 = vmatpush1.bf16.msra.mxu0 %v6196
    %7524 = vmatprep.subr.bf16.mxu0 %v6193
    %7525 = vmatpush1.bf16.msra.mxu0 %v6192
    %7526 = vmatprep.subr.bf16.mxu0 %v6189
    %7527 = vmatpush1.bf16.msra.mxu0 %v6188
    %7528 = vmatprep.subr.bf16.mxu0 %v6249
    %7529 = vmatpush2.bf16.msra.mxu0 %v6248
    %7530 = vmatprep.subr.bf16.mxu0 %v6245
    %7531 = vmatpush2.bf16.msra.mxu0 %v6244
    %7532 = vmatprep.subr.bf16.mxu0 %v6241
    %7533 = vmatpush2.bf16.msra.mxu0 %v6240
    %7534 = vmatprep.subr.bf16.mxu0 %v6237
    %7535 = vmatpush2.bf16.msra.mxu0 %v6236
    %7536 = vmatprep.subr.bf16.mxu0 %v6233
    %7537 = vmatpush2.bf16.msra.mxu0 %v6232
    %7538 = vmatprep.subr.bf16.mxu0 %v6229
    %7539 = vmatpush2.bf16.msra.mxu0 %v6228
    %7540 = vmatprep.subr.bf16.mxu0 %v6225
    %7541 = vmatpush2.bf16.msra.mxu0 %v6224
    %7542 = vmatprep.subr.bf16.mxu0 %v6221
    %7543 = vmatpush2.bf16.msra.mxu0 %v6220
    %7544 = vmatprep.mubr.bf16.mxu0 %v3977
    %7545 = vmatmul.mubr.bf16.gmra.mxu0 %v3976
    %v7546 = vpop.f32.mrf.mxu0
    %v7547 = vadd.f32 %v7504, %v7546
    %v7548 = vpop.f32.mrf.mxu0
    %v7549 = vadd.f32 %v7506, %v7548
    %v7550 = vpop.f32.mrf.mxu0
    %v7551 = vadd.f32 %v7508, %v7550
    %v7552 = vpop.f32.mrf.mxu0
    %v7553 = vadd.f32 %v7510, %v7552
    %7554 = vdwg.mxu0
    %7555 = vmatprep.subr.bf16.mxu0 %v6281
    %7556 = vmatpush1.bf16.msra.mxu0 %v6280
    %7557 = vmatprep.subr.bf16.mxu0 %v6277
    %7558 = vmatpush1.bf16.msra.mxu0 %v6276
    %7559 = vmatprep.subr.bf16.mxu0 %v6273
    %7560 = vmatpush1.bf16.msra.mxu0 %v6272
    %7561 = vmatprep.subr.bf16.mxu0 %v6269
    %7562 = vmatpush1.bf16.msra.mxu0 %v6268
    %7563 = vmatprep.subr.bf16.mxu0 %v6265
    %7564 = vmatpush1.bf16.msra.mxu0 %v6264
    %7565 = vmatprep.subr.bf16.mxu0 %v6261
    %7566 = vmatpush1.bf16.msra.mxu0 %v6260
    %7567 = vmatprep.subr.bf16.mxu0 %v6257
    %7568 = vmatpush1.bf16.msra.mxu0 %v6256
    %7569 = vmatprep.subr.bf16.mxu0 %v6253
    %7570 = vmatpush1.bf16.msra.mxu0 %v6252
    %7571 = vmatprep.subr.bf16.mxu0 %v6313
    %7572 = vmatpush2.bf16.msra.mxu0 %v6312
    %7573 = vmatprep.subr.bf16.mxu0 %v6309
    %7574 = vmatpush2.bf16.msra.mxu0 %v6308
    %7575 = vmatprep.subr.bf16.mxu0 %v6305
    %7576 = vmatpush2.bf16.msra.mxu0 %v6304
    %7577 = vmatprep.subr.bf16.mxu0 %v6301
    %7578 = vmatpush2.bf16.msra.mxu0 %v6300
    %7579 = vmatprep.subr.bf16.mxu0 %v6297
    %7580 = vmatpush2.bf16.msra.mxu0 %v6296
    %7581 = vmatprep.subr.bf16.mxu0 %v6293
    %7582 = vmatpush2.bf16.msra.mxu0 %v6292
    %7583 = vmatprep.subr.bf16.mxu0 %v6289
    %7584 = vmatpush2.bf16.msra.mxu0 %v6288
    %7585 = vmatprep.subr.bf16.mxu0 %v6285
    %7586 = vmatpush2.bf16.msra.mxu0 %v6284
    %7587 = vmatprep.mubr.bf16.mxu0 %v3979
    %7588 = vmatmul.mubr.bf16.gmra.mxu0 %v3978
    %v7589 = vpop.f32.mrf.mxu0
    %v7590 = vadd.f32 %v7547, %v7589
    %v7591 = vpop.f32.mrf.mxu0
    %v7592 = vadd.f32 %v7549, %v7591
    %v7593 = vpop.f32.mrf.mxu0
    %v7594 = vadd.f32 %v7551, %v7593
    %v7595 = vpop.f32.mrf.mxu0
    %v7596 = vadd.f32 %v7553, %v7595
    %7597 = vdwg.mxu0
    %7598 = vmatprep.subr.bf16.mxu0 %v6345
    %7599 = vmatpush1.bf16.msra.mxu0 %v6344
    %7600 = vmatprep.subr.bf16.mxu0 %v6341
    %7601 = vmatpush1.bf16.msra.mxu0 %v6340
    %7602 = vmatprep.subr.bf16.mxu0 %v6337
    %7603 = vmatpush1.bf16.msra.mxu0 %v6336
    %7604 = vmatprep.subr.bf16.mxu0 %v6333
    %7605 = vmatpush1.bf16.msra.mxu0 %v6332
    %7606 = vmatprep.subr.bf16.mxu0 %v6329
    %7607 = vmatpush1.bf16.msra.mxu0 %v6328
    %7608 = vmatprep.subr.bf16.mxu0 %v6325
    %7609 = vmatpush1.bf16.msra.mxu0 %v6324
    %7610 = vmatprep.subr.bf16.mxu0 %v6321
    %7611 = vmatpush1.bf16.msra.mxu0 %v6320
    %7612 = vmatprep.subr.bf16.mxu0 %v6317
    %7613 = vmatpush1.bf16.msra.mxu0 %v6316
    %7614 = vmatprep.subr.bf16.mxu0 %v6377
    %7615 = vmatpush2.bf16.msra.mxu0 %v6376
    %7616 = vmatprep.subr.bf16.mxu0 %v6373
    %7617 = vmatpush2.bf16.msra.mxu0 %v6372
    %7618 = vmatprep.subr.bf16.mxu0 %v6369
    %7619 = vmatpush2.bf16.msra.mxu0 %v6368
    %7620 = vmatprep.subr.bf16.mxu0 %v6365
    %7621 = vmatpush2.bf16.msra.mxu0 %v6364
    %7622 = vmatprep.subr.bf16.mxu0 %v6361
    %7623 = vmatpush2.bf16.msra.mxu0 %v6360
    %7624 = vmatprep.subr.bf16.mxu0 %v6357
    %7625 = vmatpush2.bf16.msra.mxu0 %v6356
    %7626 = vmatprep.subr.bf16.mxu0 %v6353
    %7627 = vmatpush2.bf16.msra.mxu0 %v6352
    %7628 = vmatprep.subr.bf16.mxu0 %v6349
    %7629 = vmatpush2.bf16.msra.mxu0 %v6348
    %7630 = vmatprep.mubr.bf16.mxu0 %v3981
    %7631 = vmatmul.mubr.bf16.gmra.mxu0 %v3980
    %v7632 = vpop.f32.mrf.mxu0
    %v7633 = vadd.f32 %v7590, %v7632
    %v7634 = vpop.f32.mrf.mxu0
    %v7635 = vadd.f32 %v7592, %v7634
    %v7636 = vpop.f32.mrf.mxu0
    %v7637 = vadd.f32 %v7594, %v7636
    %v7638 = vpop.f32.mrf.mxu0
    %v7639 = vadd.f32 %v7596, %v7638
    %7640 = vdwg.mxu0
    %7641 = vmatprep.subr.bf16.mxu0 %v6409
    %7642 = vmatpush1.bf16.msra.mxu0 %v6408
    %7643 = vmatprep.subr.bf16.mxu0 %v6405
    %7644 = vmatpush1.bf16.msra.mxu0 %v6404
    %7645 = vmatprep.subr.bf16.mxu0 %v6401
    %7646 = vmatpush1.bf16.msra.mxu0 %v6400
    %7647 = vmatprep.subr.bf16.mxu0 %v6397
    %7648 = vmatpush1.bf16.msra.mxu0 %v6396
    %7649 = vmatprep.subr.bf16.mxu0 %v6393
    %7650 = vmatpush1.bf16.msra.mxu0 %v6392
    %7651 = vmatprep.subr.bf16.mxu0 %v6389
    %7652 = vmatpush1.bf16.msra.mxu0 %v6388
    %7653 = vmatprep.subr.bf16.mxu0 %v6385
    %7654 = vmatpush1.bf16.msra.mxu0 %v6384
    %7655 = vmatprep.subr.bf16.mxu0 %v6381
    %7656 = vmatpush1.bf16.msra.mxu0 %v6380
    %7657 = vmatprep.subr.bf16.mxu0 %v6441
    %7658 = vmatpush2.bf16.msra.mxu0 %v6440
    %7659 = vmatprep.subr.bf16.mxu0 %v6437
    %7660 = vmatpush2.bf16.msra.mxu0 %v6436
    %7661 = vmatprep.subr.bf16.mxu0 %v6433
    %7662 = vmatpush2.bf16.msra.mxu0 %v6432
    %7663 = vmatprep.subr.bf16.mxu0 %v6429
    %7664 = vmatpush2.bf16.msra.mxu0 %v6428
    %7665 = vmatprep.subr.bf16.mxu0 %v6425
    %7666 = vmatpush2.bf16.msra.mxu0 %v6424
    %7667 = vmatprep.subr.bf16.mxu0 %v6421
    %7668 = vmatpush2.bf16.msra.mxu0 %v6420
    %7669 = vmatprep.subr.bf16.mxu0 %v6417
    %7670 = vmatpush2.bf16.msra.mxu0 %v6416
    %7671 = vmatprep.subr.bf16.mxu0 %v6413
    %7672 = vmatpush2.bf16.msra.mxu0 %v6412
    %7673 = vmatprep.mubr.bf16.mxu0 %v3983
    %7674 = vmatmul.mubr.bf16.gmra.mxu0 %v3982
    %v7675 = vpop.f32.mrf.mxu0
    %v7676 = vadd.f32 %v7633, %v7675
    %v7677 = vpop.f32.mrf.mxu0
    %v7678 = vadd.f32 %v7635, %v7677
    %v7679 = vpop.f32.mrf.mxu0
    %v7680 = vadd.f32 %v7637, %v7679
    %v7681 = vpop.f32.mrf.mxu0
    %v7682 = vadd.f32 %v7639, %v7681
    %7683 = vdwg.mxu0
    %7684 = vmatprep.subr.bf16.mxu0 %v6473
    %7685 = vmatpush1.bf16.msra.mxu0 %v6472
    %7686 = vmatprep.subr.bf16.mxu0 %v6469
    %7687 = vmatpush1.bf16.msra.mxu0 %v6468
    %7688 = vmatprep.subr.bf16.mxu0 %v6465
    %7689 = vmatpush1.bf16.msra.mxu0 %v6464
    %7690 = vmatprep.subr.bf16.mxu0 %v6461
    %7691 = vmatpush1.bf16.msra.mxu0 %v6460
    %7692 = vmatprep.subr.bf16.mxu0 %v6457
    %7693 = vmatpush1.bf16.msra.mxu0 %v6456
    %7694 = vmatprep.subr.bf16.mxu0 %v6453
    %7695 = vmatpush1.bf16.msra.mxu0 %v6452
    %7696 = vmatprep.subr.bf16.mxu0 %v6449
    %7697 = vmatpush1.bf16.msra.mxu0 %v6448
    %7698 = vmatprep.subr.bf16.mxu0 %v6445
    %7699 = vmatpush1.bf16.msra.mxu0 %v6444
    %7700 = vmatprep.subr.bf16.mxu0 %v6505
    %7701 = vmatpush2.bf16.msra.mxu0 %v6504
    %7702 = vmatprep.subr.bf16.mxu0 %v6501
    %7703 = vmatpush2.bf16.msra.mxu0 %v6500
    %7704 = vmatprep.subr.bf16.mxu0 %v6497
    %7705 = vmatpush2.bf16.msra.mxu0 %v6496
    %7706 = vmatprep.subr.bf16.mxu0 %v6493
    %7707 = vmatpush2.bf16.msra.mxu0 %v6492
    %7708 = vmatprep.subr.bf16.mxu0 %v6489
    %7709 = vmatpush2.bf16.msra.mxu0 %v6488
    %7710 = vmatprep.subr.bf16.mxu0 %v6485
    %7711 = vmatpush2.bf16.msra.mxu0 %v6484
    %7712 = vmatprep.subr.bf16.mxu0 %v6481
    %7713 = vmatpush2.bf16.msra.mxu0 %v6480
    %7714 = vmatprep.subr.bf16.mxu0 %v6477
    %7715 = vmatpush2.bf16.msra.mxu0 %v6476
    %7716 = vmatprep.mubr.bf16.mxu0 %v3985
    %7717 = vmatmul.mubr.bf16.gmra.mxu0 %v3984
    %v7718 = vpop.f32.mrf.mxu0
    %v7719 = vadd.f32 %v7676, %v7718
    %v7720 = vpop.f32.mrf.mxu0
    %v7721 = vadd.f32 %v7678, %v7720
    %v7722 = vpop.f32.mrf.mxu0
    %v7723 = vadd.f32 %v7680, %v7722
    %v7724 = vpop.f32.mrf.mxu0
    %v7725 = vadd.f32 %v7682, %v7724
    %7726 = vdwg.mxu0
    %7727 = vmatprep.subr.bf16.mxu0 %v6537
    %7728 = vmatpush1.bf16.msra.mxu0 %v6536
    %7729 = vmatprep.subr.bf16.mxu0 %v6533
    %7730 = vmatpush1.bf16.msra.mxu0 %v6532
    %7731 = vmatprep.subr.bf16.mxu0 %v6529
    %7732 = vmatpush1.bf16.msra.mxu0 %v6528
    %7733 = vmatprep.subr.bf16.mxu0 %v6525
    %7734 = vmatpush1.bf16.msra.mxu0 %v6524
    %7735 = vmatprep.subr.bf16.mxu0 %v6521
    %7736 = vmatpush1.bf16.msra.mxu0 %v6520
    %7737 = vmatprep.subr.bf16.mxu0 %v6517
    %7738 = vmatpush1.bf16.msra.mxu0 %v6516
    %7739 = vmatprep.subr.bf16.mxu0 %v6513
    %7740 = vmatpush1.bf16.msra.mxu0 %v6512
    %7741 = vmatprep.subr.bf16.mxu0 %v6509
    %7742 = vmatpush1.bf16.msra.mxu0 %v6508
    %7743 = vmatprep.subr.bf16.mxu0 %v6569
    %7744 = vmatpush2.bf16.msra.mxu0 %v6568
    %7745 = vmatprep.subr.bf16.mxu0 %v6565
    %7746 = vmatpush2.bf16.msra.mxu0 %v6564
    %7747 = vmatprep.subr.bf16.mxu0 %v6561
    %7748 = vmatpush2.bf16.msra.mxu0 %v6560
    %7749 = vmatprep.subr.bf16.mxu0 %v6557
    %7750 = vmatpush2.bf16.msra.mxu0 %v6556
    %7751 = vmatprep.subr.bf16.mxu0 %v6553
    %7752 = vmatpush2.bf16.msra.mxu0 %v6552
    %7753 = vmatprep.subr.bf16.mxu0 %v6549
    %7754 = vmatpush2.bf16.msra.mxu0 %v6548
    %7755 = vmatprep.subr.bf16.mxu0 %v6545
    %7756 = vmatpush2.bf16.msra.mxu0 %v6544
    %7757 = vmatprep.subr.bf16.mxu0 %v6541
    %7758 = vmatpush2.bf16.msra.mxu0 %v6540
    %7759 = vmatprep.mubr.bf16.mxu0 %v3987
    %7760 = vmatmul.mubr.bf16.gmra.mxu0 %v3986
    %v7761 = vpop.f32.mrf.mxu0
    %v7762 = vadd.f32 %v7719, %v7761
    %v7763 = vpop.f32.mrf.mxu0
    %v7764 = vadd.f32 %v7721, %v7763
    %v7765 = vpop.f32.mrf.mxu0
    %v7766 = vadd.f32 %v7723, %v7765
    %v7767 = vpop.f32.mrf.mxu0
    %v7768 = vadd.f32 %v7725, %v7767
    %7769 = vdwg.mxu0
    %7770 = vst [vmem:[#allocation10] sm:$0xff] %v7418
    %7771 = vst [vmem:[#allocation10 + $0x8] sm:$0xff] %v7420
    %7772 = vst [vmem:[#allocation10 + $0x10] sm:$0xff] %v7762
    %7773 = vst [vmem:[#allocation10 + $0x18] sm:$0xff] %v7764
    %7774 = vst [vmem:[#allocation10 + $0x20] sm:$0xff] %v7422
    %7775 = vst [vmem:[#allocation10 + $0x28] sm:$0xff] %v7424
    %7776 = vst [vmem:[#allocation10 + $0x30] sm:$0xff] %v7766
    %7777 = vst [vmem:[#allocation10 + $0x38] sm:$0xff] %v7768
    // Predicated region
    $region38: #{feed_forward.1} parent=1 // pred_check
      _
    $region39: #{feed_forward.1} parent=1 // pred_check_branch
      %7779 = sbr.rel (0) target = $region41
    $region40: #{feed_forward.1} parent=1 // pred_region
      %s7781 = ssub.s32 1024, 1024
      %7782 = vsyncadd [#allocation4], %s7781
      %s7783 = sshll.u32 [#allocation10], 4
      %s7784 = int_to_ptr.vmem [resolvable:$true] %s7783
      %7789 = dma.vmem_to_hbm [thread:$0]  %s7784, 1024, %s5, [#allocation4], 512, 512, 32
    $region41: #{feed_forward.1} parent=1 // pred_fallthru
      _
    // Predicated region
    $region42: #{feed_forward.1} parent=1 // pred_check
      _
    $region43: #{feed_forward.1} parent=1 // pred_check_branch
      %7791 = sbr.rel (0) target = $region45
    $region44: #{feed_forward.1} parent=1 // pred_region
      %7792 = dma.done [#allocation4], 1024
    $region45: #{feed_forward.1} parent=1 // pred_fallthru
      _
    %7793 = vsyncpa [#allocation3], 1
    %7794 = vsyncpa [#allocation6], 1
    %7795 = vsyncpa [#allocation9], 1
    %7796 = vsyncpa [#allocation4], 1

</llo_original>
